<compile_context>
chip_gen: v7x
topology: tpu7x:2x2x1
jax: 0.10.0
libtpu: 0.0.40
codegen_flags: <defaults>
</compile_context>

<pallas_src>
import math
from functools import lru_cache

import jax
import jax.numpy as jnp
from jax.experimental import pallas as pl
from jax.experimental.pallas import tpu as pltpu


# ---------------------------------------------------------------------------
# VMEM budgets (generation aware)
# ---------------------------------------------------------------------------

@lru_cache(maxsize=1)
def _vmem_budgets():
    """(tiling_budget, scoped_limit): limit ~= 3/4 of physical VMEM, tiling
    budget leaves ~16 MiB headroom (v7x: 32/48 MiB, v5e/v6e: 80/96 MiB)."""
    try:
        phys = int(pltpu.get_tpu_info().vmem_capacity_bytes)
    except Exception:
        phys = 64 * 1024 * 1024          # conservative (v7x-sized) fallback
    limit = (phys * 3) // 4
    budget = max(limit - 16 * 1024 * 1024, phys // 4)
    return budget, limit


# ---------------------------------------------------------------------------
# Tile picker
# ---------------------------------------------------------------------------

def _pick_tiles(BH, Lq, Lk, Dk, Dv, io_itemsize, mask_itemsize, mask_rows_full,
                has_mask, return_attn, vmem_budget):
    """Pick (bh_tile, lq_tile): largest tiles that fit the budget, preferring
    MXU-friendly query tiles (multiples of 128); re-shrinks lq_t on overflow."""
    lq_cands = []
    for c in (Lq, 1024, 512, 384, 256, 128, 64, 32, 16, 8):
        if 0 < c <= Lq and Lq % c == 0 and c not in lq_cands:
            lq_cands.append(c)
    bh_cands = [c for c in range(min(BH, 16), 0, -1) if BH % c == 0]

    def step_bytes(bh_t, lq_t):
        io = bh_t * (lq_t * Dk + Lk * Dk + Lk * Dv + lq_t * Dv) * io_itemsize
        if return_attn:
            io += bh_t * lq_t * Lk * io_itemsize
        if has_mask:
            rows = lq_t if mask_rows_full else 1
            io += bh_t * rows * Lk * mask_itemsize
        # double-buffered IO + ~3 fp32 (lq_t, Lk) score/prob intermediates
        return 2 * io + 3 * bh_t * lq_t * Lk * 4

    for lq_t in lq_cands:
        for bh_t in bh_cands:
            if step_bytes(bh_t, lq_t) <= vmem_budget:
                return bh_t, lq_t
    return 1, lq_cands[-1]        # best effort (smallest tiles)


# ---------------------------------------------------------------------------
# ScaledDotProductAttention Pallas kernel
# ---------------------------------------------------------------------------

def _sdpa_body(q_ref, k_ref, v_ref, m_ref, ctx_ref, attn_ref, *,
               scale, ctx_transposed):
    # q_ref: (bh_t, lq_t, Dk)  k_ref: (bh_t, Lk, Dk)  v_ref: (bh_t, Lk, Dv)
    # m_ref: (bh_t, 1, Lk) key mask, (bh_t, lq_t, Lk) full mask, or None
    q = q_ref[...]
    if scale != 1.0:
        q = q * jnp.asarray(scale, dtype=q.dtype)
    k = k_ref[...]
    v = v_ref[...]

    # Q.K^T contracted on Dk (no explicit K transpose), f32 accumulation on MXU.
    # TODO(synk): bundle-verify whether exp() is EUP-bound for small Dk; if so,
    # chunk the score matmul + exp over Lk so EUP overlaps the MXU.
    s = jnp.einsum("bqd,bkd->bqk", q, k, preferred_element_type=jnp.float32)
    s = jnp.exp(s)                 # faithful to the torch module: no max-subtraction
    if m_ref is not None:
        s = s * m_ref[...].astype(jnp.float32)   # broadcasts (bh,1,Lk) key masks

    denom = jnp.sum(s, axis=-1, keepdims=True) + 1e-8
    p = s * pl.reciprocal(denom, approx=True)    # EUP approx recip + VPU multiply

    if attn_ref is not None:
        attn_ref[...] = p.astype(attn_ref.dtype)

    if ctx_transposed:
        # Lane-dense ctx: output block is (bh, Dv, lq_t) so the (>=128-wide)
        # query tile sits on the lane axis -> unmasked full-width stores.
        ctx = jnp.einsum("bkd,bqk->bdq", v, p.astype(v.dtype),
                         preferred_element_type=jnp.float32)
    else:
        ctx = jnp.einsum("bqk,bkd->bqd", p.astype(v.dtype), v,
                         preferred_element_type=jnp.float32)
    ctx_ref[...] = ctx.astype(ctx_ref.dtype)


def _make_kernel(*, scale, has_mask, return_attn, ctx_transposed):
    def kernel(*refs):
        q_ref, k_ref, v_ref = refs[0], refs[1], refs[2]
        i = 3
        m_ref = None
        if has_mask:
            m_ref = refs[i]
            i += 1
        ctx_ref = refs[i]
        i += 1
        attn_ref = refs[i] if return_attn else None
        _sdpa_body(q_ref, k_ref, v_ref, m_ref, ctx_ref, attn_ref,
                   scale=scale, ctx_transposed=ctx_transposed)
    return kernel


def scaled_dot_product_attention(Q, K, V, attn_mask=None, *, d_k=None,
                                 scale=None, return_attn=True):
    """Pallas TPU implementation of ScaledDotProductAttention.forward.

    Q: (B, H, Lq, Dk), K: (B, H, Lk, Dk), V: (B, H, Lk, Dv)
    attn_mask: optional multiplicative mask: full (B, H, Lq, Lk) or a key-only
               mask (B, H, 1, Lk) broadcast over queries inside the kernel.
    Returns (context, attn) if return_attn else (context, None).
    """
    B, H, Lq, Dk = Q.shape
    Lk = K.shape[2]
    Dv = V.shape[-1]
    if scale is None:
        scale = 1.0 / math.sqrt(Dk if d_k is None else d_k)

    BH = B * H
    q = Q.reshape(BH, Lq, Dk)            # keep native dtype (bf16 stays bf16)
    k = K.reshape(BH, Lk, Dk)
    v = V.reshape(BH, Lk, Dv)
    out_dtype = Q.dtype

    has_mask = attn_mask is not None
    mask_rows_full = bool(has_mask and attn_mask.shape[2] != 1)

    vmem_budget, vmem_limit = _vmem_budgets()
    bh_t, lq_t = _pick_tiles(
        BH, Lq, Lk, Dk, Dv,
        io_itemsize=q.dtype.itemsize,
        mask_itemsize=(attn_mask.dtype.itemsize if has_mask else 0),
        mask_rows_full=mask_rows_full,
        has_mask=has_mask, return_attn=return_attn, vmem_budget=vmem_budget)
    grid = (BH // bh_t, Lq // lq_t)

    # Lane-dense ctx store when Dv is lane-sparse and the query tile is 128-aligned.
    ctx_transposed = (Dv < 128) and (lq_t >= 128) and (lq_t % 128 == 0)

    in_specs = [
        pl.BlockSpec((bh_t, lq_t, Dk), lambda b, qi: (b, qi, 0)),
        pl.BlockSpec((bh_t, Lk, Dk), lambda b, qi: (b, 0, 0)),
        pl.BlockSpec((bh_t, Lk, Dv), lambda b, qi: (b, 0, 0)),
    ]
    args = [q, k, v]
    if has_mask:
        if mask_rows_full:
            in_specs.append(pl.BlockSpec((bh_t, lq_t, Lk), lambda b, qi: (b, qi, 0)))
            args.append(attn_mask.reshape(BH, Lq, Lk))
        else:
            in_specs.append(pl.BlockSpec((bh_t, 1, Lk), lambda b, qi: (b, 0, 0)))
            args.append(attn_mask.reshape(BH, 1, Lk))

    if ctx_transposed:
        ctx_shape = jax.ShapeDtypeStruct((BH, Dv, Lq), out_dtype)
        ctx_spec = pl.BlockSpec((bh_t, Dv, lq_t), lambda b, qi: (b, 0, qi))
    else:
        ctx_shape = jax.ShapeDtypeStruct((BH, Lq, Dv), out_dtype)
        ctx_spec = pl.BlockSpec((bh_t, lq_t, Dv), lambda b, qi: (b, qi, 0))

    if return_attn:
        out_shape = (ctx_shape, jax.ShapeDtypeStruct((BH, Lq, Lk), out_dtype))
        out_specs = [ctx_spec,
                     pl.BlockSpec((bh_t, lq_t, Lk), lambda b, qi: (b, qi, 0))]
    else:
        out_shape = ctx_shape
        out_specs = ctx_spec

    kernel = _make_kernel(scale=float(scale), has_mask=has_mask,
                          return_attn=return_attn, ctx_transposed=ctx_transposed)

    grid_spec = pltpu.PrefetchScalarGridSpec(
        num_scalar_prefetch=0, grid=grid, in_specs=in_specs, out_specs=out_specs)

    result = pl.pallas_call(
        kernel,
        out_shape=out_shape,
        grid_spec=grid_spec,
        compiler_params=pltpu.CompilerParams(
            # K/V blocks are constant along qi -> keep qi "arbitrary" (innermost,
            # K/V stay resident); split independent BH work across TensorCores.
            dimension_semantics=("parallel", "arbitrary"),
            vmem_limit_bytes=vmem_limit),
    )(*args)

    if return_attn:
        context, attn = result
        attn = attn.reshape(B, H, Lq, Lk)
    else:
        context, attn = result, None

    if ctx_transposed:
        context = jnp.swapaxes(context, 1, 2)      # (BH, Dv, Lq) -> (BH, Lq, Dv)
    context = context.reshape(B, H, Lq, Dv)
    return context, attn


# ---------------------------------------------------------------------------
# MultiHeadAttention forward (projections as plain XLA GEMMs, Pallas SDPA core)
# ---------------------------------------------------------------------------

def multi_head_attention(Q, K, V, W_q, b_q, W_k, b_k, W_v, b_v, *,
                         n_heads, d_k, d_v, mask=None):
    """Mirrors MultiHeadAttention.forward. Q/K/V: (B, S, d_model); mask: (B, S) or None."""
    B, S, _ = Q.shape
    scale = 1.0 / math.sqrt(d_k)
    # Fold 1/sqrt(d_k) into the Q projection (no per-tile scale inside the kernel).
    q_s = (Q @ (W_q * scale).T + b_q * scale).reshape(B, S, n_heads, d_k).transpose(0, 2, 1, 3)
    k_s = (K @ W_k.T + b_k).reshape(B, S, n_heads, d_k).transpose(0, 2, 1, 3)
    v_s = (V @ W_v.T + b_v).reshape(B, S, n_heads, d_v).transpose(0, 2, 1, 3)

    attn_mask = None
    if mask is not None:
        # torch expands the (B, S) key mask over queries and heads; pass only a
        # (B, H, 1, S) key mask and broadcast inside the kernel (no (B, H, S, S)
        # materialization / per-tile mask DMA the size of the score matrix).
        attn_mask = jnp.broadcast_to(mask[:, None, None, :].astype(q_s.dtype),
                                     (B, n_heads, 1, S))

    # attn matrix is discarded by this module -> don't compute/write it back.
    context, _ = scaled_dot_product_attention(
        q_s, k_s, v_s, attn_mask, d_k=d_k, scale=1.0, return_attn=False)
    return context.transpose(0, 2, 1, 3).reshape(B, S, n_heads * d_v)


# ---------------------------------------------------------------------------
# Pure-JAX references (faithful to the torch formulation)
# ---------------------------------------------------------------------------

def _sdpa_reference(Q, K, V, attn_mask, d_k):
    Qf, Kf, Vf = (x.astype(jnp.float32) for x in (Q, K, V))
    scores = jnp.einsum("bhqd,bhkd->bhqk", Qf, Kf) / math.sqrt(d_k)
    scores = jnp.exp(scores)
    if attn_mask is not None:
        scores = scores * attn_mask.astype(jnp.float32)
    attn = scores / (jnp.sum(scores, axis=-1, keepdims=True) + 1e-8)
    context = jnp.einsum("bhqk,bhkd->bhqd", attn, Vf)
    return context, attn


def _mha_reference(Q, K, V, W_q, b_q, W_k, b_k, W_v, b_v, *,
                   n_heads, d_k, d_v, mask=None):
    B, S, _ = Q.shape
    q_s = (Q @ W_q.T + b_q).reshape(B, S, n_heads, d_k).transpose(0, 2, 1, 3)
    k_s = (K @ W_k.T + b_k).reshape(B, S, n_heads, d_k).transpose(0, 2, 1, 3)
    v_s = (V @ W_v.T + b_v).reshape(B, S, n_heads, d_v).transpose(0, 2, 1, 3)
    attn_mask = None
    if mask is not None:
        attn_mask = jnp.broadcast_to(mask[:, None, None, :], (B, n_heads, S, S))
    ctx, _ = _sdpa_reference(q_s, k_s, v_s, attn_mask, d_k)
    return ctx.transpose(0, 2, 1, 3).reshape(B, S, n_heads * d_v)


if __name__ == "__main__":
    # Make the XLA reference matmuls f32-accurate so comparisons reflect the
    # kernel, not the reference's default bf16-pass matmul precision.
    jax.config.update("jax_default_matmul_precision", "highest")

    key = jax.random.PRNGKey(0)
    ks = jax.random.split(key, 12)

    d_model, n_heads, d_k, d_v = 32, 2, 16, 16
    B, S = 2, 8

    Q = jax.random.normal(ks[0], (B, S, d_model), dtype=jnp.float32)
    K = jax.random.normal(ks[1], (B, S, d_model), dtype=jnp.float32)
    V = jax.random.normal(ks[2], (B, S, d_model), dtype=jnp.float32)
    W_q = jax.random.normal(ks[3], (n_heads * d_k, d_model), jnp.float32) / math.sqrt(d_model)
    W_k = jax.random.normal(ks[4], (n_heads * d_k, d_model), jnp.float32) / math.sqrt(d_model)
    W_v = jax.random.normal(ks[5], (n_heads * d_v, d_model), jnp.float32) / math.sqrt(d_model)
    b_q = jnp.zeros((n_heads * d_k,), jnp.float32)
    b_k = jnp.zeros((n_heads * d_k,), jnp.float32)
    b_v = jnp.zeros((n_heads * d_v,), jnp.float32)
    mask = (jax.random.uniform(ks[6], (B, S)) > 0.2).astype(jnp.float32)

    TOL = dict(atol=5e-3, rtol=5e-3)   # approx reciprocal introduces ~1e-4 rel err

    # 1) Full MultiHeadAttention forward, masked path (fp32, key-mask + no attn out).
    ctx = multi_head_attention(Q, K, V, W_q, b_q, W_k, b_k, W_v, b_v,
                               n_heads=n_heads, d_k=d_k, d_v=d_v, mask=mask)
    jax.block_until_ready(ctx)
    ref_ctx = _mha_reference(Q, K, V, W_q, b_q, W_k, b_k, W_v, b_v,
                             n_heads=n_heads, d_k=d_k, d_v=d_v, mask=mask)
    assert ctx.shape == (B, S, n_heads * d_v)
    assert jnp.allclose(ctx, ref_ctx, **TOL), "masked MHA mismatch"

    # 2) Unmasked path (no mask DMA at all).
    ctx2 = multi_head_attention(Q, K, V, W_q, b_q, W_k, b_k, W_v, b_v,
                                n_heads=n_heads, d_k=d_k, d_v=d_v, mask=None)
    jax.block_until_ready(ctx2)
    ref_ctx2 = _mha_reference(Q, K, V, W_q, b_q, W_k, b_k, W_v, b_v,
                              n_heads=n_heads, d_k=d_k, d_v=d_v, mask=None)
    assert jnp.allclose(ctx2, ref_ctx2, **TOL), "unmasked MHA mismatch"

    # 3) Generic SDPA with a full (B,H,Lq,Lk) mask and attn returned (torch API parity).
    q4 = jax.random.normal(ks[7], (B, n_heads, S, d_k), dtype=jnp.float32)
    k4 = jax.random.normal(ks[8], (B, n_heads, S, d_k), dtype=jnp.float32)
    v4 = jax.random.normal(ks[9], (B, n_heads, S, d_v), dtype=jnp.float32)
    m4 = jnp.broadcast_to(mask[:, None, None, :], (B, n_heads, S, S)).astype(jnp.float32)
    ctx3, attn3 = scaled_dot_product_attention(q4, k4, v4, m4, d_k=d_k, return_attn=True)
    jax.block_until_ready((ctx3, attn3))
    ref_ctx3, ref_attn3 = _sdpa_reference(q4, k4, v4, m4, d_k)
    assert jnp.allclose(ctx3, ref_ctx3, **TOL), "SDPA ctx mismatch"
    assert jnp.allclose(attn3, ref_attn3, **TOL), "SDPA attn mismatch"

    # 4) Larger heads/sequence: exercises the lane-dense (transposed) ctx store,
    #    key-mask broadcast and the no-attn-output path; f32 and bf16.
    B2, H2, S2, D2 = 1, 4, 256, 64
    q5 = jax.random.normal(ks[10], (B2, H2, S2, D2), dtype=jnp.float32)
    k5 = jax.random.normal(ks[11], (B2, H2, S2, D2), dtype=jnp.float32)
    v5 = jax.random.normal(ks[0], (B2, H2, S2, D2), dtype=jnp.float32)
    km5 = (jax.random.uniform(ks[1], (B2, S2)) > 0.3).astype(jnp.float32)
    keymask5 = jnp.broadcast_to(km5[:, None, None, :], (B2, H2, 1, S2))
    fullmask5 = jnp.broadcast_to(km5[:, None, None, :], (B2, H2, S2, S2))

    ctx5, _ = scaled_dot_product_attention(q5, k5, v5, keymask5, d_k=D2,
                                           return_attn=False)
    jax.block_until_ready(ctx5)
    ref_ctx5, _ = _sdpa_reference(q5, k5, v5, fullmask5, D2)
    assert jnp.allclose(ctx5, ref_ctx5, **TOL), "lane-dense f32 SDPA mismatch"

    ctx6, _ = scaled_dot_product_attention(
        q5.astype(jnp.bfloat16), k5.astype(jnp.bfloat16), v5.astype(jnp.bfloat16),
        keymask5.astype(jnp.bfloat16), d_k=D2, return_attn=False)
    jax.block_until_ready(ctx6)
    ref_ctx6, _ = _sdpa_reference(q5.astype(jnp.bfloat16), k5.astype(jnp.bfloat16),
                                  v5.astype(jnp.bfloat16), fullmask5, D2)
    assert jnp.allclose(ctx6.astype(jnp.float32), ref_ctx6, atol=0.05, rtol=0.05), \
        "lane-dense bf16 SDPA mismatch"

    print("KERNEL_OK")
</pallas_src>

<mosaic_0001>
module attributes {stable_mosaic.version = 11 : i64} {
  func.func @kernel(%arg0: i32, %arg1: i32, %arg2: memref<4x8x16xf32, #tpu.memory_space<vmem>>, %arg3: memref<4x8x16xf32, #tpu.memory_space<vmem>>, %arg4: memref<4x8x16xf32, #tpu.memory_space<vmem>>, %arg5: memref<4x1x8xf32, #tpu.memory_space<vmem>>, %arg6: memref<4x8x16xf32, #tpu.memory_space<vmem>>) attributes {dimension_semantics = [#tpu.dimension_semantics<parallel>, #tpu.dimension_semantics<arbitrary>], iteration_bounds = array<i64: 1, 1>, scalar_prefetch = 0 : i64, scratch_operands = 0 : i64, tpu.core_type = #tpu.core_type<tc>, window_params = [{transform_indices = @transform_0, window_bounds = array<i64: 4, 8, 16>}, {transform_indices = @transform_1, window_bounds = array<i64: 4, 8, 16>}, {transform_indices = @transform_2, window_bounds = array<i64: 4, 8, 16>}, {transform_indices = @transform_3, window_bounds = array<i64: 4, 1, 8>}, {transform_indices = @transform_4, window_bounds = array<i64: 4, 8, 16>}]} {
    %c0 = arith.constant 0 : index
    %c0_0 = arith.constant 0 : index
    %c0_1 = arith.constant 0 : index
    %0 = vector.load %arg2[%c0, %c0_0, %c0_1] : memref<4x8x16xf32, #tpu.memory_space<vmem>>, vector<4x8x16xf32>
    %c0_2 = arith.constant 0 : index
    %c0_3 = arith.constant 0 : index
    %c0_4 = arith.constant 0 : index
    %1 = vector.load %arg3[%c0_2, %c0_3, %c0_4] : memref<4x8x16xf32, #tpu.memory_space<vmem>>, vector<4x8x16xf32>
    %c0_5 = arith.constant 0 : index
    %c0_6 = arith.constant 0 : index
    %c0_7 = arith.constant 0 : index
    %2 = vector.load %arg4[%c0_5, %c0_6, %c0_7] : memref<4x8x16xf32, #tpu.memory_space<vmem>>, vector<4x8x16xf32>
    "tpu.trace_start"() <{level = 10 : i32, message = "bqd,bkd->bqk"}> : () -> ()
    %cst = arith.constant dense<0.000000e+00> : vector<4x8x8xf32>
    %3 = tpu.matmul %0, %1, %cst {dimension_numbers = #tpu.dot_dimension_numbers<[2], [2], [1], [1], [0, 0, 0, 1, 1, 1], [0], [0]>, precision = #tpu.contract_precision<fp32>} : vector<4x8x16xf32>, vector<4x8x16xf32>, vector<4x8x8xf32> -> vector<4x8x8xf32>
    "tpu.trace_stop"() : () -> ()
    %4 = math.exp %3 : vector<4x8x8xf32>
    %c0_8 = arith.constant 0 : index
    %c0_9 = arith.constant 0 : index
    %c0_10 = arith.constant 0 : index
    %5 = vector.load %arg5[%c0_8, %c0_9, %c0_10] : memref<4x1x8xf32, #tpu.memory_space<vmem>>, vector<4x1x8xf32>
    %6 = vector.broadcast %5 : vector<4x1x8xf32> to vector<4x8x8xf32>
    %7 = arith.mulf %4, %6 : vector<4x8x8xf32>
    %cst_11 = arith.constant dense<0.000000e+00> : vector<4x8xf32>
    %8 = vector.multi_reduction <add>, %7, %cst_11 [2] : vector<4x8x8xf32> to vector<4x8xf32>
    %9 = vector.shape_cast %8 : vector<4x8xf32> to vector<4x8x1xf32>
    %cst_12 = arith.constant 9.99999993E-9 : f32
    %10 = vector.broadcast %cst_12 : f32 to vector<4x8x1xf32>
    %11 = arith.addf %9, %10 : vector<4x8x1xf32>
    %12 = tpu.reciprocal %11 {approx = true} : vector<4x8x1xf32> -> vector<4x8x1xf32>
    %13 = vector.broadcast %12 : vector<4x8x1xf32> to vector<4x8x8xf32>
    %14 = arith.mulf %7, %13 : vector<4x8x8xf32>
    "tpu.trace_start"() <{level = 10 : i32, message = "bqk,bkd->bqd"}> : () -> ()
    %cst_13 = arith.constant dense<0.000000e+00> : vector<4x8x16xf32>
    %15 = tpu.matmul %14, %2, %cst_13 {dimension_numbers = #tpu.dot_dimension_numbers<[2], [1], [1], [2], [0, 0, 0, 1, 1, 2], [0], [0]>, precision = #tpu.contract_precision<fp32>} : vector<4x8x8xf32>, vector<4x8x16xf32>, vector<4x8x16xf32> -> vector<4x8x16xf32>
    "tpu.trace_stop"() : () -> ()
    %c0_14 = arith.constant 0 : index
    %c0_15 = arith.constant 0 : index
    %c0_16 = arith.constant 0 : index
    %16 = vector.load %arg6[%c0_14, %c0_15, %c0_16] : memref<4x8x16xf32, #tpu.memory_space<vmem>>, vector<4x8x16xf32>
    tpu.vector_store %arg6[%c0_14, %c0_15, %c0_16], %15 {strides = array<i32>} : memref<4x8x16xf32, #tpu.memory_space<vmem>>, vector<4x8x16xf32>,
    return
  }
  func.func @transform_0(%arg0: i32, %arg1: i32) -> (i32, i32, i32) {
    %c0_i32 = arith.constant 0 : i32
    %c0_i32_0 = arith.constant 0 : i32
    return %arg0, %arg1, %c0_i32 : i32, i32, i32
  }
  func.func @transform_1(%arg0: i32, %arg1: i32) -> (i32, i32, i32) {
    %c0_i32 = arith.constant 0 : i32
    %c0_i32_0 = arith.constant 0 : i32
    %c0_i32_1 = arith.constant 0 : i32
    return %arg0, %c0_i32, %c0_i32_0 : i32, i32, i32
  }
  func.func @transform_2(%arg0: i32, %arg1: i32) -> (i32, i32, i32) {
    %c0_i32 = arith.constant 0 : i32
    %c0_i32_0 = arith.constant 0 : i32
    %c0_i32_1 = arith.constant 0 : i32
    return %arg0, %c0_i32, %c0_i32_0 : i32, i32, i32
  }
  func.func @transform_3(%arg0: i32, %arg1: i32) -> (i32, i32, i32) {
    %c0_i32 = arith.constant 0 : i32
    %c0_i32_0 = arith.constant 0 : i32
    %c0_i32_1 = arith.constant 0 : i32
    return %arg0, %c0_i32, %c0_i32_0 : i32, i32, i32
  }
  func.func @transform_4(%arg0: i32, %arg1: i32) -> (i32, i32, i32) {
    %c0_i32 = arith.constant 0 : i32
    %c0_i32_0 = arith.constant 0 : i32
    return %arg0, %arg1, %c0_i32 : i32, i32, i32
  }
}

</mosaic_0001>

<llo_original>
// kernel: tpu_custom_call.1
$region0: #{tpu_custom_call.1}
  #allocation0 [shape = 'u32[]', space=smem, size = 0x4, offset = 0x4, fixed_abs, tag = 'smem constant byte address 0x4 - core index']
  #allocation1 [shape = 'u32[144,128]{1,0:T(1,128)}', space=vmem, size = 0x12000, scoped, tag = 'internal scratch']
  %s0 = inlined_call_operand.hbm [shape: f32[4,8,16], index: 0, kind: input, shape index: {}]
  %s1 = inlined_call_operand.hbm [shape: f32[4,8,16], index: 1, kind: input, shape index: {}]
  %s2 = inlined_call_operand.hbm [shape: f32[4,8,16], index: 2, kind: input, shape index: {}]
  %s3 = inlined_call_operand.vmem [shape: f32[4,1,8], index: 3, kind: input, shape index: {}]
  %s4 = inlined_call_operand.hbm [shape: f32[4,8,16], index: 4, kind: output, shape index: {}]
  %s5 = sld [smem:[#allocation0]]
  $region38: #{tpu_custom_call.1} parent=0
    _
  %s7 = ssub.s32 1, %s5
  %s8 = scalar_select 0, %s7, %s5
  $region1: #{tpu_custom_call.1} parent=0
    #allocation2 [shape = 'u8[16384]{0}', space=vmem, size = 0x4000, scoped, tag = 'input window, operand 0, single buffered']
    #allocation3 [shape = 's32[1]{0}', space=sflag, size = 0x4, scoped, tag = 'scoped memory for tpu_custom_call.1']
    #allocation4 [shape = 's32[1]{0}', space=sflag, size = 0x4, scoped, tag = 'scoped memory for tpu_custom_call.1']
    #allocation5 [shape = 'u8[16384]{0}', space=vmem, size = 0x4000, scoped, tag = 'input window, operand 1, single buffered']
    #allocation6 [shape = 's32[1]{0}', space=sflag, size = 0x4, scoped, tag = 'scoped memory for tpu_custom_call.1']
    #allocation7 [shape = 'u8[16384]{0}', space=vmem, size = 0x4000, scoped, tag = 'input window, operand 2, single buffered']
    #allocation8 [shape = 'u8[16384]{0}', space=vmem, size = 0x4000, scoped, tag = 'output window, operand 0, single buffered']
    %9 = vsyncpa [#allocation3], 0
    %10 = vsyncpa [#allocation6], 0
    %11 = vsyncpa [#allocation4], 0
    // Predicated region
    $region2: #{tpu_custom_call.1} parent=1 // pred_check
      _
    $region3: #{tpu_custom_call.1} parent=1 // pred_check_branch
      %13 = sbr.rel (0) target = $region5
    $region4: #{tpu_custom_call.1} parent=1 // pred_region
      %s15 = ssub.s32 512, 512
      %16 = vsyncadd [#allocation3], %s15
      %s17 = sshll.u32 [#allocation2], 4
      %s18 = int_to_ptr.vmem [resolvable:$true] %s17
      %23 = dma.hbm_to_vmem [thread:$0]  %s0, 512, %s18, [#allocation3], 128, 128, 8
    $region5: #{tpu_custom_call.1} parent=1 // pred_fallthru
      _
    // Predicated region
    $region6: #{tpu_custom_call.1} parent=1 // pred_check
      _
    $region7: #{tpu_custom_call.1} parent=1 // pred_check_branch
      %25 = sbr.rel (0) target = $region9
    $region8: #{tpu_custom_call.1} parent=1 // pred_region
      %s27 = ssub.s32 512, 512
      %28 = vsyncadd [#allocation6], %s27
      %s29 = sshll.u32 [#allocation5], 4
      %s30 = int_to_ptr.vmem [resolvable:$true] %s29
      %35 = dma.hbm_to_vmem [thread:$0]  %s1, 512, %s30, [#allocation6], 128, 128, 8
    $region9: #{tpu_custom_call.1} parent=1 // pred_fallthru
      _
    // Predicated region
    $region10: #{tpu_custom_call.1} parent=1 // pred_check
      _
    $region11: #{tpu_custom_call.1} parent=1 // pred_check_branch
      %37 = sbr.rel (0) target = $region13
    $region12: #{tpu_custom_call.1} parent=1 // pred_region
      %s39 = ssub.s32 512, 512
      %40 = vsyncadd [#allocation6], %s39
      %s41 = sshll.u32 [#allocation7], 4
      %s42 = int_to_ptr.vmem [resolvable:$true] %s41
      %47 = dma.hbm_to_vmem [thread:$0]  %s2, 512, %s42, [#allocation6], 128, 128, 8
    $region13: #{tpu_custom_call.1} parent=1 // pred_fallthru
      _
    // Predicated region
    $region14: #{tpu_custom_call.1} parent=1 // pred_check
      _
    $region15: #{tpu_custom_call.1} parent=1 // pred_check_branch
      %49 = sbr.rel (0) target = $region17
    $region16: #{tpu_custom_call.1} parent=1 // pred_region
      _
    $region17: #{tpu_custom_call.1} parent=1 // pred_fallthru
      _
    // Predicated region
    $region18: #{tpu_custom_call.1} parent=1 // pred_check
      _
    $region19: #{tpu_custom_call.1} parent=1 // pred_check_branch
      %51 = sbr.rel (0) target = $region21
    $region20: #{tpu_custom_call.1} parent=1 // pred_region
      %52 = dma.done [#allocation3], 512
    $region21: #{tpu_custom_call.1} parent=1 // pred_fallthru
      _
    // Predicated region
    $region22: #{tpu_custom_call.1} parent=1 // pred_check
      _
    $region23: #{tpu_custom_call.1} parent=1 // pred_check_branch
      %54 = sbr.rel (0) target = $region25
    $region24: #{tpu_custom_call.1} parent=1 // pred_region
      %55 = dma.done [#allocation6], 512
    $region25: #{tpu_custom_call.1} parent=1 // pred_fallthru
      _
    // Predicated region
    $region26: #{tpu_custom_call.1} parent=1 // pred_check
      _
    $region27: #{tpu_custom_call.1} parent=1 // pred_check_branch
      %57 = sbr.rel (0) target = $region29
    $region28: #{tpu_custom_call.1} parent=1 // pred_region
      %58 = dma.done [#allocation6], 512
    $region29: #{tpu_custom_call.1} parent=1 // pred_fallthru
      _
    %v59 = vld [vmem:[#allocation2] sm:$0xff]
    %v60 = vld [vmem:[#allocation2 + $0x8] sm:$0xff]
    %v61 = vld [vmem:[#allocation2 + $0x10] sm:$0xff]
    %v62 = vld [vmem:[#allocation2 + $0x18] sm:$0xff]
    %v63 = vld [vmem:[#allocation5] sm:$0xff]
    %v64 = vld [vmem:[#allocation5 + $0x8] sm:$0xff]
    %v65 = vld [vmem:[#allocation5 + $0x10] sm:$0xff]
    %v66 = vld [vmem:[#allocation5 + $0x18] sm:$0xff]
    %v67 = vld [vmem:[#allocation7] sm:$0xff]
    %v68 = vld [vmem:[#allocation7 + $0x8] sm:$0xff]
    %v69 = vld [vmem:[#allocation7 + $0x10] sm:$0xff]
    %v70 = vld [vmem:[#allocation7 + $0x18] sm:$0xff]
    %vm71 = vcmask 130048
    %v73 = vsel %vm71, %v59, 0
    %v76 = vsel %vm71, %v63, 0
    %78 = vmatprep.subr.mxu0 0.0
    %v79 = vand.u32 %v76, 4294901760
    %80 = vmatpush1.xpose.msra.mxu0 %v79
    %81 = vmatprep.subr.mxu0 0.0
    %82 = vmatpush1.xpose.msra.mxu0 0.0
    %83 = vmatprep.subr.mxu0 0.0
    %84 = vmatpush1.xpose.msra.mxu0 0.0
    %85 = vmatprep.subr.mxu0 0.0
    %86 = vmatpush1.xpose.msra.mxu0 0.0
    %87 = vmatprep.subr.mxu0 0.0
    %88 = vmatpush1.xpose.msra.mxu0 0.0
    %89 = vmatprep.subr.mxu0 0.0
    %90 = vmatpush1.xpose.msra.mxu0 0.0
    %91 = vmatprep.subr.mxu0 0.0
    %92 = vmatpush1.xpose.msra.mxu0 0.0
    %93 = vmatprep.subr.mxu0 0.0
    %94 = vmatpush1.xpose.msra.mxu0 0.0
    %95 = vmatprep.subr.mxu0 0.0
    %96 = vmatpush1.xpose.msra.mxu0 0.0
    %97 = vmatprep.subr.mxu0 0.0
    %98 = vmatpush1.xpose.msra.mxu0 0.0
    %99 = vmatprep.subr.mxu0 0.0
    %100 = vmatpush1.xpose.msra.mxu0 0.0
    %101 = vmatprep.subr.mxu0 0.0
    %102 = vmatpush1.xpose.msra.mxu0 0.0
    %103 = vmatprep.subr.mxu0 0.0
    %104 = vmatpush1.xpose.msra.mxu0 0.0
    %105 = vmatprep.subr.mxu0 0.0
    %106 = vmatpush1.xpose.msra.mxu0 0.0
    %107 = vmatprep.subr.mxu0 0.0
    %108 = vmatpush1.xpose.msra.mxu0 0.0
    %109 = vmatprep.subr.mxu0 0.0
    %110 = vmatpush1.xpose.msra.mxu0 0.0
    %111 = vmatprep.subr.mxu0 0.0
    %112 = vmatpush1.xpose.msra.mxu0 0.0
    %113 = vmatprep.subr.mxu0 0.0
    %114 = vmatpush1.xpose.msra.mxu0 0.0
    %115 = vmatprep.subr.mxu0 0.0
    %116 = vmatpush1.xpose.msra.mxu0 0.0
    %117 = vmatprep.subr.mxu0 0.0
    %118 = vmatpush1.xpose.msra.mxu0 0.0
    %119 = vmatprep.subr.mxu0 0.0
    %120 = vmatpush1.xpose.msra.mxu0 0.0
    %121 = vmatprep.subr.mxu0 0.0
    %122 = vmatpush1.xpose.msra.mxu0 0.0
    %123 = vmatprep.subr.mxu0 0.0
    %124 = vmatpush1.xpose.msra.mxu0 0.0
    %125 = vmatprep.subr.mxu0 0.0
    %126 = vmatpush1.xpose.msra.mxu0 0.0
    %127 = vmatprep.subr.mxu0 0.0
    %128 = vmatpush1.xpose.msra.mxu0 0.0
    %129 = vmatprep.subr.mxu0 0.0
    %130 = vmatpush1.xpose.msra.mxu0 0.0
    %131 = vmatprep.subr.mxu0 0.0
    %132 = vmatpush1.xpose.msra.mxu0 0.0
    %133 = vmatprep.subr.mxu0 0.0
    %134 = vmatpush1.xpose.msra.mxu0 0.0
    %135 = vmatprep.subr.mxu0 0.0
    %136 = vmatpush1.xpose.msra.mxu0 0.0
    %137 = vmatprep.subr.mxu0 0.0
    %138 = vmatpush1.xpose.msra.mxu0 0.0
    %139 = vmatprep.subr.mxu0 0.0
    %140 = vmatpush1.xpose.msra.mxu0 0.0
    %141 = vmatprep.subr.mxu0 0.0
    %142 = vmatpush1.xpose.msra.mxu0 0.0
    %143 = vmatprep.mubr.f32.mxu0 0.0
    %v144 = vand.u32 %v73, 4294901760
    %v145 = vsub.f32 %v73, %v144
    %v146 = vand.u32 %v145, 4294901760
    %v147 = vsub.f32 %v145, %v146
    %v148 = vand.u32 %v147, 4294901760
    %149 = vmatmul.mubr.f32.gmra.mrb[0].mxu0 %v148
    %v150 = vpop.f32.mrb[0].mxu0
    %v151 = vadd.f32 0.0, %v150
    %v152 = vpop.f32.mrb[0].mxu0
    %153 = vdwg.mxu0
    %154 = vmatprep.subr.mxu0 0.0
    %v155 = vand.u32 %v76, 4294901760
    %v156 = vsub.f32 %v76, %v155
    %v157 = vand.u32 %v156, 4294901760
    %v158 = vsub.f32 %v156, %v157
    %v159 = vand.u32 %v158, 4294901760
    %160 = vmatpush1.xpose.msra.mxu0 %v159
    %161 = vmatprep.subr.mxu0 0.0
    %162 = vmatpush1.xpose.msra.mxu0 0.0
    %163 = vmatprep.subr.mxu0 0.0
    %164 = vmatpush1.xpose.msra.mxu0 0.0
    %165 = vmatprep.subr.mxu0 0.0
    %166 = vmatpush1.xpose.msra.mxu0 0.0
    %167 = vmatprep.subr.mxu0 0.0
    %168 = vmatpush1.xpose.msra.mxu0 0.0
    %169 = vmatprep.subr.mxu0 0.0
    %170 = vmatpush1.xpose.msra.mxu0 0.0
    %171 = vmatprep.subr.mxu0 0.0
    %172 = vmatpush1.xpose.msra.mxu0 0.0
    %173 = vmatprep.subr.mxu0 0.0
    %174 = vmatpush1.xpose.msra.mxu0 0.0
    %175 = vmatprep.subr.mxu0 0.0
    %176 = vmatpush1.xpose.msra.mxu0 0.0
    %177 = vmatprep.subr.mxu0 0.0
    %178 = vmatpush1.xpose.msra.mxu0 0.0
    %179 = vmatprep.subr.mxu0 0.0
    %180 = vmatpush1.xpose.msra.mxu0 0.0
    %181 = vmatprep.subr.mxu0 0.0
    %182 = vmatpush1.xpose.msra.mxu0 0.0
    %183 = vmatprep.subr.mxu0 0.0
    %184 = vmatpush1.xpose.msra.mxu0 0.0
    %185 = vmatprep.subr.mxu0 0.0
    %186 = vmatpush1.xpose.msra.mxu0 0.0
    %187 = vmatprep.subr.mxu0 0.0
    %188 = vmatpush1.xpose.msra.mxu0 0.0
    %189 = vmatprep.subr.mxu0 0.0
    %190 = vmatpush1.xpose.msra.mxu0 0.0
    %191 = vmatprep.subr.mxu0 0.0
    %192 = vmatpush1.xpose.msra.mxu0 0.0
    %193 = vmatprep.subr.mxu0 0.0
    %194 = vmatpush1.xpose.msra.mxu0 0.0
    %195 = vmatprep.subr.mxu0 0.0
    %196 = vmatpush1.xpose.msra.mxu0 0.0
    %197 = vmatprep.subr.mxu0 0.0
    %198 = vmatpush1.xpose.msra.mxu0 0.0
    %199 = vmatprep.subr.mxu0 0.0
    %200 = vmatpush1.xpose.msra.mxu0 0.0
    %201 = vmatprep.subr.mxu0 0.0
    %202 = vmatpush1.xpose.msra.mxu0 0.0
    %203 = vmatprep.subr.mxu0 0.0
    %204 = vmatpush1.xpose.msra.mxu0 0.0
    %205 = vmatprep.subr.mxu0 0.0
    %206 = vmatpush1.xpose.msra.mxu0 0.0
    %207 = vmatprep.subr.mxu0 0.0
    %208 = vmatpush1.xpose.msra.mxu0 0.0
    %209 = vmatprep.subr.mxu0 0.0
    %210 = vmatpush1.xpose.msra.mxu0 0.0
    %211 = vmatprep.subr.mxu0 0.0
    %212 = vmatpush1.xpose.msra.mxu0 0.0
    %213 = vmatprep.subr.mxu0 0.0
    %214 = vmatpush1.xpose.msra.mxu0 0.0
    %215 = vmatprep.subr.mxu0 0.0
    %216 = vmatpush1.xpose.msra.mxu0 0.0
    %217 = vmatprep.subr.mxu0 0.0
    %218 = vmatpush1.xpose.msra.mxu0 0.0
    %219 = vmatprep.subr.mxu0 0.0
    %220 = vmatpush1.xpose.msra.mxu0 0.0
    %221 = vmatprep.subr.mxu0 0.0
    %222 = vmatpush1.xpose.msra.mxu0 0.0
    %223 = vmatprep.mubr.f32.mxu0 0.0
    %v224 = vand.u32 %v73, 4294901760
    %225 = vmatmul.mubr.f32.gmra.mrb[0].mxu0 %v224
    %v226 = vpop.f32.mrb[0].mxu0
    %v227 = vadd.f32 %v151, %v226
    %v228 = vpop.f32.mrb[0].mxu0
    %229 = vdwg.mxu0
    %230 = vmatprep.subr.mxu0 0.0
    %v231 = vand.u32 %v76, 4294901760
    %v232 = vsub.f32 %v76, %v231
    %233 = vmatpush1.xpose.msra.mxu0 %v232
    %234 = vmatprep.subr.mxu0 0.0
    %235 = vmatpush1.xpose.msra.mxu0 0.0
    %236 = vmatprep.subr.mxu0 0.0
    %237 = vmatpush1.xpose.msra.mxu0 0.0
    %238 = vmatprep.subr.mxu0 0.0
    %239 = vmatpush1.xpose.msra.mxu0 0.0
    %240 = vmatprep.subr.mxu0 0.0
    %241 = vmatpush1.xpose.msra.mxu0 0.0
    %242 = vmatprep.subr.mxu0 0.0
    %243 = vmatpush1.xpose.msra.mxu0 0.0
    %244 = vmatprep.subr.mxu0 0.0
    %245 = vmatpush1.xpose.msra.mxu0 0.0
    %246 = vmatprep.subr.mxu0 0.0
    %247 = vmatpush1.xpose.msra.mxu0 0.0
    %248 = vmatprep.subr.mxu0 0.0
    %249 = vmatpush1.xpose.msra.mxu0 0.0
    %250 = vmatprep.subr.mxu0 0.0
    %251 = vmatpush1.xpose.msra.mxu0 0.0
    %252 = vmatprep.subr.mxu0 0.0
    %253 = vmatpush1.xpose.msra.mxu0 0.0
    %254 = vmatprep.subr.mxu0 0.0
    %255 = vmatpush1.xpose.msra.mxu0 0.0
    %256 = vmatprep.subr.mxu0 0.0
    %257 = vmatpush1.xpose.msra.mxu0 0.0
    %258 = vmatprep.subr.mxu0 0.0
    %259 = vmatpush1.xpose.msra.mxu0 0.0
    %260 = vmatprep.subr.mxu0 0.0
    %261 = vmatpush1.xpose.msra.mxu0 0.0
    %262 = vmatprep.subr.mxu0 0.0
    %263 = vmatpush1.xpose.msra.mxu0 0.0
    %264 = vmatprep.subr.mxu0 0.0
    %265 = vmatpush1.xpose.msra.mxu0 0.0
    %266 = vmatprep.subr.mxu0 0.0
    %267 = vmatpush1.xpose.msra.mxu0 0.0
    %268 = vmatprep.subr.mxu0 0.0
    %269 = vmatpush1.xpose.msra.mxu0 0.0
    %270 = vmatprep.subr.mxu0 0.0
    %271 = vmatpush1.xpose.msra.mxu0 0.0
    %272 = vmatprep.subr.mxu0 0.0
    %273 = vmatpush1.xpose.msra.mxu0 0.0
    %274 = vmatprep.subr.mxu0 0.0
    %275 = vmatpush1.xpose.msra.mxu0 0.0
    %276 = vmatprep.subr.mxu0 0.0
    %277 = vmatpush1.xpose.msra.mxu0 0.0
    %278 = vmatprep.subr.mxu0 0.0
    %279 = vmatpush1.xpose.msra.mxu0 0.0
    %280 = vmatprep.subr.mxu0 0.0
    %281 = vmatpush1.xpose.msra.mxu0 0.0
    %282 = vmatprep.subr.mxu0 0.0
    %283 = vmatpush1.xpose.msra.mxu0 0.0
    %284 = vmatprep.subr.mxu0 0.0
    %285 = vmatpush1.xpose.msra.mxu0 0.0
    %286 = vmatprep.subr.mxu0 0.0
    %287 = vmatpush1.xpose.msra.mxu0 0.0
    %288 = vmatprep.subr.mxu0 0.0
    %289 = vmatpush1.xpose.msra.mxu0 0.0
    %290 = vmatprep.subr.mxu0 0.0
    %291 = vmatpush1.xpose.msra.mxu0 0.0
    %292 = vmatprep.subr.mxu0 0.0
    %293 = vmatpush1.xpose.msra.mxu0 0.0
    %294 = vmatprep.subr.mxu0 0.0
    %295 = vmatpush1.xpose.msra.mxu0 0.0
    %296 = vmatprep.mubr.f32.mxu0 0.0
    %v297 = vand.u32 %v73, 4294901760
    %v298 = vsub.f32 %v73, %v297
    %299 = vmatmul.mubr.f32.gmra.mrb[0].mxu0 %v298
    %v300 = vpop.f32.mrb[0].mxu0
    %v301 = vadd.f32 %v227, %v300
    %v302 = vpop.f32.mrb[0].mxu0
    %303 = vdwg.mxu0
    %304 = vmatprep.subr.mxu0 0.0
    %v305 = vand.u32 %v76, 4294901760
    %306 = vmatpush1.xpose.msra.mxu0 %v305
    %307 = vmatprep.subr.mxu0 0.0
    %308 = vmatpush1.xpose.msra.mxu0 0.0
    %309 = vmatprep.subr.mxu0 0.0
    %310 = vmatpush1.xpose.msra.mxu0 0.0
    %311 = vmatprep.subr.mxu0 0.0
    %312 = vmatpush1.xpose.msra.mxu0 0.0
    %313 = vmatprep.subr.mxu0 0.0
    %314 = vmatpush1.xpose.msra.mxu0 0.0
    %315 = vmatprep.subr.mxu0 0.0
    %316 = vmatpush1.xpose.msra.mxu0 0.0
    %317 = vmatprep.subr.mxu0 0.0
    %318 = vmatpush1.xpose.msra.mxu0 0.0
    %319 = vmatprep.subr.mxu0 0.0
    %320 = vmatpush1.xpose.msra.mxu0 0.0
    %321 = vmatprep.subr.mxu0 0.0
    %322 = vmatpush1.xpose.msra.mxu0 0.0
    %323 = vmatprep.subr.mxu0 0.0
    %324 = vmatpush1.xpose.msra.mxu0 0.0
    %325 = vmatprep.subr.mxu0 0.0
    %326 = vmatpush1.xpose.msra.mxu0 0.0
    %327 = vmatprep.subr.mxu0 0.0
    %328 = vmatpush1.xpose.msra.mxu0 0.0
    %329 = vmatprep.subr.mxu0 0.0
    %330 = vmatpush1.xpose.msra.mxu0 0.0
    %331 = vmatprep.subr.mxu0 0.0
    %332 = vmatpush1.xpose.msra.mxu0 0.0
    %333 = vmatprep.subr.mxu0 0.0
    %334 = vmatpush1.xpose.msra.mxu0 0.0
    %335 = vmatprep.subr.mxu0 0.0
    %336 = vmatpush1.xpose.msra.mxu0 0.0
    %337 = vmatprep.subr.mxu0 0.0
    %338 = vmatpush1.xpose.msra.mxu0 0.0
    %339 = vmatprep.subr.mxu0 0.0
    %340 = vmatpush1.xpose.msra.mxu0 0.0
    %341 = vmatprep.subr.mxu0 0.0
    %342 = vmatpush1.xpose.msra.mxu0 0.0
    %343 = vmatprep.subr.mxu0 0.0
    %344 = vmatpush1.xpose.msra.mxu0 0.0
    %345 = vmatprep.subr.mxu0 0.0
    %346 = vmatpush1.xpose.msra.mxu0 0.0
    %347 = vmatprep.subr.mxu0 0.0
    %348 = vmatpush1.xpose.msra.mxu0 0.0
    %349 = vmatprep.subr.mxu0 0.0
    %350 = vmatpush1.xpose.msra.mxu0 0.0
    %351 = vmatprep.subr.mxu0 0.0
    %352 = vmatpush1.xpose.msra.mxu0 0.0
    %353 = vmatprep.subr.mxu0 0.0
    %354 = vmatpush1.xpose.msra.mxu0 0.0
    %355 = vmatprep.subr.mxu0 0.0
    %356 = vmatpush1.xpose.msra.mxu0 0.0
    %357 = vmatprep.subr.mxu0 0.0
    %358 = vmatpush1.xpose.msra.mxu0 0.0
    %359 = vmatprep.subr.mxu0 0.0
    %360 = vmatpush1.xpose.msra.mxu0 0.0
    %361 = vmatprep.subr.mxu0 0.0
    %362 = vmatpush1.xpose.msra.mxu0 0.0
    %363 = vmatprep.subr.mxu0 0.0
    %364 = vmatpush1.xpose.msra.mxu0 0.0
    %365 = vmatprep.subr.mxu0 0.0
    %366 = vmatpush1.xpose.msra.mxu0 0.0
    %367 = vmatprep.subr.mxu0 0.0
    %368 = vmatpush1.xpose.msra.mxu0 0.0
    %369 = vmatprep.mubr.f32.mxu0 0.0
    %v370 = vand.u32 %v73, 4294901760
    %v371 = vsub.f32 %v73, %v370
    %v372 = vand.u32 %v371, 4294901760
    %373 = vmatmul.mubr.f32.gmra.mrb[0].mxu0 %v372
    %v374 = vpop.f32.mrb[0].mxu0
    %v375 = vadd.f32 %v301, %v374
    %v376 = vpop.f32.mrb[0].mxu0
    %377 = vdwg.mxu0
    %378 = vmatprep.subr.mxu0 0.0
    %v379 = vand.u32 %v76, 4294901760
    %v380 = vsub.f32 %v76, %v379
    %v381 = vand.u32 %v380, 4294901760
    %382 = vmatpush1.xpose.msra.mxu0 %v381
    %383 = vmatprep.subr.mxu0 0.0
    %384 = vmatpush1.xpose.msra.mxu0 0.0
    %385 = vmatprep.subr.mxu0 0.0
    %386 = vmatpush1.xpose.msra.mxu0 0.0
    %387 = vmatprep.subr.mxu0 0.0
    %388 = vmatpush1.xpose.msra.mxu0 0.0
    %389 = vmatprep.subr.mxu0 0.0
    %390 = vmatpush1.xpose.msra.mxu0 0.0
    %391 = vmatprep.subr.mxu0 0.0
    %392 = vmatpush1.xpose.msra.mxu0 0.0
    %393 = vmatprep.subr.mxu0 0.0
    %394 = vmatpush1.xpose.msra.mxu0 0.0
    %395 = vmatprep.subr.mxu0 0.0
    %396 = vmatpush1.xpose.msra.mxu0 0.0
    %397 = vmatprep.subr.mxu0 0.0
    %398 = vmatpush1.xpose.msra.mxu0 0.0
    %399 = vmatprep.subr.mxu0 0.0
    %400 = vmatpush1.xpose.msra.mxu0 0.0
    %401 = vmatprep.subr.mxu0 0.0
    %402 = vmatpush1.xpose.msra.mxu0 0.0
    %403 = vmatprep.subr.mxu0 0.0
    %404 = vmatpush1.xpose.msra.mxu0 0.0
    %405 = vmatprep.subr.mxu0 0.0
    %406 = vmatpush1.xpose.msra.mxu0 0.0
    %407 = vmatprep.subr.mxu0 0.0
    %408 = vmatpush1.xpose.msra.mxu0 0.0
    %409 = vmatprep.subr.mxu0 0.0
    %410 = vmatpush1.xpose.msra.mxu0 0.0
    %411 = vmatprep.subr.mxu0 0.0
    %412 = vmatpush1.xpose.msra.mxu0 0.0
    %413 = vmatprep.subr.mxu0 0.0
    %414 = vmatpush1.xpose.msra.mxu0 0.0
    %415 = vmatprep.subr.mxu0 0.0
    %416 = vmatpush1.xpose.msra.mxu0 0.0
    %417 = vmatprep.subr.mxu0 0.0
    %418 = vmatpush1.xpose.msra.mxu0 0.0
    %419 = vmatprep.subr.mxu0 0.0
    %420 = vmatpush1.xpose.msra.mxu0 0.0
    %421 = vmatprep.subr.mxu0 0.0
    %422 = vmatpush1.xpose.msra.mxu0 0.0
    %423 = vmatprep.subr.mxu0 0.0
    %424 = vmatpush1.xpose.msra.mxu0 0.0
    %425 = vmatprep.subr.mxu0 0.0
    %426 = vmatpush1.xpose.msra.mxu0 0.0
    %427 = vmatprep.subr.mxu0 0.0
    %428 = vmatpush1.xpose.msra.mxu0 0.0
    %429 = vmatprep.subr.mxu0 0.0
    %430 = vmatpush1.xpose.msra.mxu0 0.0
    %431 = vmatprep.subr.mxu0 0.0
    %432 = vmatpush1.xpose.msra.mxu0 0.0
    %433 = vmatprep.subr.mxu0 0.0
    %434 = vmatpush1.xpose.msra.mxu0 0.0
    %435 = vmatprep.subr.mxu0 0.0
    %436 = vmatpush1.xpose.msra.mxu0 0.0
    %437 = vmatprep.subr.mxu0 0.0
    %438 = vmatpush1.xpose.msra.mxu0 0.0
    %439 = vmatprep.subr.mxu0 0.0
    %440 = vmatpush1.xpose.msra.mxu0 0.0
    %441 = vmatprep.subr.mxu0 0.0
    %442 = vmatpush1.xpose.msra.mxu0 0.0
    %443 = vmatprep.subr.mxu0 0.0
    %444 = vmatpush1.xpose.msra.mxu0 0.0
    %445 = vmatprep.mubr.f32.mxu0 0.0
    %v446 = vand.u32 %v73, 4294901760
    %447 = vmatmul.mubr.f32.gmra.mrb[0].mxu0 %v446
    %v448 = vpop.f32.mrb[0].mxu0
    %v449 = vadd.f32 %v375, %v448
    %v450 = vpop.f32.mrb[0].mxu0
    %451 = vdwg.mxu0
    %452 = vmatprep.subr.mxu0 0.0
    %v453 = vand.u32 %v76, 4294901760
    %454 = vmatpush1.xpose.msra.mxu0 %v453
    %455 = vmatprep.subr.mxu0 0.0
    %456 = vmatpush1.xpose.msra.mxu0 0.0
    %457 = vmatprep.subr.mxu0 0.0
    %458 = vmatpush1.xpose.msra.mxu0 0.0
    %459 = vmatprep.subr.mxu0 0.0
    %460 = vmatpush1.xpose.msra.mxu0 0.0
    %461 = vmatprep.subr.mxu0 0.0
    %462 = vmatpush1.xpose.msra.mxu0 0.0
    %463 = vmatprep.subr.mxu0 0.0
    %464 = vmatpush1.xpose.msra.mxu0 0.0
    %465 = vmatprep.subr.mxu0 0.0
    %466 = vmatpush1.xpose.msra.mxu0 0.0
    %467 = vmatprep.subr.mxu0 0.0
    %468 = vmatpush1.xpose.msra.mxu0 0.0
    %469 = vmatprep.subr.mxu0 0.0
    %470 = vmatpush1.xpose.msra.mxu0 0.0
    %471 = vmatprep.subr.mxu0 0.0
    %472 = vmatpush1.xpose.msra.mxu0 0.0
    %473 = vmatprep.subr.mxu0 0.0
    %474 = vmatpush1.xpose.msra.mxu0 0.0
    %475 = vmatprep.subr.mxu0 0.0
    %476 = vmatpush1.xpose.msra.mxu0 0.0
    %477 = vmatprep.subr.mxu0 0.0
    %478 = vmatpush1.xpose.msra.mxu0 0.0
    %479 = vmatprep.subr.mxu0 0.0
    %480 = vmatpush1.xpose.msra.mxu0 0.0
    %481 = vmatprep.subr.mxu0 0.0
    %482 = vmatpush1.xpose.msra.mxu0 0.0
    %483 = vmatprep.subr.mxu0 0.0
    %484 = vmatpush1.xpose.msra.mxu0 0.0
    %485 = vmatprep.subr.mxu0 0.0
    %486 = vmatpush1.xpose.msra.mxu0 0.0
    %487 = vmatprep.subr.mxu0 0.0
    %488 = vmatpush1.xpose.msra.mxu0 0.0
    %489 = vmatprep.subr.mxu0 0.0
    %490 = vmatpush1.xpose.msra.mxu0 0.0
    %491 = vmatprep.subr.mxu0 0.0
    %492 = vmatpush1.xpose.msra.mxu0 0.0
    %493 = vmatprep.subr.mxu0 0.0
    %494 = vmatpush1.xpose.msra.mxu0 0.0
    %495 = vmatprep.subr.mxu0 0.0
    %496 = vmatpush1.xpose.msra.mxu0 0.0
    %497 = vmatprep.subr.mxu0 0.0
    %498 = vmatpush1.xpose.msra.mxu0 0.0
    %499 = vmatprep.subr.mxu0 0.0
    %500 = vmatpush1.xpose.msra.mxu0 0.0
    %501 = vmatprep.subr.mxu0 0.0
    %502 = vmatpush1.xpose.msra.mxu0 0.0
    %503 = vmatprep.subr.mxu0 0.0
    %504 = vmatpush1.xpose.msra.mxu0 0.0
    %505 = vmatprep.subr.mxu0 0.0
    %506 = vmatpush1.xpose.msra.mxu0 0.0
    %507 = vmatprep.subr.mxu0 0.0
    %508 = vmatpush1.xpose.msra.mxu0 0.0
    %509 = vmatprep.subr.mxu0 0.0
    %510 = vmatpush1.xpose.msra.mxu0 0.0
    %511 = vmatprep.subr.mxu0 0.0
    %512 = vmatpush1.xpose.msra.mxu0 0.0
    %513 = vmatprep.subr.mxu0 0.0
    %514 = vmatpush1.xpose.msra.mxu0 0.0
    %515 = vmatprep.subr.mxu0 0.0
    %516 = vmatpush1.xpose.msra.mxu0 0.0
    %517 = vmatprep.mubr.f32.mxu0 0.0
    %v518 = vand.u32 %v73, 4294901760
    %519 = vmatmul.mubr.f32.gmra.mrb[0].mxu0 %v518
    %v520 = vpop.f32.mrb[0].mxu0
    %v521 = vadd.f32 %v449, %v520
    %v522 = vpop.f32.mrb[0].mxu0
    %523 = vdwg.mxu0
    %v525 = vsel %vm71, %v60, 0
    %v528 = vsel %vm71, %v64, 0
    %530 = vmatprep.subr.mxu0 0.0
    %v531 = vand.u32 %v528, 4294901760
    %532 = vmatpush1.xpose.msra.mxu0 %v531
    %533 = vmatprep.subr.mxu0 0.0
    %534 = vmatpush1.xpose.msra.mxu0 0.0
    %535 = vmatprep.subr.mxu0 0.0
    %536 = vmatpush1.xpose.msra.mxu0 0.0
    %537 = vmatprep.subr.mxu0 0.0
    %538 = vmatpush1.xpose.msra.mxu0 0.0
    %539 = vmatprep.subr.mxu0 0.0
    %540 = vmatpush1.xpose.msra.mxu0 0.0
    %541 = vmatprep.subr.mxu0 0.0
    %542 = vmatpush1.xpose.msra.mxu0 0.0
    %543 = vmatprep.subr.mxu0 0.0
    %544 = vmatpush1.xpose.msra.mxu0 0.0
    %545 = vmatprep.subr.mxu0 0.0
    %546 = vmatpush1.xpose.msra.mxu0 0.0
    %547 = vmatprep.subr.mxu0 0.0
    %548 = vmatpush1.xpose.msra.mxu0 0.0
    %549 = vmatprep.subr.mxu0 0.0
    %550 = vmatpush1.xpose.msra.mxu0 0.0
    %551 = vmatprep.subr.mxu0 0.0
    %552 = vmatpush1.xpose.msra.mxu0 0.0
    %553 = vmatprep.subr.mxu0 0.0
    %554 = vmatpush1.xpose.msra.mxu0 0.0
    %555 = vmatprep.subr.mxu0 0.0
    %556 = vmatpush1.xpose.msra.mxu0 0.0
    %557 = vmatprep.subr.mxu0 0.0
    %558 = vmatpush1.xpose.msra.mxu0 0.0
    %559 = vmatprep.subr.mxu0 0.0
    %560 = vmatpush1.xpose.msra.mxu0 0.0
    %561 = vmatprep.subr.mxu0 0.0
    %562 = vmatpush1.xpose.msra.mxu0 0.0
    %563 = vmatprep.subr.mxu0 0.0
    %564 = vmatpush1.xpose.msra.mxu0 0.0
    %565 = vmatprep.subr.mxu0 0.0
    %566 = vmatpush1.xpose.msra.mxu0 0.0
    %567 = vmatprep.subr.mxu0 0.0
    %568 = vmatpush1.xpose.msra.mxu0 0.0
    %569 = vmatprep.subr.mxu0 0.0
    %570 = vmatpush1.xpose.msra.mxu0 0.0
    %571 = vmatprep.subr.mxu0 0.0
    %572 = vmatpush1.xpose.msra.mxu0 0.0
    %573 = vmatprep.subr.mxu0 0.0
    %574 = vmatpush1.xpose.msra.mxu0 0.0
    %575 = vmatprep.subr.mxu0 0.0
    %576 = vmatpush1.xpose.msra.mxu0 0.0
    %577 = vmatprep.subr.mxu0 0.0
    %578 = vmatpush1.xpose.msra.mxu0 0.0
    %579 = vmatprep.subr.mxu0 0.0
    %580 = vmatpush1.xpose.msra.mxu0 0.0
    %581 = vmatprep.subr.mxu0 0.0
    %582 = vmatpush1.xpose.msra.mxu0 0.0
    %583 = vmatprep.subr.mxu0 0.0
    %584 = vmatpush1.xpose.msra.mxu0 0.0
    %585 = vmatprep.subr.mxu0 0.0
    %586 = vmatpush1.xpose.msra.mxu0 0.0
    %587 = vmatprep.subr.mxu0 0.0
    %588 = vmatpush1.xpose.msra.mxu0 0.0
    %589 = vmatprep.subr.mxu0 0.0
    %590 = vmatpush1.xpose.msra.mxu0 0.0
    %591 = vmatprep.subr.mxu0 0.0
    %592 = vmatpush1.xpose.msra.mxu0 0.0
    %593 = vmatprep.subr.mxu0 0.0
    %594 = vmatpush1.xpose.msra.mxu0 0.0
    %595 = vmatprep.mubr.f32.mxu0 0.0
    %v596 = vand.u32 %v525, 4294901760
    %v597 = vsub.f32 %v525, %v596
    %v598 = vand.u32 %v597, 4294901760
    %v599 = vsub.f32 %v597, %v598
    %v600 = vand.u32 %v599, 4294901760
    %601 = vmatmul.mubr.f32.gmra.mrb[0].mxu0 %v600
    %v602 = vpop.f32.mrb[0].mxu0
    %v603 = vadd.f32 0.0, %v602
    %v604 = vpop.f32.mrb[0].mxu0
    %605 = vdwg.mxu0
    %606 = vmatprep.subr.mxu0 0.0
    %v607 = vand.u32 %v528, 4294901760
    %v608 = vsub.f32 %v528, %v607
    %v609 = vand.u32 %v608, 4294901760
    %v610 = vsub.f32 %v608, %v609
    %v611 = vand.u32 %v610, 4294901760
    %612 = vmatpush1.xpose.msra.mxu0 %v611
    %613 = vmatprep.subr.mxu0 0.0
    %614 = vmatpush1.xpose.msra.mxu0 0.0
    %615 = vmatprep.subr.mxu0 0.0
    %616 = vmatpush1.xpose.msra.mxu0 0.0
    %617 = vmatprep.subr.mxu0 0.0
    %618 = vmatpush1.xpose.msra.mxu0 0.0
    %619 = vmatprep.subr.mxu0 0.0
    %620 = vmatpush1.xpose.msra.mxu0 0.0
    %621 = vmatprep.subr.mxu0 0.0
    %622 = vmatpush1.xpose.msra.mxu0 0.0
    %623 = vmatprep.subr.mxu0 0.0
    %624 = vmatpush1.xpose.msra.mxu0 0.0
    %625 = vmatprep.subr.mxu0 0.0
    %626 = vmatpush1.xpose.msra.mxu0 0.0
    %627 = vmatprep.subr.mxu0 0.0
    %628 = vmatpush1.xpose.msra.mxu0 0.0
    %629 = vmatprep.subr.mxu0 0.0
    %630 = vmatpush1.xpose.msra.mxu0 0.0
    %631 = vmatprep.subr.mxu0 0.0
    %632 = vmatpush1.xpose.msra.mxu0 0.0
    %633 = vmatprep.subr.mxu0 0.0
    %634 = vmatpush1.xpose.msra.mxu0 0.0
    %635 = vmatprep.subr.mxu0 0.0
    %636 = vmatpush1.xpose.msra.mxu0 0.0
    %637 = vmatprep.subr.mxu0 0.0
    %638 = vmatpush1.xpose.msra.mxu0 0.0
    %639 = vmatprep.subr.mxu0 0.0
    %640 = vmatpush1.xpose.msra.mxu0 0.0
    %641 = vmatprep.subr.mxu0 0.0
    %642 = vmatpush1.xpose.msra.mxu0 0.0
    %643 = vmatprep.subr.mxu0 0.0
    %644 = vmatpush1.xpose.msra.mxu0 0.0
    %645 = vmatprep.subr.mxu0 0.0
    %646 = vmatpush1.xpose.msra.mxu0 0.0
    %647 = vmatprep.subr.mxu0 0.0
    %648 = vmatpush1.xpose.msra.mxu0 0.0
    %649 = vmatprep.subr.mxu0 0.0
    %650 = vmatpush1.xpose.msra.mxu0 0.0
    %651 = vmatprep.subr.mxu0 0.0
    %652 = vmatpush1.xpose.msra.mxu0 0.0
    %653 = vmatprep.subr.mxu0 0.0
    %654 = vmatpush1.xpose.msra.mxu0 0.0
    %655 = vmatprep.subr.mxu0 0.0
    %656 = vmatpush1.xpose.msra.mxu0 0.0
    %657 = vmatprep.subr.mxu0 0.0
    %658 = vmatpush1.xpose.msra.mxu0 0.0
    %659 = vmatprep.subr.mxu0 0.0
    %660 = vmatpush1.xpose.msra.mxu0 0.0
    %661 = vmatprep.subr.mxu0 0.0
    %662 = vmatpush1.xpose.msra.mxu0 0.0
    %663 = vmatprep.subr.mxu0 0.0
    %664 = vmatpush1.xpose.msra.mxu0 0.0
    %665 = vmatprep.subr.mxu0 0.0
    %666 = vmatpush1.xpose.msra.mxu0 0.0
    %667 = vmatprep.subr.mxu0 0.0
    %668 = vmatpush1.xpose.msra.mxu0 0.0
    %669 = vmatprep.subr.mxu0 0.0
    %670 = vmatpush1.xpose.msra.mxu0 0.0
    %671 = vmatprep.subr.mxu0 0.0
    %672 = vmatpush1.xpose.msra.mxu0 0.0
    %673 = vmatprep.subr.mxu0 0.0
    %674 = vmatpush1.xpose.msra.mxu0 0.0
    %675 = vmatprep.mubr.f32.mxu0 0.0
    %v676 = vand.u32 %v525, 4294901760
    %677 = vmatmul.mubr.f32.gmra.mrb[0].mxu0 %v676
    %v678 = vpop.f32.mrb[0].mxu0
    %v679 = vadd.f32 %v603, %v678
    %v680 = vpop.f32.mrb[0].mxu0
    %681 = vdwg.mxu0
    %682 = vmatprep.subr.mxu0 0.0
    %v683 = vand.u32 %v528, 4294901760
    %v684 = vsub.f32 %v528, %v683
    %685 = vmatpush1.xpose.msra.mxu0 %v684
    %686 = vmatprep.subr.mxu0 0.0
    %687 = vmatpush1.xpose.msra.mxu0 0.0
    %688 = vmatprep.subr.mxu0 0.0
    %689 = vmatpush1.xpose.msra.mxu0 0.0
    %690 = vmatprep.subr.mxu0 0.0
    %691 = vmatpush1.xpose.msra.mxu0 0.0
    %692 = vmatprep.subr.mxu0 0.0
    %693 = vmatpush1.xpose.msra.mxu0 0.0
    %694 = vmatprep.subr.mxu0 0.0
    %695 = vmatpush1.xpose.msra.mxu0 0.0
    %696 = vmatprep.subr.mxu0 0.0
    %697 = vmatpush1.xpose.msra.mxu0 0.0
    %698 = vmatprep.subr.mxu0 0.0
    %699 = vmatpush1.xpose.msra.mxu0 0.0
    %700 = vmatprep.subr.mxu0 0.0
    %701 = vmatpush1.xpose.msra.mxu0 0.0
    %702 = vmatprep.subr.mxu0 0.0
    %703 = vmatpush1.xpose.msra.mxu0 0.0
    %704 = vmatprep.subr.mxu0 0.0
    %705 = vmatpush1.xpose.msra.mxu0 0.0
    %706 = vmatprep.subr.mxu0 0.0
    %707 = vmatpush1.xpose.msra.mxu0 0.0
    %708 = vmatprep.subr.mxu0 0.0
    %709 = vmatpush1.xpose.msra.mxu0 0.0
    %710 = vmatprep.subr.mxu0 0.0
    %711 = vmatpush1.xpose.msra.mxu0 0.0
    %712 = vmatprep.subr.mxu0 0.0
    %713 = vmatpush1.xpose.msra.mxu0 0.0
    %714 = vmatprep.subr.mxu0 0.0
    %715 = vmatpush1.xpose.msra.mxu0 0.0
    %716 = vmatprep.subr.mxu0 0.0
    %717 = vmatpush1.xpose.msra.mxu0 0.0
    %718 = vmatprep.subr.mxu0 0.0
    %719 = vmatpush1.xpose.msra.mxu0 0.0
    %720 = vmatprep.subr.mxu0 0.0
    %721 = vmatpush1.xpose.msra.mxu0 0.0
    %722 = vmatprep.subr.mxu0 0.0
    %723 = vmatpush1.xpose.msra.mxu0 0.0
    %724 = vmatprep.subr.mxu0 0.0
    %725 = vmatpush1.xpose.msra.mxu0 0.0
    %726 = vmatprep.subr.mxu0 0.0
    %727 = vmatpush1.xpose.msra.mxu0 0.0
    %728 = vmatprep.subr.mxu0 0.0
    %729 = vmatpush1.xpose.msra.mxu0 0.0
    %730 = vmatprep.subr.mxu0 0.0
    %731 = vmatpush1.xpose.msra.mxu0 0.0
    %732 = vmatprep.subr.mxu0 0.0
    %733 = vmatpush1.xpose.msra.mxu0 0.0
    %734 = vmatprep.subr.mxu0 0.0
    %735 = vmatpush1.xpose.msra.mxu0 0.0
    %736 = vmatprep.subr.mxu0 0.0
    %737 = vmatpush1.xpose.msra.mxu0 0.0
    %738 = vmatprep.subr.mxu0 0.0
    %739 = vmatpush1.xpose.msra.mxu0 0.0
    %740 = vmatprep.subr.mxu0 0.0
    %741 = vmatpush1.xpose.msra.mxu0 0.0
    %742 = vmatprep.subr.mxu0 0.0
    %743 = vmatpush1.xpose.msra.mxu0 0.0
    %744 = vmatprep.subr.mxu0 0.0
    %745 = vmatpush1.xpose.msra.mxu0 0.0
    %746 = vmatprep.subr.mxu0 0.0
    %747 = vmatpush1.xpose.msra.mxu0 0.0
    %748 = vmatprep.mubr.f32.mxu0 0.0
    %v749 = vand.u32 %v525, 4294901760
    %v750 = vsub.f32 %v525, %v749
    %751 = vmatmul.mubr.f32.gmra.mrb[0].mxu0 %v750
    %v752 = vpop.f32.mrb[0].mxu0
    %v753 = vadd.f32 %v679, %v752
    %v754 = vpop.f32.mrb[0].mxu0
    %755 = vdwg.mxu0
    %756 = vmatprep.subr.mxu0 0.0
    %v757 = vand.u32 %v528, 4294901760
    %758 = vmatpush1.xpose.msra.mxu0 %v757
    %759 = vmatprep.subr.mxu0 0.0
    %760 = vmatpush1.xpose.msra.mxu0 0.0
    %761 = vmatprep.subr.mxu0 0.0
    %762 = vmatpush1.xpose.msra.mxu0 0.0
    %763 = vmatprep.subr.mxu0 0.0
    %764 = vmatpush1.xpose.msra.mxu0 0.0
    %765 = vmatprep.subr.mxu0 0.0
    %766 = vmatpush1.xpose.msra.mxu0 0.0
    %767 = vmatprep.subr.mxu0 0.0
    %768 = vmatpush1.xpose.msra.mxu0 0.0
    %769 = vmatprep.subr.mxu0 0.0
    %770 = vmatpush1.xpose.msra.mxu0 0.0
    %771 = vmatprep.subr.mxu0 0.0
    %772 = vmatpush1.xpose.msra.mxu0 0.0
    %773 = vmatprep.subr.mxu0 0.0
    %774 = vmatpush1.xpose.msra.mxu0 0.0
    %775 = vmatprep.subr.mxu0 0.0
    %776 = vmatpush1.xpose.msra.mxu0 0.0
    %777 = vmatprep.subr.mxu0 0.0
    %778 = vmatpush1.xpose.msra.mxu0 0.0
    %779 = vmatprep.subr.mxu0 0.0
    %780 = vmatpush1.xpose.msra.mxu0 0.0
    %781 = vmatprep.subr.mxu0 0.0
    %782 = vmatpush1.xpose.msra.mxu0 0.0
    %783 = vmatprep.subr.mxu0 0.0
    %784 = vmatpush1.xpose.msra.mxu0 0.0
    %785 = vmatprep.subr.mxu0 0.0
    %786 = vmatpush1.xpose.msra.mxu0 0.0
    %787 = vmatprep.subr.mxu0 0.0
    %788 = vmatpush1.xpose.msra.mxu0 0.0
    %789 = vmatprep.subr.mxu0 0.0
    %790 = vmatpush1.xpose.msra.mxu0 0.0
    %791 = vmatprep.subr.mxu0 0.0
    %792 = vmatpush1.xpose.msra.mxu0 0.0
    %793 = vmatprep.subr.mxu0 0.0
    %794 = vmatpush1.xpose.msra.mxu0 0.0
    %795 = vmatprep.subr.mxu0 0.0
    %796 = vmatpush1.xpose.msra.mxu0 0.0
    %797 = vmatprep.subr.mxu0 0.0
    %798 = vmatpush1.xpose.msra.mxu0 0.0
    %799 = vmatprep.subr.mxu0 0.0
    %800 = vmatpush1.xpose.msra.mxu0 0.0
    %801 = vmatprep.subr.mxu0 0.0
    %802 = vmatpush1.xpose.msra.mxu0 0.0
    %803 = vmatprep.subr.mxu0 0.0
    %804 = vmatpush1.xpose.msra.mxu0 0.0
    %805 = vmatprep.subr.mxu0 0.0
    %806 = vmatpush1.xpose.msra.mxu0 0.0
    %807 = vmatprep.subr.mxu0 0.0
    %808 = vmatpush1.xpose.msra.mxu0 0.0
    %809 = vmatprep.subr.mxu0 0.0
    %810 = vmatpush1.xpose.msra.mxu0 0.0
    %811 = vmatprep.subr.mxu0 0.0
    %812 = vmatpush1.xpose.msra.mxu0 0.0
    %813 = vmatprep.subr.mxu0 0.0
    %814 = vmatpush1.xpose.msra.mxu0 0.0
    %815 = vmatprep.subr.mxu0 0.0
    %816 = vmatpush1.xpose.msra.mxu0 0.0
    %817 = vmatprep.subr.mxu0 0.0
    %818 = vmatpush1.xpose.msra.mxu0 0.0
    %819 = vmatprep.subr.mxu0 0.0
    %820 = vmatpush1.xpose.msra.mxu0 0.0
    %821 = vmatprep.mubr.f32.mxu0 0.0
    %v822 = vand.u32 %v525, 4294901760
    %v823 = vsub.f32 %v525, %v822
    %v824 = vand.u32 %v823, 4294901760
    %825 = vmatmul.mubr.f32.gmra.mrb[0].mxu0 %v824
    %v826 = vpop.f32.mrb[0].mxu0
    %v827 = vadd.f32 %v753, %v826
    %v828 = vpop.f32.mrb[0].mxu0
    %829 = vdwg.mxu0
    %830 = vmatprep.subr.mxu0 0.0
    %v831 = vand.u32 %v528, 4294901760
    %v832 = vsub.f32 %v528, %v831
    %v833 = vand.u32 %v832, 4294901760
    %834 = vmatpush1.xpose.msra.mxu0 %v833
    %835 = vmatprep.subr.mxu0 0.0
    %836 = vmatpush1.xpose.msra.mxu0 0.0
    %837 = vmatprep.subr.mxu0 0.0
    %838 = vmatpush1.xpose.msra.mxu0 0.0
    %839 = vmatprep.subr.mxu0 0.0
    %840 = vmatpush1.xpose.msra.mxu0 0.0
    %841 = vmatprep.subr.mxu0 0.0
    %842 = vmatpush1.xpose.msra.mxu0 0.0
    %843 = vmatprep.subr.mxu0 0.0
    %844 = vmatpush1.xpose.msra.mxu0 0.0
    %845 = vmatprep.subr.mxu0 0.0
    %846 = vmatpush1.xpose.msra.mxu0 0.0
    %847 = vmatprep.subr.mxu0 0.0
    %848 = vmatpush1.xpose.msra.mxu0 0.0
    %849 = vmatprep.subr.mxu0 0.0
    %850 = vmatpush1.xpose.msra.mxu0 0.0
    %851 = vmatprep.subr.mxu0 0.0
    %852 = vmatpush1.xpose.msra.mxu0 0.0
    %853 = vmatprep.subr.mxu0 0.0
    %854 = vmatpush1.xpose.msra.mxu0 0.0
    %855 = vmatprep.subr.mxu0 0.0
    %856 = vmatpush1.xpose.msra.mxu0 0.0
    %857 = vmatprep.subr.mxu0 0.0
    %858 = vmatpush1.xpose.msra.mxu0 0.0
    %859 = vmatprep.subr.mxu0 0.0
    %860 = vmatpush1.xpose.msra.mxu0 0.0
    %861 = vmatprep.subr.mxu0 0.0
    %862 = vmatpush1.xpose.msra.mxu0 0.0
    %863 = vmatprep.subr.mxu0 0.0
    %864 = vmatpush1.xpose.msra.mxu0 0.0
    %865 = vmatprep.subr.mxu0 0.0
    %866 = vmatpush1.xpose.msra.mxu0 0.0
    %867 = vmatprep.subr.mxu0 0.0
    %868 = vmatpush1.xpose.msra.mxu0 0.0
    %869 = vmatprep.subr.mxu0 0.0
    %870 = vmatpush1.xpose.msra.mxu0 0.0
    %871 = vmatprep.subr.mxu0 0.0
    %872 = vmatpush1.xpose.msra.mxu0 0.0
    %873 = vmatprep.subr.mxu0 0.0
    %874 = vmatpush1.xpose.msra.mxu0 0.0
    %875 = vmatprep.subr.mxu0 0.0
    %876 = vmatpush1.xpose.msra.mxu0 0.0
    %877 = vmatprep.subr.mxu0 0.0
    %878 = vmatpush1.xpose.msra.mxu0 0.0
    %879 = vmatprep.subr.mxu0 0.0
    %880 = vmatpush1.xpose.msra.mxu0 0.0
    %881 = vmatprep.subr.mxu0 0.0
    %882 = vmatpush1.xpose.msra.mxu0 0.0
    %883 = vmatprep.subr.mxu0 0.0
    %884 = vmatpush1.xpose.msra.mxu0 0.0
    %885 = vmatprep.subr.mxu0 0.0
    %886 = vmatpush1.xpose.msra.mxu0 0.0
    %887 = vmatprep.subr.mxu0 0.0
    %888 = vmatpush1.xpose.msra.mxu0 0.0
    %889 = vmatprep.subr.mxu0 0.0
    %890 = vmatpush1.xpose.msra.mxu0 0.0
    %891 = vmatprep.subr.mxu0 0.0
    %892 = vmatpush1.xpose.msra.mxu0 0.0
    %893 = vmatprep.subr.mxu0 0.0
    %894 = vmatpush1.xpose.msra.mxu0 0.0
    %895 = vmatprep.subr.mxu0 0.0
    %896 = vmatpush1.xpose.msra.mxu0 0.0
    %897 = vmatprep.mubr.f32.mxu0 0.0
    %v898 = vand.u32 %v525, 4294901760
    %899 = vmatmul.mubr.f32.gmra.mrb[0].mxu0 %v898
    %v900 = vpop.f32.mrb[0].mxu0
    %v901 = vadd.f32 %v827, %v900
    %v902 = vpop.f32.mrb[0].mxu0
    %903 = vdwg.mxu0
    %904 = vmatprep.subr.mxu0 0.0
    %v905 = vand.u32 %v528, 4294901760
    %906 = vmatpush1.xpose.msra.mxu0 %v905
    %907 = vmatprep.subr.mxu0 0.0
    %908 = vmatpush1.xpose.msra.mxu0 0.0
    %909 = vmatprep.subr.mxu0 0.0
    %910 = vmatpush1.xpose.msra.mxu0 0.0
    %911 = vmatprep.subr.mxu0 0.0
    %912 = vmatpush1.xpose.msra.mxu0 0.0
    %913 = vmatprep.subr.mxu0 0.0
    %914 = vmatpush1.xpose.msra.mxu0 0.0
    %915 = vmatprep.subr.mxu0 0.0
    %916 = vmatpush1.xpose.msra.mxu0 0.0
    %917 = vmatprep.subr.mxu0 0.0
    %918 = vmatpush1.xpose.msra.mxu0 0.0
    %919 = vmatprep.subr.mxu0 0.0
    %920 = vmatpush1.xpose.msra.mxu0 0.0
    %921 = vmatprep.subr.mxu0 0.0
    %922 = vmatpush1.xpose.msra.mxu0 0.0
    %923 = vmatprep.subr.mxu0 0.0
    %924 = vmatpush1.xpose.msra.mxu0 0.0
    %925 = vmatprep.subr.mxu0 0.0
    %926 = vmatpush1.xpose.msra.mxu0 0.0
    %927 = vmatprep.subr.mxu0 0.0
    %928 = vmatpush1.xpose.msra.mxu0 0.0
    %929 = vmatprep.subr.mxu0 0.0
    %930 = vmatpush1.xpose.msra.mxu0 0.0
    %931 = vmatprep.subr.mxu0 0.0
    %932 = vmatpush1.xpose.msra.mxu0 0.0
    %933 = vmatprep.subr.mxu0 0.0
    %934 = vmatpush1.xpose.msra.mxu0 0.0
    %935 = vmatprep.subr.mxu0 0.0
    %936 = vmatpush1.xpose.msra.mxu0 0.0
    %937 = vmatprep.subr.mxu0 0.0
    %938 = vmatpush1.xpose.msra.mxu0 0.0
    %939 = vmatprep.subr.mxu0 0.0
    %940 = vmatpush1.xpose.msra.mxu0 0.0
    %941 = vmatprep.subr.mxu0 0.0
    %942 = vmatpush1.xpose.msra.mxu0 0.0
    %943 = vmatprep.subr.mxu0 0.0
    %944 = vmatpush1.xpose.msra.mxu0 0.0
    %945 = vmatprep.subr.mxu0 0.0
    %946 = vmatpush1.xpose.msra.mxu0 0.0
    %947 = vmatprep.subr.mxu0 0.0
    %948 = vmatpush1.xpose.msra.mxu0 0.0
    %949 = vmatprep.subr.mxu0 0.0
    %950 = vmatpush1.xpose.msra.mxu0 0.0
    %951 = vmatprep.subr.mxu0 0.0
    %952 = vmatpush1.xpose.msra.mxu0 0.0
    %953 = vmatprep.subr.mxu0 0.0
    %954 = vmatpush1.xpose.msra.mxu0 0.0
    %955 = vmatprep.subr.mxu0 0.0
    %956 = vmatpush1.xpose.msra.mxu0 0.0
    %957 = vmatprep.subr.mxu0 0.0
    %958 = vmatpush1.xpose.msra.mxu0 0.0
    %959 = vmatprep.subr.mxu0 0.0
    %960 = vmatpush1.xpose.msra.mxu0 0.0
    %961 = vmatprep.subr.mxu0 0.0
    %962 = vmatpush1.xpose.msra.mxu0 0.0
    %963 = vmatprep.subr.mxu0 0.0
    %964 = vmatpush1.xpose.msra.mxu0 0.0
    %965 = vmatprep.subr.mxu0 0.0
    %966 = vmatpush1.xpose.msra.mxu0 0.0
    %967 = vmatprep.subr.mxu0 0.0
    %968 = vmatpush1.xpose.msra.mxu0 0.0
    %969 = vmatprep.mubr.f32.mxu0 0.0
    %v970 = vand.u32 %v525, 4294901760
    %971 = vmatmul.mubr.f32.gmra.mrb[0].mxu0 %v970
    %v972 = vpop.f32.mrb[0].mxu0
    %v973 = vadd.f32 %v901, %v972
    %v974 = vpop.f32.mrb[0].mxu0
    %975 = vdwg.mxu0
    %v977 = vsel %vm71, %v61, 0
    %v980 = vsel %vm71, %v65, 0
    %982 = vmatprep.subr.mxu0 0.0
    %v983 = vand.u32 %v980, 4294901760
    %984 = vmatpush1.xpose.msra.mxu0 %v983
    %985 = vmatprep.subr.mxu0 0.0
    %986 = vmatpush1.xpose.msra.mxu0 0.0
    %987 = vmatprep.subr.mxu0 0.0
    %988 = vmatpush1.xpose.msra.mxu0 0.0
    %989 = vmatprep.subr.mxu0 0.0
    %990 = vmatpush1.xpose.msra.mxu0 0.0
    %991 = vmatprep.subr.mxu0 0.0
    %992 = vmatpush1.xpose.msra.mxu0 0.0
    %993 = vmatprep.subr.mxu0 0.0
    %994 = vmatpush1.xpose.msra.mxu0 0.0
    %995 = vmatprep.subr.mxu0 0.0
    %996 = vmatpush1.xpose.msra.mxu0 0.0
    %997 = vmatprep.subr.mxu0 0.0
    %998 = vmatpush1.xpose.msra.mxu0 0.0
    %999 = vmatprep.subr.mxu0 0.0
    %1000 = vmatpush1.xpose.msra.mxu0 0.0
    %1001 = vmatprep.subr.mxu0 0.0
    %1002 = vmatpush1.xpose.msra.mxu0 0.0
    %1003 = vmatprep.subr.mxu0 0.0
    %1004 = vmatpush1.xpose.msra.mxu0 0.0
    %1005 = vmatprep.subr.mxu0 0.0
    %1006 = vmatpush1.xpose.msra.mxu0 0.0
    %1007 = vmatprep.subr.mxu0 0.0
    %1008 = vmatpush1.xpose.msra.mxu0 0.0
    %1009 = vmatprep.subr.mxu0 0.0
    %1010 = vmatpush1.xpose.msra.mxu0 0.0
    %1011 = vmatprep.subr.mxu0 0.0
    %1012 = vmatpush1.xpose.msra.mxu0 0.0
    %1013 = vmatprep.subr.mxu0 0.0
    %1014 = vmatpush1.xpose.msra.mxu0 0.0
    %1015 = vmatprep.subr.mxu0 0.0
    %1016 = vmatpush1.xpose.msra.mxu0 0.0
    %1017 = vmatprep.subr.mxu0 0.0
    %1018 = vmatpush1.xpose.msra.mxu0 0.0
    %1019 = vmatprep.subr.mxu0 0.0
    %1020 = vmatpush1.xpose.msra.mxu0 0.0
    %1021 = vmatprep.subr.mxu0 0.0
    %1022 = vmatpush1.xpose.msra.mxu0 0.0
    %1023 = vmatprep.subr.mxu0 0.0
    %1024 = vmatpush1.xpose.msra.mxu0 0.0
    %1025 = vmatprep.subr.mxu0 0.0
    %1026 = vmatpush1.xpose.msra.mxu0 0.0
    %1027 = vmatprep.subr.mxu0 0.0
    %1028 = vmatpush1.xpose.msra.mxu0 0.0
    %1029 = vmatprep.subr.mxu0 0.0
    %1030 = vmatpush1.xpose.msra.mxu0 0.0
    %1031 = vmatprep.subr.mxu0 0.0
    %1032 = vmatpush1.xpose.msra.mxu0 0.0
    %1033 = vmatprep.subr.mxu0 0.0
    %1034 = vmatpush1.xpose.msra.mxu0 0.0
    %1035 = vmatprep.subr.mxu0 0.0
    %1036 = vmatpush1.xpose.msra.mxu0 0.0
    %1037 = vmatprep.subr.mxu0 0.0
    %1038 = vmatpush1.xpose.msra.mxu0 0.0
    %1039 = vmatprep.subr.mxu0 0.0
    %1040 = vmatpush1.xpose.msra.mxu0 0.0
    %1041 = vmatprep.subr.mxu0 0.0
    %1042 = vmatpush1.xpose.msra.mxu0 0.0
    %1043 = vmatprep.subr.mxu0 0.0
    %1044 = vmatpush1.xpose.msra.mxu0 0.0
    %1045 = vmatprep.subr.mxu0 0.0
    %1046 = vmatpush1.xpose.msra.mxu0 0.0
    %1047 = vmatprep.mubr.f32.mxu0 0.0
    %v1048 = vand.u32 %v977, 4294901760
    %v1049 = vsub.f32 %v977, %v1048
    %v1050 = vand.u32 %v1049, 4294901760
    %v1051 = vsub.f32 %v1049, %v1050
    %v1052 = vand.u32 %v1051, 4294901760
    %1053 = vmatmul.mubr.f32.gmra.mrb[0].mxu0 %v1052
    %v1054 = vpop.f32.mrb[0].mxu0
    %v1055 = vadd.f32 0.0, %v1054
    %v1056 = vpop.f32.mrb[0].mxu0
    %1057 = vdwg.mxu0
    %1058 = vmatprep.subr.mxu0 0.0
    %v1059 = vand.u32 %v980, 4294901760
    %v1060 = vsub.f32 %v980, %v1059
    %v1061 = vand.u32 %v1060, 4294901760
    %v1062 = vsub.f32 %v1060, %v1061
    %v1063 = vand.u32 %v1062, 4294901760
    %1064 = vmatpush1.xpose.msra.mxu0 %v1063
    %1065 = vmatprep.subr.mxu0 0.0
    %1066 = vmatpush1.xpose.msra.mxu0 0.0
    %1067 = vmatprep.subr.mxu0 0.0
    %1068 = vmatpush1.xpose.msra.mxu0 0.0
    %1069 = vmatprep.subr.mxu0 0.0
    %1070 = vmatpush1.xpose.msra.mxu0 0.0
    %1071 = vmatprep.subr.mxu0 0.0
    %1072 = vmatpush1.xpose.msra.mxu0 0.0
    %1073 = vmatprep.subr.mxu0 0.0
    %1074 = vmatpush1.xpose.msra.mxu0 0.0
    %1075 = vmatprep.subr.mxu0 0.0
    %1076 = vmatpush1.xpose.msra.mxu0 0.0
    %1077 = vmatprep.subr.mxu0 0.0
    %1078 = vmatpush1.xpose.msra.mxu0 0.0
    %1079 = vmatprep.subr.mxu0 0.0
    %1080 = vmatpush1.xpose.msra.mxu0 0.0
    %1081 = vmatprep.subr.mxu0 0.0
    %1082 = vmatpush1.xpose.msra.mxu0 0.0
    %1083 = vmatprep.subr.mxu0 0.0
    %1084 = vmatpush1.xpose.msra.mxu0 0.0
    %1085 = vmatprep.subr.mxu0 0.0
    %1086 = vmatpush1.xpose.msra.mxu0 0.0
    %1087 = vmatprep.subr.mxu0 0.0
    %1088 = vmatpush1.xpose.msra.mxu0 0.0
    %1089 = vmatprep.subr.mxu0 0.0
    %1090 = vmatpush1.xpose.msra.mxu0 0.0
    %1091 = vmatprep.subr.mxu0 0.0
    %1092 = vmatpush1.xpose.msra.mxu0 0.0
    %1093 = vmatprep.subr.mxu0 0.0
    %1094 = vmatpush1.xpose.msra.mxu0 0.0
    %1095 = vmatprep.subr.mxu0 0.0
    %1096 = vmatpush1.xpose.msra.mxu0 0.0
    %1097 = vmatprep.subr.mxu0 0.0
    %1098 = vmatpush1.xpose.msra.mxu0 0.0
    %1099 = vmatprep.subr.mxu0 0.0
    %1100 = vmatpush1.xpose.msra.mxu0 0.0
    %1101 = vmatprep.subr.mxu0 0.0
    %1102 = vmatpush1.xpose.msra.mxu0 0.0
    %1103 = vmatprep.subr.mxu0 0.0
    %1104 = vmatpush1.xpose.msra.mxu0 0.0
    %1105 = vmatprep.subr.mxu0 0.0
    %1106 = vmatpush1.xpose.msra.mxu0 0.0
    %1107 = vmatprep.subr.mxu0 0.0
    %1108 = vmatpush1.xpose.msra.mxu0 0.0
    %1109 = vmatprep.subr.mxu0 0.0
    %1110 = vmatpush1.xpose.msra.mxu0 0.0
    %1111 = vmatprep.subr.mxu0 0.0
    %1112 = vmatpush1.xpose.msra.mxu0 0.0
    %1113 = vmatprep.subr.mxu0 0.0
    %1114 = vmatpush1.xpose.msra.mxu0 0.0
    %1115 = vmatprep.subr.mxu0 0.0
    %1116 = vmatpush1.xpose.msra.mxu0 0.0
    %1117 = vmatprep.subr.mxu0 0.0
    %1118 = vmatpush1.xpose.msra.mxu0 0.0
    %1119 = vmatprep.subr.mxu0 0.0
    %1120 = vmatpush1.xpose.msra.mxu0 0.0
    %1121 = vmatprep.subr.mxu0 0.0
    %1122 = vmatpush1.xpose.msra.mxu0 0.0
    %1123 = vmatprep.subr.mxu0 0.0
    %1124 = vmatpush1.xpose.msra.mxu0 0.0
    %1125 = vmatprep.subr.mxu0 0.0
    %1126 = vmatpush1.xpose.msra.mxu0 0.0
    %1127 = vmatprep.mubr.f32.mxu0 0.0
    %v1128 = vand.u32 %v977, 4294901760
    %1129 = vmatmul.mubr.f32.gmra.mrb[0].mxu0 %v1128
    %v1130 = vpop.f32.mrb[0].mxu0
    %v1131 = vadd.f32 %v1055, %v1130
    %v1132 = vpop.f32.mrb[0].mxu0
    %1133 = vdwg.mxu0
    %1134 = vmatprep.subr.mxu0 0.0
    %v1135 = vand.u32 %v980, 4294901760
    %v1136 = vsub.f32 %v980, %v1135
    %1137 = vmatpush1.xpose.msra.mxu0 %v1136
    %1138 = vmatprep.subr.mxu0 0.0
    %1139 = vmatpush1.xpose.msra.mxu0 0.0
    %1140 = vmatprep.subr.mxu0 0.0
    %1141 = vmatpush1.xpose.msra.mxu0 0.0
    %1142 = vmatprep.subr.mxu0 0.0
    %1143 = vmatpush1.xpose.msra.mxu0 0.0
    %1144 = vmatprep.subr.mxu0 0.0
    %1145 = vmatpush1.xpose.msra.mxu0 0.0
    %1146 = vmatprep.subr.mxu0 0.0
    %1147 = vmatpush1.xpose.msra.mxu0 0.0
    %1148 = vmatprep.subr.mxu0 0.0
    %1149 = vmatpush1.xpose.msra.mxu0 0.0
    %1150 = vmatprep.subr.mxu0 0.0
    %1151 = vmatpush1.xpose.msra.mxu0 0.0
    %1152 = vmatprep.subr.mxu0 0.0
    %1153 = vmatpush1.xpose.msra.mxu0 0.0
    %1154 = vmatprep.subr.mxu0 0.0
    %1155 = vmatpush1.xpose.msra.mxu0 0.0
    %1156 = vmatprep.subr.mxu0 0.0
    %1157 = vmatpush1.xpose.msra.mxu0 0.0
    %1158 = vmatprep.subr.mxu0 0.0
    %1159 = vmatpush1.xpose.msra.mxu0 0.0
    %1160 = vmatprep.subr.mxu0 0.0
    %1161 = vmatpush1.xpose.msra.mxu0 0.0
    %1162 = vmatprep.subr.mxu0 0.0
    %1163 = vmatpush1.xpose.msra.mxu0 0.0
    %1164 = vmatprep.subr.mxu0 0.0
    %1165 = vmatpush1.xpose.msra.mxu0 0.0
    %1166 = vmatprep.subr.mxu0 0.0
    %1167 = vmatpush1.xpose.msra.mxu0 0.0
    %1168 = vmatprep.subr.mxu0 0.0
    %1169 = vmatpush1.xpose.msra.mxu0 0.0
    %1170 = vmatprep.subr.mxu0 0.0
    %1171 = vmatpush1.xpose.msra.mxu0 0.0
    %1172 = vmatprep.subr.mxu0 0.0
    %1173 = vmatpush1.xpose.msra.mxu0 0.0
    %1174 = vmatprep.subr.mxu0 0.0
    %1175 = vmatpush1.xpose.msra.mxu0 0.0
    %1176 = vmatprep.subr.mxu0 0.0
    %1177 = vmatpush1.xpose.msra.mxu0 0.0
    %1178 = vmatprep.subr.mxu0 0.0
    %1179 = vmatpush1.xpose.msra.mxu0 0.0
    %1180 = vmatprep.subr.mxu0 0.0
    %1181 = vmatpush1.xpose.msra.mxu0 0.0
    %1182 = vmatprep.subr.mxu0 0.0
    %1183 = vmatpush1.xpose.msra.mxu0 0.0
    %1184 = vmatprep.subr.mxu0 0.0
    %1185 = vmatpush1.xpose.msra.mxu0 0.0
    %1186 = vmatprep.subr.mxu0 0.0
    %1187 = vmatpush1.xpose.msra.mxu0 0.0
    %1188 = vmatprep.subr.mxu0 0.0
    %1189 = vmatpush1.xpose.msra.mxu0 0.0
    %1190 = vmatprep.subr.mxu0 0.0
    %1191 = vmatpush1.xpose.msra.mxu0 0.0
    %1192 = vmatprep.subr.mxu0 0.0
    %1193 = vmatpush1.xpose.msra.mxu0 0.0
    %1194 = vmatprep.subr.mxu0 0.0
    %1195 = vmatpush1.xpose.msra.mxu0 0.0
    %1196 = vmatprep.subr.mxu0 0.0
    %1197 = vmatpush1.xpose.msra.mxu0 0.0
    %1198 = vmatprep.subr.mxu0 0.0
    %1199 = vmatpush1.xpose.msra.mxu0 0.0
    %1200 = vmatprep.mubr.f32.mxu0 0.0
    %v1201 = vand.u32 %v977, 4294901760
    %v1202 = vsub.f32 %v977, %v1201
    %1203 = vmatmul.mubr.f32.gmra.mrb[0].mxu0 %v1202
    %v1204 = vpop.f32.mrb[0].mxu0
    %v1205 = vadd.f32 %v1131, %v1204
    %v1206 = vpop.f32.mrb[0].mxu0
    %1207 = vdwg.mxu0
    %1208 = vmatprep.subr.mxu0 0.0
    %v1209 = vand.u32 %v980, 4294901760
    %1210 = vmatpush1.xpose.msra.mxu0 %v1209
    %1211 = vmatprep.subr.mxu0 0.0
    %1212 = vmatpush1.xpose.msra.mxu0 0.0
    %1213 = vmatprep.subr.mxu0 0.0
    %1214 = vmatpush1.xpose.msra.mxu0 0.0
    %1215 = vmatprep.subr.mxu0 0.0
    %1216 = vmatpush1.xpose.msra.mxu0 0.0
    %1217 = vmatprep.subr.mxu0 0.0
    %1218 = vmatpush1.xpose.msra.mxu0 0.0
    %1219 = vmatprep.subr.mxu0 0.0
    %1220 = vmatpush1.xpose.msra.mxu0 0.0
    %1221 = vmatprep.subr.mxu0 0.0
    %1222 = vmatpush1.xpose.msra.mxu0 0.0
    %1223 = vmatprep.subr.mxu0 0.0
    %1224 = vmatpush1.xpose.msra.mxu0 0.0
    %1225 = vmatprep.subr.mxu0 0.0
    %1226 = vmatpush1.xpose.msra.mxu0 0.0
    %1227 = vmatprep.subr.mxu0 0.0
    %1228 = vmatpush1.xpose.msra.mxu0 0.0
    %1229 = vmatprep.subr.mxu0 0.0
    %1230 = vmatpush1.xpose.msra.mxu0 0.0
    %1231 = vmatprep.subr.mxu0 0.0
    %1232 = vmatpush1.xpose.msra.mxu0 0.0
    %1233 = vmatprep.subr.mxu0 0.0
    %1234 = vmatpush1.xpose.msra.mxu0 0.0
    %1235 = vmatprep.subr.mxu0 0.0
    %1236 = vmatpush1.xpose.msra.mxu0 0.0
    %1237 = vmatprep.subr.mxu0 0.0
    %1238 = vmatpush1.xpose.msra.mxu0 0.0
    %1239 = vmatprep.subr.mxu0 0.0
    %1240 = vmatpush1.xpose.msra.mxu0 0.0
    %1241 = vmatprep.subr.mxu0 0.0
    %1242 = vmatpush1.xpose.msra.mxu0 0.0
    %1243 = vmatprep.subr.mxu0 0.0
    %1244 = vmatpush1.xpose.msra.mxu0 0.0
    %1245 = vmatprep.subr.mxu0 0.0
    %1246 = vmatpush1.xpose.msra.mxu0 0.0
    %1247 = vmatprep.subr.mxu0 0.0
    %1248 = vmatpush1.xpose.msra.mxu0 0.0
    %1249 = vmatprep.subr.mxu0 0.0
    %1250 = vmatpush1.xpose.msra.mxu0 0.0
    %1251 = vmatprep.subr.mxu0 0.0
    %1252 = vmatpush1.xpose.msra.mxu0 0.0
    %1253 = vmatprep.subr.mxu0 0.0
    %1254 = vmatpush1.xpose.msra.mxu0 0.0
    %1255 = vmatprep.subr.mxu0 0.0
    %1256 = vmatpush1.xpose.msra.mxu0 0.0
    %1257 = vmatprep.subr.mxu0 0.0
    %1258 = vmatpush1.xpose.msra.mxu0 0.0
    %1259 = vmatprep.subr.mxu0 0.0
    %1260 = vmatpush1.xpose.msra.mxu0 0.0
    %1261 = vmatprep.subr.mxu0 0.0
    %1262 = vmatpush1.xpose.msra.mxu0 0.0
    %1263 = vmatprep.subr.mxu0 0.0
    %1264 = vmatpush1.xpose.msra.mxu0 0.0
    %1265 = vmatprep.subr.mxu0 0.0
    %1266 = vmatpush1.xpose.msra.mxu0 0.0
    %1267 = vmatprep.subr.mxu0 0.0
    %1268 = vmatpush1.xpose.msra.mxu0 0.0
    %1269 = vmatprep.subr.mxu0 0.0
    %1270 = vmatpush1.xpose.msra.mxu0 0.0
    %1271 = vmatprep.subr.mxu0 0.0
    %1272 = vmatpush1.xpose.msra.mxu0 0.0
    %1273 = vmatprep.mubr.f32.mxu0 0.0
    %v1274 = vand.u32 %v977, 4294901760
    %v1275 = vsub.f32 %v977, %v1274
    %v1276 = vand.u32 %v1275, 4294901760
    %1277 = vmatmul.mubr.f32.gmra.mrb[0].mxu0 %v1276
    %v1278 = vpop.f32.mrb[0].mxu0
    %v1279 = vadd.f32 %v1205, %v1278
    %v1280 = vpop.f32.mrb[0].mxu0
    %1281 = vdwg.mxu0
    %1282 = vmatprep.subr.mxu0 0.0
    %v1283 = vand.u32 %v980, 4294901760
    %v1284 = vsub.f32 %v980, %v1283
    %v1285 = vand.u32 %v1284, 4294901760
    %1286 = vmatpush1.xpose.msra.mxu0 %v1285
    %1287 = vmatprep.subr.mxu0 0.0
    %1288 = vmatpush1.xpose.msra.mxu0 0.0
    %1289 = vmatprep.subr.mxu0 0.0
    %1290 = vmatpush1.xpose.msra.mxu0 0.0
    %1291 = vmatprep.subr.mxu0 0.0
    %1292 = vmatpush1.xpose.msra.mxu0 0.0
    %1293 = vmatprep.subr.mxu0 0.0
    %1294 = vmatpush1.xpose.msra.mxu0 0.0
    %1295 = vmatprep.subr.mxu0 0.0
    %1296 = vmatpush1.xpose.msra.mxu0 0.0
    %1297 = vmatprep.subr.mxu0 0.0
    %1298 = vmatpush1.xpose.msra.mxu0 0.0
    %1299 = vmatprep.subr.mxu0 0.0
    %1300 = vmatpush1.xpose.msra.mxu0 0.0
    %1301 = vmatprep.subr.mxu0 0.0
    %1302 = vmatpush1.xpose.msra.mxu0 0.0
    %1303 = vmatprep.subr.mxu0 0.0
    %1304 = vmatpush1.xpose.msra.mxu0 0.0
    %1305 = vmatprep.subr.mxu0 0.0
    %1306 = vmatpush1.xpose.msra.mxu0 0.0
    %1307 = vmatprep.subr.mxu0 0.0
    %1308 = vmatpush1.xpose.msra.mxu0 0.0
    %1309 = vmatprep.subr.mxu0 0.0
    %1310 = vmatpush1.xpose.msra.mxu0 0.0
    %1311 = vmatprep.subr.mxu0 0.0
    %1312 = vmatpush1.xpose.msra.mxu0 0.0
    %1313 = vmatprep.subr.mxu0 0.0
    %1314 = vmatpush1.xpose.msra.mxu0 0.0
    %1315 = vmatprep.subr.mxu0 0.0
    %1316 = vmatpush1.xpose.msra.mxu0 0.0
    %1317 = vmatprep.subr.mxu0 0.0
    %1318 = vmatpush1.xpose.msra.mxu0 0.0
    %1319 = vmatprep.subr.mxu0 0.0
    %1320 = vmatpush1.xpose.msra.mxu0 0.0
    %1321 = vmatprep.subr.mxu0 0.0
    %1322 = vmatpush1.xpose.msra.mxu0 0.0
    %1323 = vmatprep.subr.mxu0 0.0
    %1324 = vmatpush1.xpose.msra.mxu0 0.0
    %1325 = vmatprep.subr.mxu0 0.0
    %1326 = vmatpush1.xpose.msra.mxu0 0.0
    %1327 = vmatprep.subr.mxu0 0.0
    %1328 = vmatpush1.xpose.msra.mxu0 0.0
    %1329 = vmatprep.subr.mxu0 0.0
    %1330 = vmatpush1.xpose.msra.mxu0 0.0
    %1331 = vmatprep.subr.mxu0 0.0
    %1332 = vmatpush1.xpose.msra.mxu0 0.0
    %1333 = vmatprep.subr.mxu0 0.0
    %1334 = vmatpush1.xpose.msra.mxu0 0.0
    %1335 = vmatprep.subr.mxu0 0.0
    %1336 = vmatpush1.xpose.msra.mxu0 0.0
    %1337 = vmatprep.subr.mxu0 0.0
    %1338 = vmatpush1.xpose.msra.mxu0 0.0
    %1339 = vmatprep.subr.mxu0 0.0
    %1340 = vmatpush1.xpose.msra.mxu0 0.0
    %1341 = vmatprep.subr.mxu0 0.0
    %1342 = vmatpush1.xpose.msra.mxu0 0.0
    %1343 = vmatprep.subr.mxu0 0.0
    %1344 = vmatpush1.xpose.msra.mxu0 0.0
    %1345 = vmatprep.subr.mxu0 0.0
    %1346 = vmatpush1.xpose.msra.mxu0 0.0
    %1347 = vmatprep.subr.mxu0 0.0
    %1348 = vmatpush1.xpose.msra.mxu0 0.0
    %1349 = vmatprep.mubr.f32.mxu0 0.0
    %v1350 = vand.u32 %v977, 4294901760
    %1351 = vmatmul.mubr.f32.gmra.mrb[0].mxu0 %v1350
    %v1352 = vpop.f32.mrb[0].mxu0
    %v1353 = vadd.f32 %v1279, %v1352
    %v1354 = vpop.f32.mrb[0].mxu0
    %1355 = vdwg.mxu0
    %1356 = vmatprep.subr.mxu0 0.0
    %v1357 = vand.u32 %v980, 4294901760
    %1358 = vmatpush1.xpose.msra.mxu0 %v1357
    %1359 = vmatprep.subr.mxu0 0.0
    %1360 = vmatpush1.xpose.msra.mxu0 0.0
    %1361 = vmatprep.subr.mxu0 0.0
    %1362 = vmatpush1.xpose.msra.mxu0 0.0
    %1363 = vmatprep.subr.mxu0 0.0
    %1364 = vmatpush1.xpose.msra.mxu0 0.0
    %1365 = vmatprep.subr.mxu0 0.0
    %1366 = vmatpush1.xpose.msra.mxu0 0.0
    %1367 = vmatprep.subr.mxu0 0.0
    %1368 = vmatpush1.xpose.msra.mxu0 0.0
    %1369 = vmatprep.subr.mxu0 0.0
    %1370 = vmatpush1.xpose.msra.mxu0 0.0
    %1371 = vmatprep.subr.mxu0 0.0
    %1372 = vmatpush1.xpose.msra.mxu0 0.0
    %1373 = vmatprep.subr.mxu0 0.0
    %1374 = vmatpush1.xpose.msra.mxu0 0.0
    %1375 = vmatprep.subr.mxu0 0.0
    %1376 = vmatpush1.xpose.msra.mxu0 0.0
    %1377 = vmatprep.subr.mxu0 0.0
    %1378 = vmatpush1.xpose.msra.mxu0 0.0
    %1379 = vmatprep.subr.mxu0 0.0
    %1380 = vmatpush1.xpose.msra.mxu0 0.0
    %1381 = vmatprep.subr.mxu0 0.0
    %1382 = vmatpush1.xpose.msra.mxu0 0.0
    %1383 = vmatprep.subr.mxu0 0.0
    %1384 = vmatpush1.xpose.msra.mxu0 0.0
    %1385 = vmatprep.subr.mxu0 0.0
    %1386 = vmatpush1.xpose.msra.mxu0 0.0
    %1387 = vmatprep.subr.mxu0 0.0
    %1388 = vmatpush1.xpose.msra.mxu0 0.0
    %1389 = vmatprep.subr.mxu0 0.0
    %1390 = vmatpush1.xpose.msra.mxu0 0.0
    %1391 = vmatprep.subr.mxu0 0.0
    %1392 = vmatpush1.xpose.msra.mxu0 0.0
    %1393 = vmatprep.subr.mxu0 0.0
    %1394 = vmatpush1.xpose.msra.mxu0 0.0
    %1395 = vmatprep.subr.mxu0 0.0
    %1396 = vmatpush1.xpose.msra.mxu0 0.0
    %1397 = vmatprep.subr.mxu0 0.0
    %1398 = vmatpush1.xpose.msra.mxu0 0.0
    %1399 = vmatprep.subr.mxu0 0.0
    %1400 = vmatpush1.xpose.msra.mxu0 0.0
    %1401 = vmatprep.subr.mxu0 0.0
    %1402 = vmatpush1.xpose.msra.mxu0 0.0
    %1403 = vmatprep.subr.mxu0 0.0
    %1404 = vmatpush1.xpose.msra.mxu0 0.0
    %1405 = vmatprep.subr.mxu0 0.0
    %1406 = vmatpush1.xpose.msra.mxu0 0.0
    %1407 = vmatprep.subr.mxu0 0.0
    %1408 = vmatpush1.xpose.msra.mxu0 0.0
    %1409 = vmatprep.subr.mxu0 0.0
    %1410 = vmatpush1.xpose.msra.mxu0 0.0
    %1411 = vmatprep.subr.mxu0 0.0
    %1412 = vmatpush1.xpose.msra.mxu0 0.0
    %1413 = vmatprep.subr.mxu0 0.0
    %1414 = vmatpush1.xpose.msra.mxu0 0.0
    %1415 = vmatprep.subr.mxu0 0.0
    %1416 = vmatpush1.xpose.msra.mxu0 0.0
    %1417 = vmatprep.subr.mxu0 0.0
    %1418 = vmatpush1.xpose.msra.mxu0 0.0
    %1419 = vmatprep.subr.mxu0 0.0
    %1420 = vmatpush1.xpose.msra.mxu0 0.0
    %1421 = vmatprep.mubr.f32.mxu0 0.0
    %v1422 = vand.u32 %v977, 4294901760
    %1423 = vmatmul.mubr.f32.gmra.mrb[0].mxu0 %v1422
    %v1424 = vpop.f32.mrb[0].mxu0
    %v1425 = vadd.f32 %v1353, %v1424
    %v1426 = vpop.f32.mrb[0].mxu0
    %1427 = vdwg.mxu0
    %v1429 = vsel %vm71, %v62, 0
    %v1432 = vsel %vm71, %v66, 0
    %1434 = vmatprep.subr.mxu0 0.0
    %v1435 = vand.u32 %v1432, 4294901760
    %1436 = vmatpush1.xpose.msra.mxu0 %v1435
    %1437 = vmatprep.subr.mxu0 0.0
    %1438 = vmatpush1.xpose.msra.mxu0 0.0
    %1439 = vmatprep.subr.mxu0 0.0
    %1440 = vmatpush1.xpose.msra.mxu0 0.0
    %1441 = vmatprep.subr.mxu0 0.0
    %1442 = vmatpush1.xpose.msra.mxu0 0.0
    %1443 = vmatprep.subr.mxu0 0.0
    %1444 = vmatpush1.xpose.msra.mxu0 0.0
    %1445 = vmatprep.subr.mxu0 0.0
    %1446 = vmatpush1.xpose.msra.mxu0 0.0
    %1447 = vmatprep.subr.mxu0 0.0
    %1448 = vmatpush1.xpose.msra.mxu0 0.0
    %1449 = vmatprep.subr.mxu0 0.0
    %1450 = vmatpush1.xpose.msra.mxu0 0.0
    %1451 = vmatprep.subr.mxu0 0.0
    %1452 = vmatpush1.xpose.msra.mxu0 0.0
    %1453 = vmatprep.subr.mxu0 0.0
    %1454 = vmatpush1.xpose.msra.mxu0 0.0
    %1455 = vmatprep.subr.mxu0 0.0
    %1456 = vmatpush1.xpose.msra.mxu0 0.0
    %1457 = vmatprep.subr.mxu0 0.0
    %1458 = vmatpush1.xpose.msra.mxu0 0.0
    %1459 = vmatprep.subr.mxu0 0.0
    %1460 = vmatpush1.xpose.msra.mxu0 0.0
    %1461 = vmatprep.subr.mxu0 0.0
    %1462 = vmatpush1.xpose.msra.mxu0 0.0
    %1463 = vmatprep.subr.mxu0 0.0
    %1464 = vmatpush1.xpose.msra.mxu0 0.0
    %1465 = vmatprep.subr.mxu0 0.0
    %1466 = vmatpush1.xpose.msra.mxu0 0.0
    %1467 = vmatprep.subr.mxu0 0.0
    %1468 = vmatpush1.xpose.msra.mxu0 0.0
    %1469 = vmatprep.subr.mxu0 0.0
    %1470 = vmatpush1.xpose.msra.mxu0 0.0
    %1471 = vmatprep.subr.mxu0 0.0
    %1472 = vmatpush1.xpose.msra.mxu0 0.0
    %1473 = vmatprep.subr.mxu0 0.0
    %1474 = vmatpush1.xpose.msra.mxu0 0.0
    %1475 = vmatprep.subr.mxu0 0.0
    %1476 = vmatpush1.xpose.msra.mxu0 0.0
    %1477 = vmatprep.subr.mxu0 0.0
    %1478 = vmatpush1.xpose.msra.mxu0 0.0
    %1479 = vmatprep.subr.mxu0 0.0
    %1480 = vmatpush1.xpose.msra.mxu0 0.0
    %1481 = vmatprep.subr.mxu0 0.0
    %1482 = vmatpush1.xpose.msra.mxu0 0.0
    %1483 = vmatprep.subr.mxu0 0.0
    %1484 = vmatpush1.xpose.msra.mxu0 0.0
    %1485 = vmatprep.subr.mxu0 0.0
    %1486 = vmatpush1.xpose.msra.mxu0 0.0
    %1487 = vmatprep.subr.mxu0 0.0
    %1488 = vmatpush1.xpose.msra.mxu0 0.0
    %1489 = vmatprep.subr.mxu0 0.0
    %1490 = vmatpush1.xpose.msra.mxu0 0.0
    %1491 = vmatprep.subr.mxu0 0.0
    %1492 = vmatpush1.xpose.msra.mxu0 0.0
    %1493 = vmatprep.subr.mxu0 0.0
    %1494 = vmatpush1.xpose.msra.mxu0 0.0
    %1495 = vmatprep.subr.mxu0 0.0
    %1496 = vmatpush1.xpose.msra.mxu0 0.0
    %1497 = vmatprep.subr.mxu0 0.0
    %1498 = vmatpush1.xpose.msra.mxu0 0.0
    %1499 = vmatprep.mubr.f32.mxu0 0.0
    %v1500 = vand.u32 %v1429, 4294901760
    %v1501 = vsub.f32 %v1429, %v1500
    %v1502 = vand.u32 %v1501, 4294901760
    %v1503 = vsub.f32 %v1501, %v1502
    %v1504 = vand.u32 %v1503, 4294901760
    %1505 = vmatmul.mubr.f32.gmra.mrb[0].mxu0 %v1504
    %v1506 = vpop.f32.mrb[0].mxu0
    %v1507 = vadd.f32 0.0, %v1506
    %v1508 = vpop.f32.mrb[0].mxu0
    %1509 = vdwg.mxu0
    %1510 = vmatprep.subr.mxu0 0.0
    %v1511 = vand.u32 %v1432, 4294901760
    %v1512 = vsub.f32 %v1432, %v1511
    %v1513 = vand.u32 %v1512, 4294901760
    %v1514 = vsub.f32 %v1512, %v1513
    %v1515 = vand.u32 %v1514, 4294901760
    %1516 = vmatpush1.xpose.msra.mxu0 %v1515
    %1517 = vmatprep.subr.mxu0 0.0
    %1518 = vmatpush1.xpose.msra.mxu0 0.0
    %1519 = vmatprep.subr.mxu0 0.0
    %1520 = vmatpush1.xpose.msra.mxu0 0.0
    %1521 = vmatprep.subr.mxu0 0.0
    %1522 = vmatpush1.xpose.msra.mxu0 0.0
    %1523 = vmatprep.subr.mxu0 0.0
    %1524 = vmatpush1.xpose.msra.mxu0 0.0
    %1525 = vmatprep.subr.mxu0 0.0
    %1526 = vmatpush1.xpose.msra.mxu0 0.0
    %1527 = vmatprep.subr.mxu0 0.0
    %1528 = vmatpush1.xpose.msra.mxu0 0.0
    %1529 = vmatprep.subr.mxu0 0.0
    %1530 = vmatpush1.xpose.msra.mxu0 0.0
    %1531 = vmatprep.subr.mxu0 0.0
    %1532 = vmatpush1.xpose.msra.mxu0 0.0
    %1533 = vmatprep.subr.mxu0 0.0
    %1534 = vmatpush1.xpose.msra.mxu0 0.0
    %1535 = vmatprep.subr.mxu0 0.0
    %1536 = vmatpush1.xpose.msra.mxu0 0.0
    %1537 = vmatprep.subr.mxu0 0.0
    %1538 = vmatpush1.xpose.msra.mxu0 0.0
    %1539 = vmatprep.subr.mxu0 0.0
    %1540 = vmatpush1.xpose.msra.mxu0 0.0
    %1541 = vmatprep.subr.mxu0 0.0
    %1542 = vmatpush1.xpose.msra.mxu0 0.0
    %1543 = vmatprep.subr.mxu0 0.0
    %1544 = vmatpush1.xpose.msra.mxu0 0.0
    %1545 = vmatprep.subr.mxu0 0.0
    %1546 = vmatpush1.xpose.msra.mxu0 0.0
    %1547 = vmatprep.subr.mxu0 0.0
    %1548 = vmatpush1.xpose.msra.mxu0 0.0
    %1549 = vmatprep.subr.mxu0 0.0
    %1550 = vmatpush1.xpose.msra.mxu0 0.0
    %1551 = vmatprep.subr.mxu0 0.0
    %1552 = vmatpush1.xpose.msra.mxu0 0.0
    %1553 = vmatprep.subr.mxu0 0.0
    %1554 = vmatpush1.xpose.msra.mxu0 0.0
    %1555 = vmatprep.subr.mxu0 0.0
    %1556 = vmatpush1.xpose.msra.mxu0 0.0
    %1557 = vmatprep.subr.mxu0 0.0
    %1558 = vmatpush1.xpose.msra.mxu0 0.0
    %1559 = vmatprep.subr.mxu0 0.0
    %1560 = vmatpush1.xpose.msra.mxu0 0.0
    %1561 = vmatprep.subr.mxu0 0.0
    %1562 = vmatpush1.xpose.msra.mxu0 0.0
    %1563 = vmatprep.subr.mxu0 0.0
    %1564 = vmatpush1.xpose.msra.mxu0 0.0
    %1565 = vmatprep.subr.mxu0 0.0
    %1566 = vmatpush1.xpose.msra.mxu0 0.0
    %1567 = vmatprep.subr.mxu0 0.0
    %1568 = vmatpush1.xpose.msra.mxu0 0.0
    %1569 = vmatprep.subr.mxu0 0.0
    %1570 = vmatpush1.xpose.msra.mxu0 0.0
    %1571 = vmatprep.subr.mxu0 0.0
    %1572 = vmatpush1.xpose.msra.mxu0 0.0
    %1573 = vmatprep.subr.mxu0 0.0
    %1574 = vmatpush1.xpose.msra.mxu0 0.0
    %1575 = vmatprep.subr.mxu0 0.0
    %1576 = vmatpush1.xpose.msra.mxu0 0.0
    %1577 = vmatprep.subr.mxu0 0.0
    %1578 = vmatpush1.xpose.msra.mxu0 0.0
    %1579 = vmatprep.mubr.f32.mxu0 0.0
    %v1580 = vand.u32 %v1429, 4294901760
    %1581 = vmatmul.mubr.f32.gmra.mrb[0].mxu0 %v1580
    %v1582 = vpop.f32.mrb[0].mxu0
    %v1583 = vadd.f32 %v1507, %v1582
    %v1584 = vpop.f32.mrb[0].mxu0
    %1585 = vdwg.mxu0
    %1586 = vmatprep.subr.mxu0 0.0
    %v1587 = vand.u32 %v1432, 4294901760
    %v1588 = vsub.f32 %v1432, %v1587
    %1589 = vmatpush1.xpose.msra.mxu0 %v1588
    %1590 = vmatprep.subr.mxu0 0.0
    %1591 = vmatpush1.xpose.msra.mxu0 0.0
    %1592 = vmatprep.subr.mxu0 0.0
    %1593 = vmatpush1.xpose.msra.mxu0 0.0
    %1594 = vmatprep.subr.mxu0 0.0
    %1595 = vmatpush1.xpose.msra.mxu0 0.0
    %1596 = vmatprep.subr.mxu0 0.0
    %1597 = vmatpush1.xpose.msra.mxu0 0.0
    %1598 = vmatprep.subr.mxu0 0.0
    %1599 = vmatpush1.xpose.msra.mxu0 0.0
    %1600 = vmatprep.subr.mxu0 0.0
    %1601 = vmatpush1.xpose.msra.mxu0 0.0
    %1602 = vmatprep.subr.mxu0 0.0
    %1603 = vmatpush1.xpose.msra.mxu0 0.0
    %1604 = vmatprep.subr.mxu0 0.0
    %1605 = vmatpush1.xpose.msra.mxu0 0.0
    %1606 = vmatprep.subr.mxu0 0.0
    %1607 = vmatpush1.xpose.msra.mxu0 0.0
    %1608 = vmatprep.subr.mxu0 0.0
    %1609 = vmatpush1.xpose.msra.mxu0 0.0
    %1610 = vmatprep.subr.mxu0 0.0
    %1611 = vmatpush1.xpose.msra.mxu0 0.0
    %1612 = vmatprep.subr.mxu0 0.0
    %1613 = vmatpush1.xpose.msra.mxu0 0.0
    %1614 = vmatprep.subr.mxu0 0.0
    %1615 = vmatpush1.xpose.msra.mxu0 0.0
    %1616 = vmatprep.subr.mxu0 0.0
    %1617 = vmatpush1.xpose.msra.mxu0 0.0
    %1618 = vmatprep.subr.mxu0 0.0
    %1619 = vmatpush1.xpose.msra.mxu0 0.0
    %1620 = vmatprep.subr.mxu0 0.0
    %1621 = vmatpush1.xpose.msra.mxu0 0.0
    %1622 = vmatprep.subr.mxu0 0.0
    %1623 = vmatpush1.xpose.msra.mxu0 0.0
    %1624 = vmatprep.subr.mxu0 0.0
    %1625 = vmatpush1.xpose.msra.mxu0 0.0
    %1626 = vmatprep.subr.mxu0 0.0
    %1627 = vmatpush1.xpose.msra.mxu0 0.0
    %1628 = vmatprep.subr.mxu0 0.0
    %1629 = vmatpush1.xpose.msra.mxu0 0.0
    %1630 = vmatprep.subr.mxu0 0.0
    %1631 = vmatpush1.xpose.msra.mxu0 0.0
    %1632 = vmatprep.subr.mxu0 0.0
    %1633 = vmatpush1.xpose.msra.mxu0 0.0
    %1634 = vmatprep.subr.mxu0 0.0
    %1635 = vmatpush1.xpose.msra.mxu0 0.0
    %1636 = vmatprep.subr.mxu0 0.0
    %1637 = vmatpush1.xpose.msra.mxu0 0.0
    %1638 = vmatprep.subr.mxu0 0.0
    %1639 = vmatpush1.xpose.msra.mxu0 0.0
    %1640 = vmatprep.subr.mxu0 0.0
    %1641 = vmatpush1.xpose.msra.mxu0 0.0
    %1642 = vmatprep.subr.mxu0 0.0
    %1643 = vmatpush1.xpose.msra.mxu0 0.0
    %1644 = vmatprep.subr.mxu0 0.0
    %1645 = vmatpush1.xpose.msra.mxu0 0.0
    %1646 = vmatprep.subr.mxu0 0.0
    %1647 = vmatpush1.xpose.msra.mxu0 0.0
    %1648 = vmatprep.subr.mxu0 0.0
    %1649 = vmatpush1.xpose.msra.mxu0 0.0
    %1650 = vmatprep.subr.mxu0 0.0
    %1651 = vmatpush1.xpose.msra.mxu0 0.0
    %1652 = vmatprep.mubr.f32.mxu0 0.0
    %v1653 = vand.u32 %v1429, 4294901760
    %v1654 = vsub.f32 %v1429, %v1653
    %1655 = vmatmul.mubr.f32.gmra.mrb[0].mxu0 %v1654
    %v1656 = vpop.f32.mrb[0].mxu0
    %v1657 = vadd.f32 %v1583, %v1656
    %v1658 = vpop.f32.mrb[0].mxu0
    %1659 = vdwg.mxu0
    %1660 = vmatprep.subr.mxu0 0.0
    %v1661 = vand.u32 %v1432, 4294901760
    %1662 = vmatpush1.xpose.msra.mxu0 %v1661
    %1663 = vmatprep.subr.mxu0 0.0
    %1664 = vmatpush1.xpose.msra.mxu0 0.0
    %1665 = vmatprep.subr.mxu0 0.0
    %1666 = vmatpush1.xpose.msra.mxu0 0.0
    %1667 = vmatprep.subr.mxu0 0.0
    %1668 = vmatpush1.xpose.msra.mxu0 0.0
    %1669 = vmatprep.subr.mxu0 0.0
    %1670 = vmatpush1.xpose.msra.mxu0 0.0
    %1671 = vmatprep.subr.mxu0 0.0
    %1672 = vmatpush1.xpose.msra.mxu0 0.0
    %1673 = vmatprep.subr.mxu0 0.0
    %1674 = vmatpush1.xpose.msra.mxu0 0.0
    %1675 = vmatprep.subr.mxu0 0.0
    %1676 = vmatpush1.xpose.msra.mxu0 0.0
    %1677 = vmatprep.subr.mxu0 0.0
    %1678 = vmatpush1.xpose.msra.mxu0 0.0
    %1679 = vmatprep.subr.mxu0 0.0
    %1680 = vmatpush1.xpose.msra.mxu0 0.0
    %1681 = vmatprep.subr.mxu0 0.0
    %1682 = vmatpush1.xpose.msra.mxu0 0.0
    %1683 = vmatprep.subr.mxu0 0.0
    %1684 = vmatpush1.xpose.msra.mxu0 0.0
    %1685 = vmatprep.subr.mxu0 0.0
    %1686 = vmatpush1.xpose.msra.mxu0 0.0
    %1687 = vmatprep.subr.mxu0 0.0
    %1688 = vmatpush1.xpose.msra.mxu0 0.0
    %1689 = vmatprep.subr.mxu0 0.0
    %1690 = vmatpush1.xpose.msra.mxu0 0.0
    %1691 = vmatprep.subr.mxu0 0.0
    %1692 = vmatpush1.xpose.msra.mxu0 0.0
    %1693 = vmatprep.subr.mxu0 0.0
    %1694 = vmatpush1.xpose.msra.mxu0 0.0
    %1695 = vmatprep.subr.mxu0 0.0
    %1696 = vmatpush1.xpose.msra.mxu0 0.0
    %1697 = vmatprep.subr.mxu0 0.0
    %1698 = vmatpush1.xpose.msra.mxu0 0.0
    %1699 = vmatprep.subr.mxu0 0.0
    %1700 = vmatpush1.xpose.msra.mxu0 0.0
    %1701 = vmatprep.subr.mxu0 0.0
    %1702 = vmatpush1.xpose.msra.mxu0 0.0
    %1703 = vmatprep.subr.mxu0 0.0
    %1704 = vmatpush1.xpose.msra.mxu0 0.0
    %1705 = vmatprep.subr.mxu0 0.0
    %1706 = vmatpush1.xpose.msra.mxu0 0.0
    %1707 = vmatprep.subr.mxu0 0.0
    %1708 = vmatpush1.xpose.msra.mxu0 0.0
    %1709 = vmatprep.subr.mxu0 0.0
    %1710 = vmatpush1.xpose.msra.mxu0 0.0
    %1711 = vmatprep.subr.mxu0 0.0
    %1712 = vmatpush1.xpose.msra.mxu0 0.0
    %1713 = vmatprep.subr.mxu0 0.0
    %1714 = vmatpush1.xpose.msra.mxu0 0.0
    %1715 = vmatprep.subr.mxu0 0.0
    %1716 = vmatpush1.xpose.msra.mxu0 0.0
    %1717 = vmatprep.subr.mxu0 0.0
    %1718 = vmatpush1.xpose.msra.mxu0 0.0
    %1719 = vmatprep.subr.mxu0 0.0
    %1720 = vmatpush1.xpose.msra.mxu0 0.0
    %1721 = vmatprep.subr.mxu0 0.0
    %1722 = vmatpush1.xpose.msra.mxu0 0.0
    %1723 = vmatprep.subr.mxu0 0.0
    %1724 = vmatpush1.xpose.msra.mxu0 0.0
    %1725 = vmatprep.mubr.f32.mxu0 0.0
    %v1726 = vand.u32 %v1429, 4294901760
    %v1727 = vsub.f32 %v1429, %v1726
    %v1728 = vand.u32 %v1727, 4294901760
    %1729 = vmatmul.mubr.f32.gmra.mrb[0].mxu0 %v1728
    %v1730 = vpop.f32.mrb[0].mxu0
    %v1731 = vadd.f32 %v1657, %v1730
    %v1732 = vpop.f32.mrb[0].mxu0
    %1733 = vdwg.mxu0
    %1734 = vmatprep.subr.mxu0 0.0
    %v1735 = vand.u32 %v1432, 4294901760
    %v1736 = vsub.f32 %v1432, %v1735
    %v1737 = vand.u32 %v1736, 4294901760
    %1738 = vmatpush1.xpose.msra.mxu0 %v1737
    %1739 = vmatprep.subr.mxu0 0.0
    %1740 = vmatpush1.xpose.msra.mxu0 0.0
    %1741 = vmatprep.subr.mxu0 0.0
    %1742 = vmatpush1.xpose.msra.mxu0 0.0
    %1743 = vmatprep.subr.mxu0 0.0
    %1744 = vmatpush1.xpose.msra.mxu0 0.0
    %1745 = vmatprep.subr.mxu0 0.0
    %1746 = vmatpush1.xpose.msra.mxu0 0.0
    %1747 = vmatprep.subr.mxu0 0.0
    %1748 = vmatpush1.xpose.msra.mxu0 0.0
    %1749 = vmatprep.subr.mxu0 0.0
    %1750 = vmatpush1.xpose.msra.mxu0 0.0
    %1751 = vmatprep.subr.mxu0 0.0
    %1752 = vmatpush1.xpose.msra.mxu0 0.0
    %1753 = vmatprep.subr.mxu0 0.0
    %1754 = vmatpush1.xpose.msra.mxu0 0.0
    %1755 = vmatprep.subr.mxu0 0.0
    %1756 = vmatpush1.xpose.msra.mxu0 0.0
    %1757 = vmatprep.subr.mxu0 0.0
    %1758 = vmatpush1.xpose.msra.mxu0 0.0
    %1759 = vmatprep.subr.mxu0 0.0
    %1760 = vmatpush1.xpose.msra.mxu0 0.0
    %1761 = vmatprep.subr.mxu0 0.0
    %1762 = vmatpush1.xpose.msra.mxu0 0.0
    %1763 = vmatprep.subr.mxu0 0.0
    %1764 = vmatpush1.xpose.msra.mxu0 0.0
    %1765 = vmatprep.subr.mxu0 0.0
    %1766 = vmatpush1.xpose.msra.mxu0 0.0
    %1767 = vmatprep.subr.mxu0 0.0
    %1768 = vmatpush1.xpose.msra.mxu0 0.0
    %1769 = vmatprep.subr.mxu0 0.0
    %1770 = vmatpush1.xpose.msra.mxu0 0.0
    %1771 = vmatprep.subr.mxu0 0.0
    %1772 = vmatpush1.xpose.msra.mxu0 0.0
    %1773 = vmatprep.subr.mxu0 0.0
    %1774 = vmatpush1.xpose.msra.mxu0 0.0
    %1775 = vmatprep.subr.mxu0 0.0
    %1776 = vmatpush1.xpose.msra.mxu0 0.0
    %1777 = vmatprep.subr.mxu0 0.0
    %1778 = vmatpush1.xpose.msra.mxu0 0.0
    %1779 = vmatprep.subr.mxu0 0.0
    %1780 = vmatpush1.xpose.msra.mxu0 0.0
    %1781 = vmatprep.subr.mxu0 0.0
    %1782 = vmatpush1.xpose.msra.mxu0 0.0
    %1783 = vmatprep.subr.mxu0 0.0
    %1784 = vmatpush1.xpose.msra.mxu0 0.0
    %1785 = vmatprep.subr.mxu0 0.0
    %1786 = vmatpush1.xpose.msra.mxu0 0.0
    %1787 = vmatprep.subr.mxu0 0.0
    %1788 = vmatpush1.xpose.msra.mxu0 0.0
    %1789 = vmatprep.subr.mxu0 0.0
    %1790 = vmatpush1.xpose.msra.mxu0 0.0
    %1791 = vmatprep.subr.mxu0 0.0
    %1792 = vmatpush1.xpose.msra.mxu0 0.0
    %1793 = vmatprep.subr.mxu0 0.0
    %1794 = vmatpush1.xpose.msra.mxu0 0.0
    %1795 = vmatprep.subr.mxu0 0.0
    %1796 = vmatpush1.xpose.msra.mxu0 0.0
    %1797 = vmatprep.subr.mxu0 0.0
    %1798 = vmatpush1.xpose.msra.mxu0 0.0
    %1799 = vmatprep.subr.mxu0 0.0
    %1800 = vmatpush1.xpose.msra.mxu0 0.0
    %1801 = vmatprep.mubr.f32.mxu0 0.0
    %v1802 = vand.u32 %v1429, 4294901760
    %1803 = vmatmul.mubr.f32.gmra.mrb[0].mxu0 %v1802
    %v1804 = vpop.f32.mrb[0].mxu0
    %v1805 = vadd.f32 %v1731, %v1804
    %v1806 = vpop.f32.mrb[0].mxu0
    %1807 = vdwg.mxu0
    %1808 = vmatprep.subr.mxu0 0.0
    %v1809 = vand.u32 %v1432, 4294901760
    %1810 = vmatpush1.xpose.msra.mxu0 %v1809
    %1811 = vmatprep.subr.mxu0 0.0
    %1812 = vmatpush1.xpose.msra.mxu0 0.0
    %1813 = vmatprep.subr.mxu0 0.0
    %1814 = vmatpush1.xpose.msra.mxu0 0.0
    %1815 = vmatprep.subr.mxu0 0.0
    %1816 = vmatpush1.xpose.msra.mxu0 0.0
    %1817 = vmatprep.subr.mxu0 0.0
    %1818 = vmatpush1.xpose.msra.mxu0 0.0
    %1819 = vmatprep.subr.mxu0 0.0
    %1820 = vmatpush1.xpose.msra.mxu0 0.0
    %1821 = vmatprep.subr.mxu0 0.0
    %1822 = vmatpush1.xpose.msra.mxu0 0.0
    %1823 = vmatprep.subr.mxu0 0.0
    %1824 = vmatpush1.xpose.msra.mxu0 0.0
    %1825 = vmatprep.subr.mxu0 0.0
    %1826 = vmatpush1.xpose.msra.mxu0 0.0
    %1827 = vmatprep.subr.mxu0 0.0
    %1828 = vmatpush1.xpose.msra.mxu0 0.0
    %1829 = vmatprep.subr.mxu0 0.0
    %1830 = vmatpush1.xpose.msra.mxu0 0.0
    %1831 = vmatprep.subr.mxu0 0.0
    %1832 = vmatpush1.xpose.msra.mxu0 0.0
    %1833 = vmatprep.subr.mxu0 0.0
    %1834 = vmatpush1.xpose.msra.mxu0 0.0
    %1835 = vmatprep.subr.mxu0 0.0
    %1836 = vmatpush1.xpose.msra.mxu0 0.0
    %1837 = vmatprep.subr.mxu0 0.0
    %1838 = vmatpush1.xpose.msra.mxu0 0.0
    %1839 = vmatprep.subr.mxu0 0.0
    %1840 = vmatpush1.xpose.msra.mxu0 0.0
    %1841 = vmatprep.subr.mxu0 0.0
    %1842 = vmatpush1.xpose.msra.mxu0 0.0
    %1843 = vmatprep.subr.mxu0 0.0
    %1844 = vmatpush1.xpose.msra.mxu0 0.0
    %1845 = vmatprep.subr.mxu0 0.0
    %1846 = vmatpush1.xpose.msra.mxu0 0.0
    %1847 = vmatprep.subr.mxu0 0.0
    %1848 = vmatpush1.xpose.msra.mxu0 0.0
    %1849 = vmatprep.subr.mxu0 0.0
    %1850 = vmatpush1.xpose.msra.mxu0 0.0
    %1851 = vmatprep.subr.mxu0 0.0
    %1852 = vmatpush1.xpose.msra.mxu0 0.0
    %1853 = vmatprep.subr.mxu0 0.0
    %1854 = vmatpush1.xpose.msra.mxu0 0.0
    %1855 = vmatprep.subr.mxu0 0.0
    %1856 = vmatpush1.xpose.msra.mxu0 0.0
    %1857 = vmatprep.subr.mxu0 0.0
    %1858 = vmatpush1.xpose.msra.mxu0 0.0
    %1859 = vmatprep.subr.mxu0 0.0
    %1860 = vmatpush1.xpose.msra.mxu0 0.0
    %1861 = vmatprep.subr.mxu0 0.0
    %1862 = vmatpush1.xpose.msra.mxu0 0.0
    %1863 = vmatprep.subr.mxu0 0.0
    %1864 = vmatpush1.xpose.msra.mxu0 0.0
    %1865 = vmatprep.subr.mxu0 0.0
    %1866 = vmatpush1.xpose.msra.mxu0 0.0
    %1867 = vmatprep.subr.mxu0 0.0
    %1868 = vmatpush1.xpose.msra.mxu0 0.0
    %1869 = vmatprep.subr.mxu0 0.0
    %1870 = vmatpush1.xpose.msra.mxu0 0.0
    %1871 = vmatprep.subr.mxu0 0.0
    %1872 = vmatpush1.xpose.msra.mxu0 0.0
    %1873 = vmatprep.mubr.f32.mxu0 0.0
    %v1874 = vand.u32 %v1429, 4294901760
    %1875 = vmatmul.mubr.f32.gmra.mrb[0].mxu0 %v1874
    %v1876 = vpop.f32.mrb[0].mxu0
    %v1877 = vadd.f32 %v1805, %v1876
    %v1878 = vpop.f32.mrb[0].mxu0
    %1879 = vdwg.mxu0
    %v1880 = vmul.f32 %v521, 1.442695
    %v1881 = vpow.pop %v1880
    %v1882 = vmul.f32 %v973, 1.442695
    %v1883 = vpow.pop %v1882
    %v1884 = vmul.f32 %v1425, 1.442695
    %v1885 = vpow.pop %v1884
    %v1886 = vmul.f32 %v1877, 1.442695
    %v1887 = vpow.pop %v1886
    %v1888 = vld [vmem:[%s3] sm:$0x1]
    %v1889 = vld [vmem:[%s3 + $0x1] sm:$0x1]
    %v1890 = vld [vmem:[%s3 + $0x2] sm:$0x1]
    %v1891 = vld [vmem:[%s3 + $0x3] sm:$0x1]
    %v1896 = vlaneseq
    %v1897 = vshrl.u32 %v1896, 7
    %v1898 = vsub.s32 0, %v1897
    %v1899 = vrot.slane %v1888, %v1898
    %v1900 = vlaneseq
    %v1901 = vshrl.u32 %v1900, 7
    %v1902 = vsub.s32 0, %v1901
    %v1903 = vrot.slane %v1889, %v1902
    %v1904 = vlaneseq
    %v1905 = vshrl.u32 %v1904, 7
    %v1906 = vsub.s32 0, %v1905
    %v1907 = vrot.slane %v1890, %v1906
    %v1908 = vlaneseq
    %v1909 = vshrl.u32 %v1908, 7
    %v1910 = vsub.s32 0, %v1909
    %v1911 = vrot.slane %v1891, %v1910
    %v1916 = vmul.f32 %v1881, %v1899
    %v1917 = vmul.f32 %v1883, %v1903
    %v1918 = vmul.f32 %v1885, %v1907
    %v1919 = vmul.f32 %v1887, %v1911
    %vm1920 = vcmask 64512
    %v1921 = vsel %vm1920, %v1916, 0.0
    %1922 = vadd.xlane.f32.xlu0 %v1921
    %v1923 = vpop.xlane.xlu0 %1922
    %v1924 = vsel %vm1920, %v1917, 0.0
    %1925 = vadd.xlane.f32.xlu0 %v1924
    %v1926 = vpop.xlane.xlu0 %1925
    %v1927 = vsel %vm1920, %v1918, 0.0
    %1928 = vadd.xlane.f32.xlu0 %v1927
    %v1929 = vpop.xlane.xlu0 %1928
    %v1930 = vsel %vm1920, %v1919, 0.0
    %1931 = vadd.xlane.f32.xlu0 %v1930
    %v1932 = vpop.xlane.xlu0 %1931
    %v1933 = vadd.f32 %v1923, 1e-08
    %v1934 = vadd.f32 %v1926, 1e-08
    %v1935 = vadd.f32 %v1929, 1e-08
    %v1936 = vadd.f32 %v1932, 1e-08
    %v1937 = vrcp.pop %v1933
    %v1938 = vrcp.pop %v1934
    %v1939 = vrcp.pop %v1935
    %v1940 = vrcp.pop %v1936
    %v1941 = vmul.f32 %v1916, %v1937
    %v1942 = vmul.f32 %v1917, %v1938
    %v1943 = vmul.f32 %v1918, %v1939
    %v1944 = vmul.f32 %v1919, %v1940
    %v1946 = vsel %vm1920, %v1941, 0
    %1948 = vmatprep.subr.mxu0 0.0
    %v1949 = vand.u32 %v67, 4294901760
    %1950 = vmatpush1.msra.mxu0 %v1949
    %1951 = vmatprep.subr.mxu0 0.0
    %1952 = vmatpush1.msra.mxu0 0.0
    %1953 = vmatprep.subr.mxu0 0.0
    %1954 = vmatpush1.msra.mxu0 0.0
    %1955 = vmatprep.subr.mxu0 0.0
    %1956 = vmatpush1.msra.mxu0 0.0
    %1957 = vmatprep.subr.mxu0 0.0
    %1958 = vmatpush1.msra.mxu0 0.0
    %1959 = vmatprep.subr.mxu0 0.0
    %1960 = vmatpush1.msra.mxu0 0.0
    %1961 = vmatprep.subr.mxu0 0.0
    %1962 = vmatpush1.msra.mxu0 0.0
    %1963 = vmatprep.subr.mxu0 0.0
    %1964 = vmatpush1.msra.mxu0 0.0
    %1965 = vmatprep.subr.mxu0 0.0
    %1966 = vmatpush1.msra.mxu0 0.0
    %1967 = vmatprep.subr.mxu0 0.0
    %1968 = vmatpush1.msra.mxu0 0.0
    %1969 = vmatprep.subr.mxu0 0.0
    %1970 = vmatpush1.msra.mxu0 0.0
    %1971 = vmatprep.subr.mxu0 0.0
    %1972 = vmatpush1.msra.mxu0 0.0
    %1973 = vmatprep.subr.mxu0 0.0
    %1974 = vmatpush1.msra.mxu0 0.0
    %1975 = vmatprep.subr.mxu0 0.0
    %1976 = vmatpush1.msra.mxu0 0.0
    %1977 = vmatprep.subr.mxu0 0.0
    %1978 = vmatpush1.msra.mxu0 0.0
    %1979 = vmatprep.subr.mxu0 0.0
    %1980 = vmatpush1.msra.mxu0 0.0
    %1981 = vmatprep.subr.mxu0 0.0
    %1982 = vmatpush1.msra.mxu0 0.0
    %1983 = vmatprep.subr.mxu0 0.0
    %1984 = vmatpush1.msra.mxu0 0.0
    %1985 = vmatprep.subr.mxu0 0.0
    %1986 = vmatpush1.msra.mxu0 0.0
    %1987 = vmatprep.subr.mxu0 0.0
    %1988 = vmatpush1.msra.mxu0 0.0
    %1989 = vmatprep.subr.mxu0 0.0
    %1990 = vmatpush1.msra.mxu0 0.0
    %1991 = vmatprep.subr.mxu0 0.0
    %1992 = vmatpush1.msra.mxu0 0.0
    %1993 = vmatprep.subr.mxu0 0.0
    %1994 = vmatpush1.msra.mxu0 0.0
    %1995 = vmatprep.subr.mxu0 0.0
    %1996 = vmatpush1.msra.mxu0 0.0
    %1997 = vmatprep.subr.mxu0 0.0
    %1998 = vmatpush1.msra.mxu0 0.0
    %1999 = vmatprep.subr.mxu0 0.0
    %2000 = vmatpush1.msra.mxu0 0.0
    %2001 = vmatprep.subr.mxu0 0.0
    %2002 = vmatpush1.msra.mxu0 0.0
    %2003 = vmatprep.subr.mxu0 0.0
    %2004 = vmatpush1.msra.mxu0 0.0
    %2005 = vmatprep.subr.mxu0 0.0
    %2006 = vmatpush1.msra.mxu0 0.0
    %2007 = vmatprep.subr.mxu0 0.0
    %2008 = vmatpush1.msra.mxu0 0.0
    %2009 = vmatprep.subr.mxu0 0.0
    %2010 = vmatpush1.msra.mxu0 0.0
    %2011 = vmatprep.subr.mxu0 0.0
    %2012 = vmatpush1.msra.mxu0 0.0
    %2013 = vmatprep.mubr.f32.mxu0 0.0
    %v2014 = vand.u32 %v1946, 4294901760
    %v2015 = vsub.f32 %v1946, %v2014
    %v2016 = vand.u32 %v2015, 4294901760
    %v2017 = vsub.f32 %v2015, %v2016
    %v2018 = vand.u32 %v2017, 4294901760
    %2019 = vmatmul.mubr.f32.gmra.mrb[0].mxu0 %v2018
    %v2020 = vpop.f32.mrb[0].mxu0
    %v2021 = vadd.f32 0.0, %v2020
    %v2022 = vpop.f32.mrb[0].mxu0
    %2023 = vdwg.mxu0
    %2024 = vmatprep.subr.mxu0 0.0
    %v2025 = vand.u32 %v67, 4294901760
    %v2026 = vsub.f32 %v67, %v2025
    %v2027 = vand.u32 %v2026, 4294901760
    %v2028 = vsub.f32 %v2026, %v2027
    %v2029 = vand.u32 %v2028, 4294901760
    %2030 = vmatpush1.msra.mxu0 %v2029
    %2031 = vmatprep.subr.mxu0 0.0
    %2032 = vmatpush1.msra.mxu0 0.0
    %2033 = vmatprep.subr.mxu0 0.0
    %2034 = vmatpush1.msra.mxu0 0.0
    %2035 = vmatprep.subr.mxu0 0.0
    %2036 = vmatpush1.msra.mxu0 0.0
    %2037 = vmatprep.subr.mxu0 0.0
    %2038 = vmatpush1.msra.mxu0 0.0
    %2039 = vmatprep.subr.mxu0 0.0
    %2040 = vmatpush1.msra.mxu0 0.0
    %2041 = vmatprep.subr.mxu0 0.0
    %2042 = vmatpush1.msra.mxu0 0.0
    %2043 = vmatprep.subr.mxu0 0.0
    %2044 = vmatpush1.msra.mxu0 0.0
    %2045 = vmatprep.subr.mxu0 0.0
    %2046 = vmatpush1.msra.mxu0 0.0
    %2047 = vmatprep.subr.mxu0 0.0
    %2048 = vmatpush1.msra.mxu0 0.0
    %2049 = vmatprep.subr.mxu0 0.0
    %2050 = vmatpush1.msra.mxu0 0.0
    %2051 = vmatprep.subr.mxu0 0.0
    %2052 = vmatpush1.msra.mxu0 0.0
    %2053 = vmatprep.subr.mxu0 0.0
    %2054 = vmatpush1.msra.mxu0 0.0
    %2055 = vmatprep.subr.mxu0 0.0
    %2056 = vmatpush1.msra.mxu0 0.0
    %2057 = vmatprep.subr.mxu0 0.0
    %2058 = vmatpush1.msra.mxu0 0.0
    %2059 = vmatprep.subr.mxu0 0.0
    %2060 = vmatpush1.msra.mxu0 0.0
    %2061 = vmatprep.subr.mxu0 0.0
    %2062 = vmatpush1.msra.mxu0 0.0
    %2063 = vmatprep.subr.mxu0 0.0
    %2064 = vmatpush1.msra.mxu0 0.0
    %2065 = vmatprep.subr.mxu0 0.0
    %2066 = vmatpush1.msra.mxu0 0.0
    %2067 = vmatprep.subr.mxu0 0.0
    %2068 = vmatpush1.msra.mxu0 0.0
    %2069 = vmatprep.subr.mxu0 0.0
    %2070 = vmatpush1.msra.mxu0 0.0
    %2071 = vmatprep.subr.mxu0 0.0
    %2072 = vmatpush1.msra.mxu0 0.0
    %2073 = vmatprep.subr.mxu0 0.0
    %2074 = vmatpush1.msra.mxu0 0.0
    %2075 = vmatprep.subr.mxu0 0.0
    %2076 = vmatpush1.msra.mxu0 0.0
    %2077 = vmatprep.subr.mxu0 0.0
    %2078 = vmatpush1.msra.mxu0 0.0
    %2079 = vmatprep.subr.mxu0 0.0
    %2080 = vmatpush1.msra.mxu0 0.0
    %2081 = vmatprep.subr.mxu0 0.0
    %2082 = vmatpush1.msra.mxu0 0.0
    %2083 = vmatprep.subr.mxu0 0.0
    %2084 = vmatpush1.msra.mxu0 0.0
    %2085 = vmatprep.subr.mxu0 0.0
    %2086 = vmatpush1.msra.mxu0 0.0
    %2087 = vmatprep.subr.mxu0 0.0
    %2088 = vmatpush1.msra.mxu0 0.0
    %2089 = vmatprep.subr.mxu0 0.0
    %2090 = vmatpush1.msra.mxu0 0.0
    %2091 = vmatprep.subr.mxu0 0.0
    %2092 = vmatpush1.msra.mxu0 0.0
    %2093 = vmatprep.mubr.f32.mxu0 0.0
    %v2094 = vand.u32 %v1946, 4294901760
    %2095 = vmatmul.mubr.f32.gmra.mrb[0].mxu0 %v2094
    %v2096 = vpop.f32.mrb[0].mxu0
    %v2097 = vadd.f32 %v2021, %v2096
    %v2098 = vpop.f32.mrb[0].mxu0
    %2099 = vdwg.mxu0
    %2100 = vmatprep.subr.mxu0 0.0
    %v2101 = vand.u32 %v67, 4294901760
    %v2102 = vsub.f32 %v67, %v2101
    %2103 = vmatpush1.msra.mxu0 %v2102
    %2104 = vmatprep.subr.mxu0 0.0
    %2105 = vmatpush1.msra.mxu0 0.0
    %2106 = vmatprep.subr.mxu0 0.0
    %2107 = vmatpush1.msra.mxu0 0.0
    %2108 = vmatprep.subr.mxu0 0.0
    %2109 = vmatpush1.msra.mxu0 0.0
    %2110 = vmatprep.subr.mxu0 0.0
    %2111 = vmatpush1.msra.mxu0 0.0
    %2112 = vmatprep.subr.mxu0 0.0
    %2113 = vmatpush1.msra.mxu0 0.0
    %2114 = vmatprep.subr.mxu0 0.0
    %2115 = vmatpush1.msra.mxu0 0.0
    %2116 = vmatprep.subr.mxu0 0.0
    %2117 = vmatpush1.msra.mxu0 0.0
    %2118 = vmatprep.subr.mxu0 0.0
    %2119 = vmatpush1.msra.mxu0 0.0
    %2120 = vmatprep.subr.mxu0 0.0
    %2121 = vmatpush1.msra.mxu0 0.0
    %2122 = vmatprep.subr.mxu0 0.0
    %2123 = vmatpush1.msra.mxu0 0.0
    %2124 = vmatprep.subr.mxu0 0.0
    %2125 = vmatpush1.msra.mxu0 0.0
    %2126 = vmatprep.subr.mxu0 0.0
    %2127 = vmatpush1.msra.mxu0 0.0
    %2128 = vmatprep.subr.mxu0 0.0
    %2129 = vmatpush1.msra.mxu0 0.0
    %2130 = vmatprep.subr.mxu0 0.0
    %2131 = vmatpush1.msra.mxu0 0.0
    %2132 = vmatprep.subr.mxu0 0.0
    %2133 = vmatpush1.msra.mxu0 0.0
    %2134 = vmatprep.subr.mxu0 0.0
    %2135 = vmatpush1.msra.mxu0 0.0
    %2136 = vmatprep.subr.mxu0 0.0
    %2137 = vmatpush1.msra.mxu0 0.0
    %2138 = vmatprep.subr.mxu0 0.0
    %2139 = vmatpush1.msra.mxu0 0.0
    %2140 = vmatprep.subr.mxu0 0.0
    %2141 = vmatpush1.msra.mxu0 0.0
    %2142 = vmatprep.subr.mxu0 0.0
    %2143 = vmatpush1.msra.mxu0 0.0
    %2144 = vmatprep.subr.mxu0 0.0
    %2145 = vmatpush1.msra.mxu0 0.0
    %2146 = vmatprep.subr.mxu0 0.0
    %2147 = vmatpush1.msra.mxu0 0.0
    %2148 = vmatprep.subr.mxu0 0.0
    %2149 = vmatpush1.msra.mxu0 0.0
    %2150 = vmatprep.subr.mxu0 0.0
    %2151 = vmatpush1.msra.mxu0 0.0
    %2152 = vmatprep.subr.mxu0 0.0
    %2153 = vmatpush1.msra.mxu0 0.0
    %2154 = vmatprep.subr.mxu0 0.0
    %2155 = vmatpush1.msra.mxu0 0.0
    %2156 = vmatprep.subr.mxu0 0.0
    %2157 = vmatpush1.msra.mxu0 0.0
    %2158 = vmatprep.subr.mxu0 0.0
    %2159 = vmatpush1.msra.mxu0 0.0
    %2160 = vmatprep.subr.mxu0 0.0
    %2161 = vmatpush1.msra.mxu0 0.0
    %2162 = vmatprep.subr.mxu0 0.0
    %2163 = vmatpush1.msra.mxu0 0.0
    %2164 = vmatprep.subr.mxu0 0.0
    %2165 = vmatpush1.msra.mxu0 0.0
    %2166 = vmatprep.mubr.f32.mxu0 0.0
    %v2167 = vand.u32 %v1946, 4294901760
    %v2168 = vsub.f32 %v1946, %v2167
    %2169 = vmatmul.mubr.f32.gmra.mrb[0].mxu0 %v2168
    %v2170 = vpop.f32.mrb[0].mxu0
    %v2171 = vadd.f32 %v2097, %v2170
    %v2172 = vpop.f32.mrb[0].mxu0
    %2173 = vdwg.mxu0
    %2174 = vmatprep.subr.mxu0 0.0
    %v2175 = vand.u32 %v67, 4294901760
    %2176 = vmatpush1.msra.mxu0 %v2175
    %2177 = vmatprep.subr.mxu0 0.0
    %2178 = vmatpush1.msra.mxu0 0.0
    %2179 = vmatprep.subr.mxu0 0.0
    %2180 = vmatpush1.msra.mxu0 0.0
    %2181 = vmatprep.subr.mxu0 0.0
    %2182 = vmatpush1.msra.mxu0 0.0
    %2183 = vmatprep.subr.mxu0 0.0
    %2184 = vmatpush1.msra.mxu0 0.0
    %2185 = vmatprep.subr.mxu0 0.0
    %2186 = vmatpush1.msra.mxu0 0.0
    %2187 = vmatprep.subr.mxu0 0.0
    %2188 = vmatpush1.msra.mxu0 0.0
    %2189 = vmatprep.subr.mxu0 0.0
    %2190 = vmatpush1.msra.mxu0 0.0
    %2191 = vmatprep.subr.mxu0 0.0
    %2192 = vmatpush1.msra.mxu0 0.0
    %2193 = vmatprep.subr.mxu0 0.0
    %2194 = vmatpush1.msra.mxu0 0.0
    %2195 = vmatprep.subr.mxu0 0.0
    %2196 = vmatpush1.msra.mxu0 0.0
    %2197 = vmatprep.subr.mxu0 0.0
    %2198 = vmatpush1.msra.mxu0 0.0
    %2199 = vmatprep.subr.mxu0 0.0
    %2200 = vmatpush1.msra.mxu0 0.0
    %2201 = vmatprep.subr.mxu0 0.0
    %2202 = vmatpush1.msra.mxu0 0.0
    %2203 = vmatprep.subr.mxu0 0.0
    %2204 = vmatpush1.msra.mxu0 0.0
    %2205 = vmatprep.subr.mxu0 0.0
    %2206 = vmatpush1.msra.mxu0 0.0
    %2207 = vmatprep.subr.mxu0 0.0
    %2208 = vmatpush1.msra.mxu0 0.0
    %2209 = vmatprep.subr.mxu0 0.0
    %2210 = vmatpush1.msra.mxu0 0.0
    %2211 = vmatprep.subr.mxu0 0.0
    %2212 = vmatpush1.msra.mxu0 0.0
    %2213 = vmatprep.subr.mxu0 0.0
    %2214 = vmatpush1.msra.mxu0 0.0
    %2215 = vmatprep.subr.mxu0 0.0
    %2216 = vmatpush1.msra.mxu0 0.0
    %2217 = vmatprep.subr.mxu0 0.0
    %2218 = vmatpush1.msra.mxu0 0.0
    %2219 = vmatprep.subr.mxu0 0.0
    %2220 = vmatpush1.msra.mxu0 0.0
    %2221 = vmatprep.subr.mxu0 0.0
    %2222 = vmatpush1.msra.mxu0 0.0
    %2223 = vmatprep.subr.mxu0 0.0
    %2224 = vmatpush1.msra.mxu0 0.0
    %2225 = vmatprep.subr.mxu0 0.0
    %2226 = vmatpush1.msra.mxu0 0.0
    %2227 = vmatprep.subr.mxu0 0.0
    %2228 = vmatpush1.msra.mxu0 0.0
    %2229 = vmatprep.subr.mxu0 0.0
    %2230 = vmatpush1.msra.mxu0 0.0
    %2231 = vmatprep.subr.mxu0 0.0
    %2232 = vmatpush1.msra.mxu0 0.0
    %2233 = vmatprep.subr.mxu0 0.0
    %2234 = vmatpush1.msra.mxu0 0.0
    %2235 = vmatprep.subr.mxu0 0.0
    %2236 = vmatpush1.msra.mxu0 0.0
    %2237 = vmatprep.subr.mxu0 0.0
    %2238 = vmatpush1.msra.mxu0 0.0
    %2239 = vmatprep.mubr.f32.mxu0 0.0
    %v2240 = vand.u32 %v1946, 4294901760
    %v2241 = vsub.f32 %v1946, %v2240
    %v2242 = vand.u32 %v2241, 4294901760
    %2243 = vmatmul.mubr.f32.gmra.mrb[0].mxu0 %v2242
    %v2244 = vpop.f32.mrb[0].mxu0
    %v2245 = vadd.f32 %v2171, %v2244
    %v2246 = vpop.f32.mrb[0].mxu0
    %2247 = vdwg.mxu0
    %2248 = vmatprep.subr.mxu0 0.0
    %v2249 = vand.u32 %v67, 4294901760
    %v2250 = vsub.f32 %v67, %v2249
    %v2251 = vand.u32 %v2250, 4294901760
    %2252 = vmatpush1.msra.mxu0 %v2251
    %2253 = vmatprep.subr.mxu0 0.0
    %2254 = vmatpush1.msra.mxu0 0.0
    %2255 = vmatprep.subr.mxu0 0.0
    %2256 = vmatpush1.msra.mxu0 0.0
    %2257 = vmatprep.subr.mxu0 0.0
    %2258 = vmatpush1.msra.mxu0 0.0
    %2259 = vmatprep.subr.mxu0 0.0
    %2260 = vmatpush1.msra.mxu0 0.0
    %2261 = vmatprep.subr.mxu0 0.0
    %2262 = vmatpush1.msra.mxu0 0.0
    %2263 = vmatprep.subr.mxu0 0.0
    %2264 = vmatpush1.msra.mxu0 0.0
    %2265 = vmatprep.subr.mxu0 0.0
    %2266 = vmatpush1.msra.mxu0 0.0
    %2267 = vmatprep.subr.mxu0 0.0
    %2268 = vmatpush1.msra.mxu0 0.0
    %2269 = vmatprep.subr.mxu0 0.0
    %2270 = vmatpush1.msra.mxu0 0.0
    %2271 = vmatprep.subr.mxu0 0.0
    %2272 = vmatpush1.msra.mxu0 0.0
    %2273 = vmatprep.subr.mxu0 0.0
    %2274 = vmatpush1.msra.mxu0 0.0
    %2275 = vmatprep.subr.mxu0 0.0
    %2276 = vmatpush1.msra.mxu0 0.0
    %2277 = vmatprep.subr.mxu0 0.0
    %2278 = vmatpush1.msra.mxu0 0.0
    %2279 = vmatprep.subr.mxu0 0.0
    %2280 = vmatpush1.msra.mxu0 0.0
    %2281 = vmatprep.subr.mxu0 0.0
    %2282 = vmatpush1.msra.mxu0 0.0
    %2283 = vmatprep.subr.mxu0 0.0
    %2284 = vmatpush1.msra.mxu0 0.0
    %2285 = vmatprep.subr.mxu0 0.0
    %2286 = vmatpush1.msra.mxu0 0.0
    %2287 = vmatprep.subr.mxu0 0.0
    %2288 = vmatpush1.msra.mxu0 0.0
    %2289 = vmatprep.subr.mxu0 0.0
    %2290 = vmatpush1.msra.mxu0 0.0
    %2291 = vmatprep.subr.mxu0 0.0
    %2292 = vmatpush1.msra.mxu0 0.0
    %2293 = vmatprep.subr.mxu0 0.0
    %2294 = vmatpush1.msra.mxu0 0.0
    %2295 = vmatprep.subr.mxu0 0.0
    %2296 = vmatpush1.msra.mxu0 0.0
    %2297 = vmatprep.subr.mxu0 0.0
    %2298 = vmatpush1.msra.mxu0 0.0
    %2299 = vmatprep.subr.mxu0 0.0
    %2300 = vmatpush1.msra.mxu0 0.0
    %2301 = vmatprep.subr.mxu0 0.0
    %2302 = vmatpush1.msra.mxu0 0.0
    %2303 = vmatprep.subr.mxu0 0.0
    %2304 = vmatpush1.msra.mxu0 0.0
    %2305 = vmatprep.subr.mxu0 0.0
    %2306 = vmatpush1.msra.mxu0 0.0
    %2307 = vmatprep.subr.mxu0 0.0
    %2308 = vmatpush1.msra.mxu0 0.0
    %2309 = vmatprep.subr.mxu0 0.0
    %2310 = vmatpush1.msra.mxu0 0.0
    %2311 = vmatprep.subr.mxu0 0.0
    %2312 = vmatpush1.msra.mxu0 0.0
    %2313 = vmatprep.subr.mxu0 0.0
    %2314 = vmatpush1.msra.mxu0 0.0
    %2315 = vmatprep.mubr.f32.mxu0 0.0
    %v2316 = vand.u32 %v1946, 4294901760
    %2317 = vmatmul.mubr.f32.gmra.mrb[0].mxu0 %v2316
    %v2318 = vpop.f32.mrb[0].mxu0
    %v2319 = vadd.f32 %v2245, %v2318
    %v2320 = vpop.f32.mrb[0].mxu0
    %2321 = vdwg.mxu0
    %2322 = vmatprep.subr.mxu0 0.0
    %v2323 = vand.u32 %v67, 4294901760
    %2324 = vmatpush1.msra.mxu0 %v2323
    %2325 = vmatprep.subr.mxu0 0.0
    %2326 = vmatpush1.msra.mxu0 0.0
    %2327 = vmatprep.subr.mxu0 0.0
    %2328 = vmatpush1.msra.mxu0 0.0
    %2329 = vmatprep.subr.mxu0 0.0
    %2330 = vmatpush1.msra.mxu0 0.0
    %2331 = vmatprep.subr.mxu0 0.0
    %2332 = vmatpush1.msra.mxu0 0.0
    %2333 = vmatprep.subr.mxu0 0.0
    %2334 = vmatpush1.msra.mxu0 0.0
    %2335 = vmatprep.subr.mxu0 0.0
    %2336 = vmatpush1.msra.mxu0 0.0
    %2337 = vmatprep.subr.mxu0 0.0
    %2338 = vmatpush1.msra.mxu0 0.0
    %2339 = vmatprep.subr.mxu0 0.0
    %2340 = vmatpush1.msra.mxu0 0.0
    %2341 = vmatprep.subr.mxu0 0.0
    %2342 = vmatpush1.msra.mxu0 0.0
    %2343 = vmatprep.subr.mxu0 0.0
    %2344 = vmatpush1.msra.mxu0 0.0
    %2345 = vmatprep.subr.mxu0 0.0
    %2346 = vmatpush1.msra.mxu0 0.0
    %2347 = vmatprep.subr.mxu0 0.0
    %2348 = vmatpush1.msra.mxu0 0.0
    %2349 = vmatprep.subr.mxu0 0.0
    %2350 = vmatpush1.msra.mxu0 0.0
    %2351 = vmatprep.subr.mxu0 0.0
    %2352 = vmatpush1.msra.mxu0 0.0
    %2353 = vmatprep.subr.mxu0 0.0
    %2354 = vmatpush1.msra.mxu0 0.0
    %2355 = vmatprep.subr.mxu0 0.0
    %2356 = vmatpush1.msra.mxu0 0.0
    %2357 = vmatprep.subr.mxu0 0.0
    %2358 = vmatpush1.msra.mxu0 0.0
    %2359 = vmatprep.subr.mxu0 0.0
    %2360 = vmatpush1.msra.mxu0 0.0
    %2361 = vmatprep.subr.mxu0 0.0
    %2362 = vmatpush1.msra.mxu0 0.0
    %2363 = vmatprep.subr.mxu0 0.0
    %2364 = vmatpush1.msra.mxu0 0.0
    %2365 = vmatprep.subr.mxu0 0.0
    %2366 = vmatpush1.msra.mxu0 0.0
    %2367 = vmatprep.subr.mxu0 0.0
    %2368 = vmatpush1.msra.mxu0 0.0
    %2369 = vmatprep.subr.mxu0 0.0
    %2370 = vmatpush1.msra.mxu0 0.0
    %2371 = vmatprep.subr.mxu0 0.0
    %2372 = vmatpush1.msra.mxu0 0.0
    %2373 = vmatprep.subr.mxu0 0.0
    %2374 = vmatpush1.msra.mxu0 0.0
    %2375 = vmatprep.subr.mxu0 0.0
    %2376 = vmatpush1.msra.mxu0 0.0
    %2377 = vmatprep.subr.mxu0 0.0
    %2378 = vmatpush1.msra.mxu0 0.0
    %2379 = vmatprep.subr.mxu0 0.0
    %2380 = vmatpush1.msra.mxu0 0.0
    %2381 = vmatprep.subr.mxu0 0.0
    %2382 = vmatpush1.msra.mxu0 0.0
    %2383 = vmatprep.subr.mxu0 0.0
    %2384 = vmatpush1.msra.mxu0 0.0
    %2385 = vmatprep.subr.mxu0 0.0
    %2386 = vmatpush1.msra.mxu0 0.0
    %2387 = vmatprep.mubr.f32.mxu0 0.0
    %v2388 = vand.u32 %v1946, 4294901760
    %2389 = vmatmul.mubr.f32.gmra.mrb[0].mxu0 %v2388
    %v2390 = vpop.f32.mrb[0].mxu0
    %v2391 = vadd.f32 %v2319, %v2390
    %v2392 = vpop.f32.mrb[0].mxu0
    %2393 = vdwg.mxu0
    %v2395 = vsel %vm1920, %v1942, 0
    %2397 = vmatprep.subr.mxu0 0.0
    %v2398 = vand.u32 %v68, 4294901760
    %2399 = vmatpush1.msra.mxu0 %v2398
    %2400 = vmatprep.subr.mxu0 0.0
    %2401 = vmatpush1.msra.mxu0 0.0
    %2402 = vmatprep.subr.mxu0 0.0
    %2403 = vmatpush1.msra.mxu0 0.0
    %2404 = vmatprep.subr.mxu0 0.0
    %2405 = vmatpush1.msra.mxu0 0.0
    %2406 = vmatprep.subr.mxu0 0.0
    %2407 = vmatpush1.msra.mxu0 0.0
    %2408 = vmatprep.subr.mxu0 0.0
    %2409 = vmatpush1.msra.mxu0 0.0
    %2410 = vmatprep.subr.mxu0 0.0
    %2411 = vmatpush1.msra.mxu0 0.0
    %2412 = vmatprep.subr.mxu0 0.0
    %2413 = vmatpush1.msra.mxu0 0.0
    %2414 = vmatprep.subr.mxu0 0.0
    %2415 = vmatpush1.msra.mxu0 0.0
    %2416 = vmatprep.subr.mxu0 0.0
    %2417 = vmatpush1.msra.mxu0 0.0
    %2418 = vmatprep.subr.mxu0 0.0
    %2419 = vmatpush1.msra.mxu0 0.0
    %2420 = vmatprep.subr.mxu0 0.0
    %2421 = vmatpush1.msra.mxu0 0.0
    %2422 = vmatprep.subr.mxu0 0.0
    %2423 = vmatpush1.msra.mxu0 0.0
    %2424 = vmatprep.subr.mxu0 0.0
    %2425 = vmatpush1.msra.mxu0 0.0
    %2426 = vmatprep.subr.mxu0 0.0
    %2427 = vmatpush1.msra.mxu0 0.0
    %2428 = vmatprep.subr.mxu0 0.0
    %2429 = vmatpush1.msra.mxu0 0.0
    %2430 = vmatprep.subr.mxu0 0.0
    %2431 = vmatpush1.msra.mxu0 0.0
    %2432 = vmatprep.subr.mxu0 0.0
    %2433 = vmatpush1.msra.mxu0 0.0
    %2434 = vmatprep.subr.mxu0 0.0
    %2435 = vmatpush1.msra.mxu0 0.0
    %2436 = vmatprep.subr.mxu0 0.0
    %2437 = vmatpush1.msra.mxu0 0.0
    %2438 = vmatprep.subr.mxu0 0.0
    %2439 = vmatpush1.msra.mxu0 0.0
    %2440 = vmatprep.subr.mxu0 0.0
    %2441 = vmatpush1.msra.mxu0 0.0
    %2442 = vmatprep.subr.mxu0 0.0
    %2443 = vmatpush1.msra.mxu0 0.0
    %2444 = vmatprep.subr.mxu0 0.0
    %2445 = vmatpush1.msra.mxu0 0.0
    %2446 = vmatprep.subr.mxu0 0.0
    %2447 = vmatpush1.msra.mxu0 0.0
    %2448 = vmatprep.subr.mxu0 0.0
    %2449 = vmatpush1.msra.mxu0 0.0
    %2450 = vmatprep.subr.mxu0 0.0
    %2451 = vmatpush1.msra.mxu0 0.0
    %2452 = vmatprep.subr.mxu0 0.0
    %2453 = vmatpush1.msra.mxu0 0.0
    %2454 = vmatprep.subr.mxu0 0.0
    %2455 = vmatpush1.msra.mxu0 0.0
    %2456 = vmatprep.subr.mxu0 0.0
    %2457 = vmatpush1.msra.mxu0 0.0
    %2458 = vmatprep.subr.mxu0 0.0
    %2459 = vmatpush1.msra.mxu0 0.0
    %2460 = vmatprep.subr.mxu0 0.0
    %2461 = vmatpush1.msra.mxu0 0.0
    %2462 = vmatprep.mubr.f32.mxu0 0.0
    %v2463 = vand.u32 %v2395, 4294901760
    %v2464 = vsub.f32 %v2395, %v2463
    %v2465 = vand.u32 %v2464, 4294901760
    %v2466 = vsub.f32 %v2464, %v2465
    %v2467 = vand.u32 %v2466, 4294901760
    %2468 = vmatmul.mubr.f32.gmra.mrb[0].mxu0 %v2467
    %v2469 = vpop.f32.mrb[0].mxu0
    %v2470 = vadd.f32 0.0, %v2469
    %v2471 = vpop.f32.mrb[0].mxu0
    %2472 = vdwg.mxu0
    %2473 = vmatprep.subr.mxu0 0.0
    %v2474 = vand.u32 %v68, 4294901760
    %v2475 = vsub.f32 %v68, %v2474
    %v2476 = vand.u32 %v2475, 4294901760
    %v2477 = vsub.f32 %v2475, %v2476
    %v2478 = vand.u32 %v2477, 4294901760
    %2479 = vmatpush1.msra.mxu0 %v2478
    %2480 = vmatprep.subr.mxu0 0.0
    %2481 = vmatpush1.msra.mxu0 0.0
    %2482 = vmatprep.subr.mxu0 0.0
    %2483 = vmatpush1.msra.mxu0 0.0
    %2484 = vmatprep.subr.mxu0 0.0
    %2485 = vmatpush1.msra.mxu0 0.0
    %2486 = vmatprep.subr.mxu0 0.0
    %2487 = vmatpush1.msra.mxu0 0.0
    %2488 = vmatprep.subr.mxu0 0.0
    %2489 = vmatpush1.msra.mxu0 0.0
    %2490 = vmatprep.subr.mxu0 0.0
    %2491 = vmatpush1.msra.mxu0 0.0
    %2492 = vmatprep.subr.mxu0 0.0
    %2493 = vmatpush1.msra.mxu0 0.0
    %2494 = vmatprep.subr.mxu0 0.0
    %2495 = vmatpush1.msra.mxu0 0.0
    %2496 = vmatprep.subr.mxu0 0.0
    %2497 = vmatpush1.msra.mxu0 0.0
    %2498 = vmatprep.subr.mxu0 0.0
    %2499 = vmatpush1.msra.mxu0 0.0
    %2500 = vmatprep.subr.mxu0 0.0
    %2501 = vmatpush1.msra.mxu0 0.0
    %2502 = vmatprep.subr.mxu0 0.0
    %2503 = vmatpush1.msra.mxu0 0.0
    %2504 = vmatprep.subr.mxu0 0.0
    %2505 = vmatpush1.msra.mxu0 0.0
    %2506 = vmatprep.subr.mxu0 0.0
    %2507 = vmatpush1.msra.mxu0 0.0
    %2508 = vmatprep.subr.mxu0 0.0
    %2509 = vmatpush1.msra.mxu0 0.0
    %2510 = vmatprep.subr.mxu0 0.0
    %2511 = vmatpush1.msra.mxu0 0.0
    %2512 = vmatprep.subr.mxu0 0.0
    %2513 = vmatpush1.msra.mxu0 0.0
    %2514 = vmatprep.subr.mxu0 0.0
    %2515 = vmatpush1.msra.mxu0 0.0
    %2516 = vmatprep.subr.mxu0 0.0
    %2517 = vmatpush1.msra.mxu0 0.0
    %2518 = vmatprep.subr.mxu0 0.0
    %2519 = vmatpush1.msra.mxu0 0.0
    %2520 = vmatprep.subr.mxu0 0.0
    %2521 = vmatpush1.msra.mxu0 0.0
    %2522 = vmatprep.subr.mxu0 0.0
    %2523 = vmatpush1.msra.mxu0 0.0
    %2524 = vmatprep.subr.mxu0 0.0
    %2525 = vmatpush1.msra.mxu0 0.0
    %2526 = vmatprep.subr.mxu0 0.0
    %2527 = vmatpush1.msra.mxu0 0.0
    %2528 = vmatprep.subr.mxu0 0.0
    %2529 = vmatpush1.msra.mxu0 0.0
    %2530 = vmatprep.subr.mxu0 0.0
    %2531 = vmatpush1.msra.mxu0 0.0
    %2532 = vmatprep.subr.mxu0 0.0
    %2533 = vmatpush1.msra.mxu0 0.0
    %2534 = vmatprep.subr.mxu0 0.0
    %2535 = vmatpush1.msra.mxu0 0.0
    %2536 = vmatprep.subr.mxu0 0.0
    %2537 = vmatpush1.msra.mxu0 0.0
    %2538 = vmatprep.subr.mxu0 0.0
    %2539 = vmatpush1.msra.mxu0 0.0
    %2540 = vmatprep.subr.mxu0 0.0
    %2541 = vmatpush1.msra.mxu0 0.0
    %2542 = vmatprep.mubr.f32.mxu0 0.0
    %v2543 = vand.u32 %v2395, 4294901760
    %2544 = vmatmul.mubr.f32.gmra.mrb[0].mxu0 %v2543
    %v2545 = vpop.f32.mrb[0].mxu0
    %v2546 = vadd.f32 %v2470, %v2545
    %v2547 = vpop.f32.mrb[0].mxu0
    %2548 = vdwg.mxu0
    %2549 = vmatprep.subr.mxu0 0.0
    %v2550 = vand.u32 %v68, 4294901760
    %v2551 = vsub.f32 %v68, %v2550
    %2552 = vmatpush1.msra.mxu0 %v2551
    %2553 = vmatprep.subr.mxu0 0.0
    %2554 = vmatpush1.msra.mxu0 0.0
    %2555 = vmatprep.subr.mxu0 0.0
    %2556 = vmatpush1.msra.mxu0 0.0
    %2557 = vmatprep.subr.mxu0 0.0
    %2558 = vmatpush1.msra.mxu0 0.0
    %2559 = vmatprep.subr.mxu0 0.0
    %2560 = vmatpush1.msra.mxu0 0.0
    %2561 = vmatprep.subr.mxu0 0.0
    %2562 = vmatpush1.msra.mxu0 0.0
    %2563 = vmatprep.subr.mxu0 0.0
    %2564 = vmatpush1.msra.mxu0 0.0
    %2565 = vmatprep.subr.mxu0 0.0
    %2566 = vmatpush1.msra.mxu0 0.0
    %2567 = vmatprep.subr.mxu0 0.0
    %2568 = vmatpush1.msra.mxu0 0.0
    %2569 = vmatprep.subr.mxu0 0.0
    %2570 = vmatpush1.msra.mxu0 0.0
    %2571 = vmatprep.subr.mxu0 0.0
    %2572 = vmatpush1.msra.mxu0 0.0
    %2573 = vmatprep.subr.mxu0 0.0
    %2574 = vmatpush1.msra.mxu0 0.0
    %2575 = vmatprep.subr.mxu0 0.0
    %2576 = vmatpush1.msra.mxu0 0.0
    %2577 = vmatprep.subr.mxu0 0.0
    %2578 = vmatpush1.msra.mxu0 0.0
    %2579 = vmatprep.subr.mxu0 0.0
    %2580 = vmatpush1.msra.mxu0 0.0
    %2581 = vmatprep.subr.mxu0 0.0
    %2582 = vmatpush1.msra.mxu0 0.0
    %2583 = vmatprep.subr.mxu0 0.0
    %2584 = vmatpush1.msra.mxu0 0.0
    %2585 = vmatprep.subr.mxu0 0.0
    %2586 = vmatpush1.msra.mxu0 0.0
    %2587 = vmatprep.subr.mxu0 0.0
    %2588 = vmatpush1.msra.mxu0 0.0
    %2589 = vmatprep.subr.mxu0 0.0
    %2590 = vmatpush1.msra.mxu0 0.0
    %2591 = vmatprep.subr.mxu0 0.0
    %2592 = vmatpush1.msra.mxu0 0.0
    %2593 = vmatprep.subr.mxu0 0.0
    %2594 = vmatpush1.msra.mxu0 0.0
    %2595 = vmatprep.subr.mxu0 0.0
    %2596 = vmatpush1.msra.mxu0 0.0
    %2597 = vmatprep.subr.mxu0 0.0
    %2598 = vmatpush1.msra.mxu0 0.0
    %2599 = vmatprep.subr.mxu0 0.0
    %2600 = vmatpush1.msra.mxu0 0.0
    %2601 = vmatprep.subr.mxu0 0.0
    %2602 = vmatpush1.msra.mxu0 0.0
    %2603 = vmatprep.subr.mxu0 0.0
    %2604 = vmatpush1.msra.mxu0 0.0
    %2605 = vmatprep.subr.mxu0 0.0
    %2606 = vmatpush1.msra.mxu0 0.0
    %2607 = vmatprep.subr.mxu0 0.0
    %2608 = vmatpush1.msra.mxu0 0.0
    %2609 = vmatprep.subr.mxu0 0.0
    %2610 = vmatpush1.msra.mxu0 0.0
    %2611 = vmatprep.subr.mxu0 0.0
    %2612 = vmatpush1.msra.mxu0 0.0
    %2613 = vmatprep.subr.mxu0 0.0
    %2614 = vmatpush1.msra.mxu0 0.0
    %2615 = vmatprep.mubr.f32.mxu0 0.0
    %v2616 = vand.u32 %v2395, 4294901760
    %v2617 = vsub.f32 %v2395, %v2616
    %2618 = vmatmul.mubr.f32.gmra.mrb[0].mxu0 %v2617
    %v2619 = vpop.f32.mrb[0].mxu0
    %v2620 = vadd.f32 %v2546, %v2619
    %v2621 = vpop.f32.mrb[0].mxu0
    %2622 = vdwg.mxu0
    %2623 = vmatprep.subr.mxu0 0.0
    %v2624 = vand.u32 %v68, 4294901760
    %2625 = vmatpush1.msra.mxu0 %v2624
    %2626 = vmatprep.subr.mxu0 0.0
    %2627 = vmatpush1.msra.mxu0 0.0
    %2628 = vmatprep.subr.mxu0 0.0
    %2629 = vmatpush1.msra.mxu0 0.0
    %2630 = vmatprep.subr.mxu0 0.0
    %2631 = vmatpush1.msra.mxu0 0.0
    %2632 = vmatprep.subr.mxu0 0.0
    %2633 = vmatpush1.msra.mxu0 0.0
    %2634 = vmatprep.subr.mxu0 0.0
    %2635 = vmatpush1.msra.mxu0 0.0
    %2636 = vmatprep.subr.mxu0 0.0
    %2637 = vmatpush1.msra.mxu0 0.0
    %2638 = vmatprep.subr.mxu0 0.0
    %2639 = vmatpush1.msra.mxu0 0.0
    %2640 = vmatprep.subr.mxu0 0.0
    %2641 = vmatpush1.msra.mxu0 0.0
    %2642 = vmatprep.subr.mxu0 0.0
    %2643 = vmatpush1.msra.mxu0 0.0
    %2644 = vmatprep.subr.mxu0 0.0
    %2645 = vmatpush1.msra.mxu0 0.0
    %2646 = vmatprep.subr.mxu0 0.0
    %2647 = vmatpush1.msra.mxu0 0.0
    %2648 = vmatprep.subr.mxu0 0.0
    %2649 = vmatpush1.msra.mxu0 0.0
    %2650 = vmatprep.subr.mxu0 0.0
    %2651 = vmatpush1.msra.mxu0 0.0
    %2652 = vmatprep.subr.mxu0 0.0
    %2653 = vmatpush1.msra.mxu0 0.0
    %2654 = vmatprep.subr.mxu0 0.0
    %2655 = vmatpush1.msra.mxu0 0.0
    %2656 = vmatprep.subr.mxu0 0.0
    %2657 = vmatpush1.msra.mxu0 0.0
    %2658 = vmatprep.subr.mxu0 0.0
    %2659 = vmatpush1.msra.mxu0 0.0
    %2660 = vmatprep.subr.mxu0 0.0
    %2661 = vmatpush1.msra.mxu0 0.0
    %2662 = vmatprep.subr.mxu0 0.0
    %2663 = vmatpush1.msra.mxu0 0.0
    %2664 = vmatprep.subr.mxu0 0.0
    %2665 = vmatpush1.msra.mxu0 0.0
    %2666 = vmatprep.subr.mxu0 0.0
    %2667 = vmatpush1.msra.mxu0 0.0
    %2668 = vmatprep.subr.mxu0 0.0
    %2669 = vmatpush1.msra.mxu0 0.0
    %2670 = vmatprep.subr.mxu0 0.0
    %2671 = vmatpush1.msra.mxu0 0.0
    %2672 = vmatprep.subr.mxu0 0.0
    %2673 = vmatpush1.msra.mxu0 0.0
    %2674 = vmatprep.subr.mxu0 0.0
    %2675 = vmatpush1.msra.mxu0 0.0
    %2676 = vmatprep.subr.mxu0 0.0
    %2677 = vmatpush1.msra.mxu0 0.0
    %2678 = vmatprep.subr.mxu0 0.0
    %2679 = vmatpush1.msra.mxu0 0.0
    %2680 = vmatprep.subr.mxu0 0.0
    %2681 = vmatpush1.msra.mxu0 0.0
    %2682 = vmatprep.subr.mxu0 0.0
    %2683 = vmatpush1.msra.mxu0 0.0
    %2684 = vmatprep.subr.mxu0 0.0
    %2685 = vmatpush1.msra.mxu0 0.0
    %2686 = vmatprep.subr.mxu0 0.0
    %2687 = vmatpush1.msra.mxu0 0.0
    %2688 = vmatprep.mubr.f32.mxu0 0.0
    %v2689 = vand.u32 %v2395, 4294901760
    %v2690 = vsub.f32 %v2395, %v2689
    %v2691 = vand.u32 %v2690, 4294901760
    %2692 = vmatmul.mubr.f32.gmra.mrb[0].mxu0 %v2691
    %v2693 = vpop.f32.mrb[0].mxu0
    %v2694 = vadd.f32 %v2620, %v2693
    %v2695 = vpop.f32.mrb[0].mxu0
    %2696 = vdwg.mxu0
    %2697 = vmatprep.subr.mxu0 0.0
    %v2698 = vand.u32 %v68, 4294901760
    %v2699 = vsub.f32 %v68, %v2698
    %v2700 = vand.u32 %v2699, 4294901760
    %2701 = vmatpush1.msra.mxu0 %v2700
    %2702 = vmatprep.subr.mxu0 0.0
    %2703 = vmatpush1.msra.mxu0 0.0
    %2704 = vmatprep.subr.mxu0 0.0
    %2705 = vmatpush1.msra.mxu0 0.0
    %2706 = vmatprep.subr.mxu0 0.0
    %2707 = vmatpush1.msra.mxu0 0.0
    %2708 = vmatprep.subr.mxu0 0.0
    %2709 = vmatpush1.msra.mxu0 0.0
    %2710 = vmatprep.subr.mxu0 0.0
    %2711 = vmatpush1.msra.mxu0 0.0
    %2712 = vmatprep.subr.mxu0 0.0
    %2713 = vmatpush1.msra.mxu0 0.0
    %2714 = vmatprep.subr.mxu0 0.0
    %2715 = vmatpush1.msra.mxu0 0.0
    %2716 = vmatprep.subr.mxu0 0.0
    %2717 = vmatpush1.msra.mxu0 0.0
    %2718 = vmatprep.subr.mxu0 0.0
    %2719 = vmatpush1.msra.mxu0 0.0
    %2720 = vmatprep.subr.mxu0 0.0
    %2721 = vmatpush1.msra.mxu0 0.0
    %2722 = vmatprep.subr.mxu0 0.0
    %2723 = vmatpush1.msra.mxu0 0.0
    %2724 = vmatprep.subr.mxu0 0.0
    %2725 = vmatpush1.msra.mxu0 0.0
    %2726 = vmatprep.subr.mxu0 0.0
    %2727 = vmatpush1.msra.mxu0 0.0
    %2728 = vmatprep.subr.mxu0 0.0
    %2729 = vmatpush1.msra.mxu0 0.0
    %2730 = vmatprep.subr.mxu0 0.0
    %2731 = vmatpush1.msra.mxu0 0.0
    %2732 = vmatprep.subr.mxu0 0.0
    %2733 = vmatpush1.msra.mxu0 0.0
    %2734 = vmatprep.subr.mxu0 0.0
    %2735 = vmatpush1.msra.mxu0 0.0
    %2736 = vmatprep.subr.mxu0 0.0
    %2737 = vmatpush1.msra.mxu0 0.0
    %2738 = vmatprep.subr.mxu0 0.0
    %2739 = vmatpush1.msra.mxu0 0.0
    %2740 = vmatprep.subr.mxu0 0.0
    %2741 = vmatpush1.msra.mxu0 0.0
    %2742 = vmatprep.subr.mxu0 0.0
    %2743 = vmatpush1.msra.mxu0 0.0
    %2744 = vmatprep.subr.mxu0 0.0
    %2745 = vmatpush1.msra.mxu0 0.0
    %2746 = vmatprep.subr.mxu0 0.0
    %2747 = vmatpush1.msra.mxu0 0.0
    %2748 = vmatprep.subr.mxu0 0.0
    %2749 = vmatpush1.msra.mxu0 0.0
    %2750 = vmatprep.subr.mxu0 0.0
    %2751 = vmatpush1.msra.mxu0 0.0
    %2752 = vmatprep.subr.mxu0 0.0
    %2753 = vmatpush1.msra.mxu0 0.0
    %2754 = vmatprep.subr.mxu0 0.0
    %2755 = vmatpush1.msra.mxu0 0.0
    %2756 = vmatprep.subr.mxu0 0.0
    %2757 = vmatpush1.msra.mxu0 0.0
    %2758 = vmatprep.subr.mxu0 0.0
    %2759 = vmatpush1.msra.mxu0 0.0
    %2760 = vmatprep.subr.mxu0 0.0
    %2761 = vmatpush1.msra.mxu0 0.0
    %2762 = vmatprep.subr.mxu0 0.0
    %2763 = vmatpush1.msra.mxu0 0.0
    %2764 = vmatprep.mubr.f32.mxu0 0.0
    %v2765 = vand.u32 %v2395, 4294901760
    %2766 = vmatmul.mubr.f32.gmra.mrb[0].mxu0 %v2765
    %v2767 = vpop.f32.mrb[0].mxu0
    %v2768 = vadd.f32 %v2694, %v2767
    %v2769 = vpop.f32.mrb[0].mxu0
    %2770 = vdwg.mxu0
    %2771 = vmatprep.subr.mxu0 0.0
    %v2772 = vand.u32 %v68, 4294901760
    %2773 = vmatpush1.msra.mxu0 %v2772
    %2774 = vmatprep.subr.mxu0 0.0
    %2775 = vmatpush1.msra.mxu0 0.0
    %2776 = vmatprep.subr.mxu0 0.0
    %2777 = vmatpush1.msra.mxu0 0.0
    %2778 = vmatprep.subr.mxu0 0.0
    %2779 = vmatpush1.msra.mxu0 0.0
    %2780 = vmatprep.subr.mxu0 0.0
    %2781 = vmatpush1.msra.mxu0 0.0
    %2782 = vmatprep.subr.mxu0 0.0
    %2783 = vmatpush1.msra.mxu0 0.0
    %2784 = vmatprep.subr.mxu0 0.0
    %2785 = vmatpush1.msra.mxu0 0.0
    %2786 = vmatprep.subr.mxu0 0.0
    %2787 = vmatpush1.msra.mxu0 0.0
    %2788 = vmatprep.subr.mxu0 0.0
    %2789 = vmatpush1.msra.mxu0 0.0
    %2790 = vmatprep.subr.mxu0 0.0
    %2791 = vmatpush1.msra.mxu0 0.0
    %2792 = vmatprep.subr.mxu0 0.0
    %2793 = vmatpush1.msra.mxu0 0.0
    %2794 = vmatprep.subr.mxu0 0.0
    %2795 = vmatpush1.msra.mxu0 0.0
    %2796 = vmatprep.subr.mxu0 0.0
    %2797 = vmatpush1.msra.mxu0 0.0
    %2798 = vmatprep.subr.mxu0 0.0
    %2799 = vmatpush1.msra.mxu0 0.0
    %2800 = vmatprep.subr.mxu0 0.0
    %2801 = vmatpush1.msra.mxu0 0.0
    %2802 = vmatprep.subr.mxu0 0.0
    %2803 = vmatpush1.msra.mxu0 0.0
    %2804 = vmatprep.subr.mxu0 0.0
    %2805 = vmatpush1.msra.mxu0 0.0
    %2806 = vmatprep.subr.mxu0 0.0
    %2807 = vmatpush1.msra.mxu0 0.0
    %2808 = vmatprep.subr.mxu0 0.0
    %2809 = vmatpush1.msra.mxu0 0.0
    %2810 = vmatprep.subr.mxu0 0.0
    %2811 = vmatpush1.msra.mxu0 0.0
    %2812 = vmatprep.subr.mxu0 0.0
    %2813 = vmatpush1.msra.mxu0 0.0
    %2814 = vmatprep.subr.mxu0 0.0
    %2815 = vmatpush1.msra.mxu0 0.0
    %2816 = vmatprep.subr.mxu0 0.0
    %2817 = vmatpush1.msra.mxu0 0.0
    %2818 = vmatprep.subr.mxu0 0.0
    %2819 = vmatpush1.msra.mxu0 0.0
    %2820 = vmatprep.subr.mxu0 0.0
    %2821 = vmatpush1.msra.mxu0 0.0
    %2822 = vmatprep.subr.mxu0 0.0
    %2823 = vmatpush1.msra.mxu0 0.0
    %2824 = vmatprep.subr.mxu0 0.0
    %2825 = vmatpush1.msra.mxu0 0.0
    %2826 = vmatprep.subr.mxu0 0.0
    %2827 = vmatpush1.msra.mxu0 0.0
    %2828 = vmatprep.subr.mxu0 0.0
    %2829 = vmatpush1.msra.mxu0 0.0
    %2830 = vmatprep.subr.mxu0 0.0
    %2831 = vmatpush1.msra.mxu0 0.0
    %2832 = vmatprep.subr.mxu0 0.0
    %2833 = vmatpush1.msra.mxu0 0.0
    %2834 = vmatprep.subr.mxu0 0.0
    %2835 = vmatpush1.msra.mxu0 0.0
    %2836 = vmatprep.mubr.f32.mxu0 0.0
    %v2837 = vand.u32 %v2395, 4294901760
    %2838 = vmatmul.mubr.f32.gmra.mrb[0].mxu0 %v2837
    %v2839 = vpop.f32.mrb[0].mxu0
    %v2840 = vadd.f32 %v2768, %v2839
    %v2841 = vpop.f32.mrb[0].mxu0
    %2842 = vdwg.mxu0
    %v2844 = vsel %vm1920, %v1943, 0
    %2846 = vmatprep.subr.mxu0 0.0
    %v2847 = vand.u32 %v69, 4294901760
    %2848 = vmatpush1.msra.mxu0 %v2847
    %2849 = vmatprep.subr.mxu0 0.0
    %2850 = vmatpush1.msra.mxu0 0.0
    %2851 = vmatprep.subr.mxu0 0.0
    %2852 = vmatpush1.msra.mxu0 0.0
    %2853 = vmatprep.subr.mxu0 0.0
    %2854 = vmatpush1.msra.mxu0 0.0
    %2855 = vmatprep.subr.mxu0 0.0
    %2856 = vmatpush1.msra.mxu0 0.0
    %2857 = vmatprep.subr.mxu0 0.0
    %2858 = vmatpush1.msra.mxu0 0.0
    %2859 = vmatprep.subr.mxu0 0.0
    %2860 = vmatpush1.msra.mxu0 0.0
    %2861 = vmatprep.subr.mxu0 0.0
    %2862 = vmatpush1.msra.mxu0 0.0
    %2863 = vmatprep.subr.mxu0 0.0
    %2864 = vmatpush1.msra.mxu0 0.0
    %2865 = vmatprep.subr.mxu0 0.0
    %2866 = vmatpush1.msra.mxu0 0.0
    %2867 = vmatprep.subr.mxu0 0.0
    %2868 = vmatpush1.msra.mxu0 0.0
    %2869 = vmatprep.subr.mxu0 0.0
    %2870 = vmatpush1.msra.mxu0 0.0
    %2871 = vmatprep.subr.mxu0 0.0
    %2872 = vmatpush1.msra.mxu0 0.0
    %2873 = vmatprep.subr.mxu0 0.0
    %2874 = vmatpush1.msra.mxu0 0.0
    %2875 = vmatprep.subr.mxu0 0.0
    %2876 = vmatpush1.msra.mxu0 0.0
    %2877 = vmatprep.subr.mxu0 0.0
    %2878 = vmatpush1.msra.mxu0 0.0
    %2879 = vmatprep.subr.mxu0 0.0
    %2880 = vmatpush1.msra.mxu0 0.0
    %2881 = vmatprep.subr.mxu0 0.0
    %2882 = vmatpush1.msra.mxu0 0.0
    %2883 = vmatprep.subr.mxu0 0.0
    %2884 = vmatpush1.msra.mxu0 0.0
    %2885 = vmatprep.subr.mxu0 0.0
    %2886 = vmatpush1.msra.mxu0 0.0
    %2887 = vmatprep.subr.mxu0 0.0
    %2888 = vmatpush1.msra.mxu0 0.0
    %2889 = vmatprep.subr.mxu0 0.0
    %2890 = vmatpush1.msra.mxu0 0.0
    %2891 = vmatprep.subr.mxu0 0.0
    %2892 = vmatpush1.msra.mxu0 0.0
    %2893 = vmatprep.subr.mxu0 0.0
    %2894 = vmatpush1.msra.mxu0 0.0
    %2895 = vmatprep.subr.mxu0 0.0
    %2896 = vmatpush1.msra.mxu0 0.0
    %2897 = vmatprep.subr.mxu0 0.0
    %2898 = vmatpush1.msra.mxu0 0.0
    %2899 = vmatprep.subr.mxu0 0.0
    %2900 = vmatpush1.msra.mxu0 0.0
    %2901 = vmatprep.subr.mxu0 0.0
    %2902 = vmatpush1.msra.mxu0 0.0
    %2903 = vmatprep.subr.mxu0 0.0
    %2904 = vmatpush1.msra.mxu0 0.0
    %2905 = vmatprep.subr.mxu0 0.0
    %2906 = vmatpush1.msra.mxu0 0.0
    %2907 = vmatprep.subr.mxu0 0.0
    %2908 = vmatpush1.msra.mxu0 0.0
    %2909 = vmatprep.subr.mxu0 0.0
    %2910 = vmatpush1.msra.mxu0 0.0
    %2911 = vmatprep.mubr.f32.mxu0 0.0
    %v2912 = vand.u32 %v2844, 4294901760
    %v2913 = vsub.f32 %v2844, %v2912
    %v2914 = vand.u32 %v2913, 4294901760
    %v2915 = vsub.f32 %v2913, %v2914
    %v2916 = vand.u32 %v2915, 4294901760
    %2917 = vmatmul.mubr.f32.gmra.mrb[0].mxu0 %v2916
    %v2918 = vpop.f32.mrb[0].mxu0
    %v2919 = vadd.f32 0.0, %v2918
    %v2920 = vpop.f32.mrb[0].mxu0
    %2921 = vdwg.mxu0
    %2922 = vmatprep.subr.mxu0 0.0
    %v2923 = vand.u32 %v69, 4294901760
    %v2924 = vsub.f32 %v69, %v2923
    %v2925 = vand.u32 %v2924, 4294901760
    %v2926 = vsub.f32 %v2924, %v2925
    %v2927 = vand.u32 %v2926, 4294901760
    %2928 = vmatpush1.msra.mxu0 %v2927
    %2929 = vmatprep.subr.mxu0 0.0
    %2930 = vmatpush1.msra.mxu0 0.0
    %2931 = vmatprep.subr.mxu0 0.0
    %2932 = vmatpush1.msra.mxu0 0.0
    %2933 = vmatprep.subr.mxu0 0.0
    %2934 = vmatpush1.msra.mxu0 0.0
    %2935 = vmatprep.subr.mxu0 0.0
    %2936 = vmatpush1.msra.mxu0 0.0
    %2937 = vmatprep.subr.mxu0 0.0
    %2938 = vmatpush1.msra.mxu0 0.0
    %2939 = vmatprep.subr.mxu0 0.0
    %2940 = vmatpush1.msra.mxu0 0.0
    %2941 = vmatprep.subr.mxu0 0.0
    %2942 = vmatpush1.msra.mxu0 0.0
    %2943 = vmatprep.subr.mxu0 0.0
    %2944 = vmatpush1.msra.mxu0 0.0
    %2945 = vmatprep.subr.mxu0 0.0
    %2946 = vmatpush1.msra.mxu0 0.0
    %2947 = vmatprep.subr.mxu0 0.0
    %2948 = vmatpush1.msra.mxu0 0.0
    %2949 = vmatprep.subr.mxu0 0.0
    %2950 = vmatpush1.msra.mxu0 0.0
    %2951 = vmatprep.subr.mxu0 0.0
    %2952 = vmatpush1.msra.mxu0 0.0
    %2953 = vmatprep.subr.mxu0 0.0
    %2954 = vmatpush1.msra.mxu0 0.0
    %2955 = vmatprep.subr.mxu0 0.0
    %2956 = vmatpush1.msra.mxu0 0.0
    %2957 = vmatprep.subr.mxu0 0.0
    %2958 = vmatpush1.msra.mxu0 0.0
    %2959 = vmatprep.subr.mxu0 0.0
    %2960 = vmatpush1.msra.mxu0 0.0
    %2961 = vmatprep.subr.mxu0 0.0
    %2962 = vmatpush1.msra.mxu0 0.0
    %2963 = vmatprep.subr.mxu0 0.0
    %2964 = vmatpush1.msra.mxu0 0.0
    %2965 = vmatprep.subr.mxu0 0.0
    %2966 = vmatpush1.msra.mxu0 0.0
    %2967 = vmatprep.subr.mxu0 0.0
    %2968 = vmatpush1.msra.mxu0 0.0
    %2969 = vmatprep.subr.mxu0 0.0
    %2970 = vmatpush1.msra.mxu0 0.0
    %2971 = vmatprep.subr.mxu0 0.0
    %2972 = vmatpush1.msra.mxu0 0.0
    %2973 = vmatprep.subr.mxu0 0.0
    %2974 = vmatpush1.msra.mxu0 0.0
    %2975 = vmatprep.subr.mxu0 0.0
    %2976 = vmatpush1.msra.mxu0 0.0
    %2977 = vmatprep.subr.mxu0 0.0
    %2978 = vmatpush1.msra.mxu0 0.0
    %2979 = vmatprep.subr.mxu0 0.0
    %2980 = vmatpush1.msra.mxu0 0.0
    %2981 = vmatprep.subr.mxu0 0.0
    %2982 = vmatpush1.msra.mxu0 0.0
    %2983 = vmatprep.subr.mxu0 0.0
    %2984 = vmatpush1.msra.mxu0 0.0
    %2985 = vmatprep.subr.mxu0 0.0
    %2986 = vmatpush1.msra.mxu0 0.0
    %2987 = vmatprep.subr.mxu0 0.0
    %2988 = vmatpush1.msra.mxu0 0.0
    %2989 = vmatprep.subr.mxu0 0.0
    %2990 = vmatpush1.msra.mxu0 0.0
    %2991 = vmatprep.mubr.f32.mxu0 0.0
    %v2992 = vand.u32 %v2844, 4294901760
    %2993 = vmatmul.mubr.f32.gmra.mrb[0].mxu0 %v2992
    %v2994 = vpop.f32.mrb[0].mxu0
    %v2995 = vadd.f32 %v2919, %v2994
    %v2996 = vpop.f32.mrb[0].mxu0
    %2997 = vdwg.mxu0
    %2998 = vmatprep.subr.mxu0 0.0
    %v2999 = vand.u32 %v69, 4294901760
    %v3000 = vsub.f32 %v69, %v2999
    %3001 = vmatpush1.msra.mxu0 %v3000
    %3002 = vmatprep.subr.mxu0 0.0
    %3003 = vmatpush1.msra.mxu0 0.0
    %3004 = vmatprep.subr.mxu0 0.0
    %3005 = vmatpush1.msra.mxu0 0.0
    %3006 = vmatprep.subr.mxu0 0.0
    %3007 = vmatpush1.msra.mxu0 0.0
    %3008 = vmatprep.subr.mxu0 0.0
    %3009 = vmatpush1.msra.mxu0 0.0
    %3010 = vmatprep.subr.mxu0 0.0
    %3011 = vmatpush1.msra.mxu0 0.0
    %3012 = vmatprep.subr.mxu0 0.0
    %3013 = vmatpush1.msra.mxu0 0.0
    %3014 = vmatprep.subr.mxu0 0.0
    %3015 = vmatpush1.msra.mxu0 0.0
    %3016 = vmatprep.subr.mxu0 0.0
    %3017 = vmatpush1.msra.mxu0 0.0
    %3018 = vmatprep.subr.mxu0 0.0
    %3019 = vmatpush1.msra.mxu0 0.0
    %3020 = vmatprep.subr.mxu0 0.0
    %3021 = vmatpush1.msra.mxu0 0.0
    %3022 = vmatprep.subr.mxu0 0.0
    %3023 = vmatpush1.msra.mxu0 0.0
    %3024 = vmatprep.subr.mxu0 0.0
    %3025 = vmatpush1.msra.mxu0 0.0
    %3026 = vmatprep.subr.mxu0 0.0
    %3027 = vmatpush1.msra.mxu0 0.0
    %3028 = vmatprep.subr.mxu0 0.0
    %3029 = vmatpush1.msra.mxu0 0.0
    %3030 = vmatprep.subr.mxu0 0.0
    %3031 = vmatpush1.msra.mxu0 0.0
    %3032 = vmatprep.subr.mxu0 0.0
    %3033 = vmatpush1.msra.mxu0 0.0
    %3034 = vmatprep.subr.mxu0 0.0
    %3035 = vmatpush1.msra.mxu0 0.0
    %3036 = vmatprep.subr.mxu0 0.0
    %3037 = vmatpush1.msra.mxu0 0.0
    %3038 = vmatprep.subr.mxu0 0.0
    %3039 = vmatpush1.msra.mxu0 0.0
    %3040 = vmatprep.subr.mxu0 0.0
    %3041 = vmatpush1.msra.mxu0 0.0
    %3042 = vmatprep.subr.mxu0 0.0
    %3043 = vmatpush1.msra.mxu0 0.0
    %3044 = vmatprep.subr.mxu0 0.0
    %3045 = vmatpush1.msra.mxu0 0.0
    %3046 = vmatprep.subr.mxu0 0.0
    %3047 = vmatpush1.msra.mxu0 0.0
    %3048 = vmatprep.subr.mxu0 0.0
    %3049 = vmatpush1.msra.mxu0 0.0
    %3050 = vmatprep.subr.mxu0 0.0
    %3051 = vmatpush1.msra.mxu0 0.0
    %3052 = vmatprep.subr.mxu0 0.0
    %3053 = vmatpush1.msra.mxu0 0.0
    %3054 = vmatprep.subr.mxu0 0.0
    %3055 = vmatpush1.msra.mxu0 0.0
    %3056 = vmatprep.subr.mxu0 0.0
    %3057 = vmatpush1.msra.mxu0 0.0
    %3058 = vmatprep.subr.mxu0 0.0
    %3059 = vmatpush1.msra.mxu0 0.0
    %3060 = vmatprep.subr.mxu0 0.0
    %3061 = vmatpush1.msra.mxu0 0.0
    %3062 = vmatprep.subr.mxu0 0.0
    %3063 = vmatpush1.msra.mxu0 0.0
    %3064 = vmatprep.mubr.f32.mxu0 0.0
    %v3065 = vand.u32 %v2844, 4294901760
    %v3066 = vsub.f32 %v2844, %v3065
    %3067 = vmatmul.mubr.f32.gmra.mrb[0].mxu0 %v3066
    %v3068 = vpop.f32.mrb[0].mxu0
    %v3069 = vadd.f32 %v2995, %v3068
    %v3070 = vpop.f32.mrb[0].mxu0
    %3071 = vdwg.mxu0
    %3072 = vmatprep.subr.mxu0 0.0
    %v3073 = vand.u32 %v69, 4294901760
    %3074 = vmatpush1.msra.mxu0 %v3073
    %3075 = vmatprep.subr.mxu0 0.0
    %3076 = vmatpush1.msra.mxu0 0.0
    %3077 = vmatprep.subr.mxu0 0.0
    %3078 = vmatpush1.msra.mxu0 0.0
    %3079 = vmatprep.subr.mxu0 0.0
    %3080 = vmatpush1.msra.mxu0 0.0
    %3081 = vmatprep.subr.mxu0 0.0
    %3082 = vmatpush1.msra.mxu0 0.0
    %3083 = vmatprep.subr.mxu0 0.0
    %3084 = vmatpush1.msra.mxu0 0.0
    %3085 = vmatprep.subr.mxu0 0.0
    %3086 = vmatpush1.msra.mxu0 0.0
    %3087 = vmatprep.subr.mxu0 0.0
    %3088 = vmatpush1.msra.mxu0 0.0
    %3089 = vmatprep.subr.mxu0 0.0
    %3090 = vmatpush1.msra.mxu0 0.0
    %3091 = vmatprep.subr.mxu0 0.0
    %3092 = vmatpush1.msra.mxu0 0.0
    %3093 = vmatprep.subr.mxu0 0.0
    %3094 = vmatpush1.msra.mxu0 0.0
    %3095 = vmatprep.subr.mxu0 0.0
    %3096 = vmatpush1.msra.mxu0 0.0
    %3097 = vmatprep.subr.mxu0 0.0
    %3098 = vmatpush1.msra.mxu0 0.0
    %3099 = vmatprep.subr.mxu0 0.0
    %3100 = vmatpush1.msra.mxu0 0.0
    %3101 = vmatprep.subr.mxu0 0.0
    %3102 = vmatpush1.msra.mxu0 0.0
    %3103 = vmatprep.subr.mxu0 0.0
    %3104 = vmatpush1.msra.mxu0 0.0
    %3105 = vmatprep.subr.mxu0 0.0
    %3106 = vmatpush1.msra.mxu0 0.0
    %3107 = vmatprep.subr.mxu0 0.0
    %3108 = vmatpush1.msra.mxu0 0.0
    %3109 = vmatprep.subr.mxu0 0.0
    %3110 = vmatpush1.msra.mxu0 0.0
    %3111 = vmatprep.subr.mxu0 0.0
    %3112 = vmatpush1.msra.mxu0 0.0
    %3113 = vmatprep.subr.mxu0 0.0
    %3114 = vmatpush1.msra.mxu0 0.0
    %3115 = vmatprep.subr.mxu0 0.0
    %3116 = vmatpush1.msra.mxu0 0.0
    %3117 = vmatprep.subr.mxu0 0.0
    %3118 = vmatpush1.msra.mxu0 0.0
    %3119 = vmatprep.subr.mxu0 0.0
    %3120 = vmatpush1.msra.mxu0 0.0
    %3121 = vmatprep.subr.mxu0 0.0
    %3122 = vmatpush1.msra.mxu0 0.0
    %3123 = vmatprep.subr.mxu0 0.0
    %3124 = vmatpush1.msra.mxu0 0.0
    %3125 = vmatprep.subr.mxu0 0.0
    %3126 = vmatpush1.msra.mxu0 0.0
    %3127 = vmatprep.subr.mxu0 0.0
    %3128 = vmatpush1.msra.mxu0 0.0
    %3129 = vmatprep.subr.mxu0 0.0
    %3130 = vmatpush1.msra.mxu0 0.0
    %3131 = vmatprep.subr.mxu0 0.0
    %3132 = vmatpush1.msra.mxu0 0.0
    %3133 = vmatprep.subr.mxu0 0.0
    %3134 = vmatpush1.msra.mxu0 0.0
    %3135 = vmatprep.subr.mxu0 0.0
    %3136 = vmatpush1.msra.mxu0 0.0
    %3137 = vmatprep.mubr.f32.mxu0 0.0
    %v3138 = vand.u32 %v2844, 4294901760
    %v3139 = vsub.f32 %v2844, %v3138
    %v3140 = vand.u32 %v3139, 4294901760
    %3141 = vmatmul.mubr.f32.gmra.mrb[0].mxu0 %v3140
    %v3142 = vpop.f32.mrb[0].mxu0
    %v3143 = vadd.f32 %v3069, %v3142
    %v3144 = vpop.f32.mrb[0].mxu0
    %3145 = vdwg.mxu0
    %3146 = vmatprep.subr.mxu0 0.0
    %v3147 = vand.u32 %v69, 4294901760
    %v3148 = vsub.f32 %v69, %v3147
    %v3149 = vand.u32 %v3148, 4294901760
    %3150 = vmatpush1.msra.mxu0 %v3149
    %3151 = vmatprep.subr.mxu0 0.0
    %3152 = vmatpush1.msra.mxu0 0.0
    %3153 = vmatprep.subr.mxu0 0.0
    %3154 = vmatpush1.msra.mxu0 0.0
    %3155 = vmatprep.subr.mxu0 0.0
    %3156 = vmatpush1.msra.mxu0 0.0
    %3157 = vmatprep.subr.mxu0 0.0
    %3158 = vmatpush1.msra.mxu0 0.0
    %3159 = vmatprep.subr.mxu0 0.0
    %3160 = vmatpush1.msra.mxu0 0.0
    %3161 = vmatprep.subr.mxu0 0.0
    %3162 = vmatpush1.msra.mxu0 0.0
    %3163 = vmatprep.subr.mxu0 0.0
    %3164 = vmatpush1.msra.mxu0 0.0
    %3165 = vmatprep.subr.mxu0 0.0
    %3166 = vmatpush1.msra.mxu0 0.0
    %3167 = vmatprep.subr.mxu0 0.0
    %3168 = vmatpush1.msra.mxu0 0.0
    %3169 = vmatprep.subr.mxu0 0.0
    %3170 = vmatpush1.msra.mxu0 0.0
    %3171 = vmatprep.subr.mxu0 0.0
    %3172 = vmatpush1.msra.mxu0 0.0
    %3173 = vmatprep.subr.mxu0 0.0
    %3174 = vmatpush1.msra.mxu0 0.0
    %3175 = vmatprep.subr.mxu0 0.0
    %3176 = vmatpush1.msra.mxu0 0.0
    %3177 = vmatprep.subr.mxu0 0.0
    %3178 = vmatpush1.msra.mxu0 0.0
    %3179 = vmatprep.subr.mxu0 0.0
    %3180 = vmatpush1.msra.mxu0 0.0
    %3181 = vmatprep.subr.mxu0 0.0
    %3182 = vmatpush1.msra.mxu0 0.0
    %3183 = vmatprep.subr.mxu0 0.0
    %3184 = vmatpush1.msra.mxu0 0.0
    %3185 = vmatprep.subr.mxu0 0.0
    %3186 = vmatpush1.msra.mxu0 0.0
    %3187 = vmatprep.subr.mxu0 0.0
    %3188 = vmatpush1.msra.mxu0 0.0
    %3189 = vmatprep.subr.mxu0 0.0
    %3190 = vmatpush1.msra.mxu0 0.0
    %3191 = vmatprep.subr.mxu0 0.0
    %3192 = vmatpush1.msra.mxu0 0.0
    %3193 = vmatprep.subr.mxu0 0.0
    %3194 = vmatpush1.msra.mxu0 0.0
    %3195 = vmatprep.subr.mxu0 0.0
    %3196 = vmatpush1.msra.mxu0 0.0
    %3197 = vmatprep.subr.mxu0 0.0
    %3198 = vmatpush1.msra.mxu0 0.0
    %3199 = vmatprep.subr.mxu0 0.0
    %3200 = vmatpush1.msra.mxu0 0.0
    %3201 = vmatprep.subr.mxu0 0.0
    %3202 = vmatpush1.msra.mxu0 0.0
    %3203 = vmatprep.subr.mxu0 0.0
    %3204 = vmatpush1.msra.mxu0 0.0
    %3205 = vmatprep.subr.mxu0 0.0
    %3206 = vmatpush1.msra.mxu0 0.0
    %3207 = vmatprep.subr.mxu0 0.0
    %3208 = vmatpush1.msra.mxu0 0.0
    %3209 = vmatprep.subr.mxu0 0.0
    %3210 = vmatpush1.msra.mxu0 0.0
    %3211 = vmatprep.subr.mxu0 0.0
    %3212 = vmatpush1.msra.mxu0 0.0
    %3213 = vmatprep.mubr.f32.mxu0 0.0
    %v3214 = vand.u32 %v2844, 4294901760
    %3215 = vmatmul.mubr.f32.gmra.mrb[0].mxu0 %v3214
    %v3216 = vpop.f32.mrb[0].mxu0
    %v3217 = vadd.f32 %v3143, %v3216
    %v3218 = vpop.f32.mrb[0].mxu0
    %3219 = vdwg.mxu0
    %3220 = vmatprep.subr.mxu0 0.0
    %v3221 = vand.u32 %v69, 4294901760
    %3222 = vmatpush1.msra.mxu0 %v3221
    %3223 = vmatprep.subr.mxu0 0.0
    %3224 = vmatpush1.msra.mxu0 0.0
    %3225 = vmatprep.subr.mxu0 0.0
    %3226 = vmatpush1.msra.mxu0 0.0
    %3227 = vmatprep.subr.mxu0 0.0
    %3228 = vmatpush1.msra.mxu0 0.0
    %3229 = vmatprep.subr.mxu0 0.0
    %3230 = vmatpush1.msra.mxu0 0.0
    %3231 = vmatprep.subr.mxu0 0.0
    %3232 = vmatpush1.msra.mxu0 0.0
    %3233 = vmatprep.subr.mxu0 0.0
    %3234 = vmatpush1.msra.mxu0 0.0
    %3235 = vmatprep.subr.mxu0 0.0
    %3236 = vmatpush1.msra.mxu0 0.0
    %3237 = vmatprep.subr.mxu0 0.0
    %3238 = vmatpush1.msra.mxu0 0.0
    %3239 = vmatprep.subr.mxu0 0.0
    %3240 = vmatpush1.msra.mxu0 0.0
    %3241 = vmatprep.subr.mxu0 0.0
    %3242 = vmatpush1.msra.mxu0 0.0
    %3243 = vmatprep.subr.mxu0 0.0
    %3244 = vmatpush1.msra.mxu0 0.0
    %3245 = vmatprep.subr.mxu0 0.0
    %3246 = vmatpush1.msra.mxu0 0.0
    %3247 = vmatprep.subr.mxu0 0.0
    %3248 = vmatpush1.msra.mxu0 0.0
    %3249 = vmatprep.subr.mxu0 0.0
    %3250 = vmatpush1.msra.mxu0 0.0
    %3251 = vmatprep.subr.mxu0 0.0
    %3252 = vmatpush1.msra.mxu0 0.0
    %3253 = vmatprep.subr.mxu0 0.0
    %3254 = vmatpush1.msra.mxu0 0.0
    %3255 = vmatprep.subr.mxu0 0.0
    %3256 = vmatpush1.msra.mxu0 0.0
    %3257 = vmatprep.subr.mxu0 0.0
    %3258 = vmatpush1.msra.mxu0 0.0
    %3259 = vmatprep.subr.mxu0 0.0
    %3260 = vmatpush1.msra.mxu0 0.0
    %3261 = vmatprep.subr.mxu0 0.0
    %3262 = vmatpush1.msra.mxu0 0.0
    %3263 = vmatprep.subr.mxu0 0.0
    %3264 = vmatpush1.msra.mxu0 0.0
    %3265 = vmatprep.subr.mxu0 0.0
    %3266 = vmatpush1.msra.mxu0 0.0
    %3267 = vmatprep.subr.mxu0 0.0
    %3268 = vmatpush1.msra.mxu0 0.0
    %3269 = vmatprep.subr.mxu0 0.0
    %3270 = vmatpush1.msra.mxu0 0.0
    %3271 = vmatprep.subr.mxu0 0.0
    %3272 = vmatpush1.msra.mxu0 0.0
    %3273 = vmatprep.subr.mxu0 0.0
    %3274 = vmatpush1.msra.mxu0 0.0
    %3275 = vmatprep.subr.mxu0 0.0
    %3276 = vmatpush1.msra.mxu0 0.0
    %3277 = vmatprep.subr.mxu0 0.0
    %3278 = vmatpush1.msra.mxu0 0.0
    %3279 = vmatprep.subr.mxu0 0.0
    %3280 = vmatpush1.msra.mxu0 0.0
    %3281 = vmatprep.subr.mxu0 0.0
    %3282 = vmatpush1.msra.mxu0 0.0
    %3283 = vmatprep.subr.mxu0 0.0
    %3284 = vmatpush1.msra.mxu0 0.0
    %3285 = vmatprep.mubr.f32.mxu0 0.0
    %v3286 = vand.u32 %v2844, 4294901760
    %3287 = vmatmul.mubr.f32.gmra.mrb[0].mxu0 %v3286
    %v3288 = vpop.f32.mrb[0].mxu0
    %v3289 = vadd.f32 %v3217, %v3288
    %v3290 = vpop.f32.mrb[0].mxu0
    %3291 = vdwg.mxu0
    %v3293 = vsel %vm1920, %v1944, 0
    %3295 = vmatprep.subr.mxu0 0.0
    %v3296 = vand.u32 %v70, 4294901760
    %3297 = vmatpush1.msra.mxu0 %v3296
    %3298 = vmatprep.subr.mxu0 0.0
    %3299 = vmatpush1.msra.mxu0 0.0
    %3300 = vmatprep.subr.mxu0 0.0
    %3301 = vmatpush1.msra.mxu0 0.0
    %3302 = vmatprep.subr.mxu0 0.0
    %3303 = vmatpush1.msra.mxu0 0.0
    %3304 = vmatprep.subr.mxu0 0.0
    %3305 = vmatpush1.msra.mxu0 0.0
    %3306 = vmatprep.subr.mxu0 0.0
    %3307 = vmatpush1.msra.mxu0 0.0
    %3308 = vmatprep.subr.mxu0 0.0
    %3309 = vmatpush1.msra.mxu0 0.0
    %3310 = vmatprep.subr.mxu0 0.0
    %3311 = vmatpush1.msra.mxu0 0.0
    %3312 = vmatprep.subr.mxu0 0.0
    %3313 = vmatpush1.msra.mxu0 0.0
    %3314 = vmatprep.subr.mxu0 0.0
    %3315 = vmatpush1.msra.mxu0 0.0
    %3316 = vmatprep.subr.mxu0 0.0
    %3317 = vmatpush1.msra.mxu0 0.0
    %3318 = vmatprep.subr.mxu0 0.0
    %3319 = vmatpush1.msra.mxu0 0.0
    %3320 = vmatprep.subr.mxu0 0.0
    %3321 = vmatpush1.msra.mxu0 0.0
    %3322 = vmatprep.subr.mxu0 0.0
    %3323 = vmatpush1.msra.mxu0 0.0
    %3324 = vmatprep.subr.mxu0 0.0
    %3325 = vmatpush1.msra.mxu0 0.0
    %3326 = vmatprep.subr.mxu0 0.0
    %3327 = vmatpush1.msra.mxu0 0.0
    %3328 = vmatprep.subr.mxu0 0.0
    %3329 = vmatpush1.msra.mxu0 0.0
    %3330 = vmatprep.subr.mxu0 0.0
    %3331 = vmatpush1.msra.mxu0 0.0
    %3332 = vmatprep.subr.mxu0 0.0
    %3333 = vmatpush1.msra.mxu0 0.0
    %3334 = vmatprep.subr.mxu0 0.0
    %3335 = vmatpush1.msra.mxu0 0.0
    %3336 = vmatprep.subr.mxu0 0.0
    %3337 = vmatpush1.msra.mxu0 0.0
    %3338 = vmatprep.subr.mxu0 0.0
    %3339 = vmatpush1.msra.mxu0 0.0
    %3340 = vmatprep.subr.mxu0 0.0
    %3341 = vmatpush1.msra.mxu0 0.0
    %3342 = vmatprep.subr.mxu0 0.0
    %3343 = vmatpush1.msra.mxu0 0.0
    %3344 = vmatprep.subr.mxu0 0.0
    %3345 = vmatpush1.msra.mxu0 0.0
    %3346 = vmatprep.subr.mxu0 0.0
    %3347 = vmatpush1.msra.mxu0 0.0
    %3348 = vmatprep.subr.mxu0 0.0
    %3349 = vmatpush1.msra.mxu0 0.0
    %3350 = vmatprep.subr.mxu0 0.0
    %3351 = vmatpush1.msra.mxu0 0.0
    %3352 = vmatprep.subr.mxu0 0.0
    %3353 = vmatpush1.msra.mxu0 0.0
    %3354 = vmatprep.subr.mxu0 0.0
    %3355 = vmatpush1.msra.mxu0 0.0
    %3356 = vmatprep.subr.mxu0 0.0
    %3357 = vmatpush1.msra.mxu0 0.0
    %3358 = vmatprep.subr.mxu0 0.0
    %3359 = vmatpush1.msra.mxu0 0.0
    %3360 = vmatprep.mubr.f32.mxu0 0.0
    %v3361 = vand.u32 %v3293, 4294901760
    %v3362 = vsub.f32 %v3293, %v3361
    %v3363 = vand.u32 %v3362, 4294901760
    %v3364 = vsub.f32 %v3362, %v3363
    %v3365 = vand.u32 %v3364, 4294901760
    %3366 = vmatmul.mubr.f32.gmra.mrb[0].mxu0 %v3365
    %v3367 = vpop.f32.mrb[0].mxu0
    %v3368 = vadd.f32 0.0, %v3367
    %v3369 = vpop.f32.mrb[0].mxu0
    %3370 = vdwg.mxu0
    %3371 = vmatprep.subr.mxu0 0.0
    %v3372 = vand.u32 %v70, 4294901760
    %v3373 = vsub.f32 %v70, %v3372
    %v3374 = vand.u32 %v3373, 4294901760
    %v3375 = vsub.f32 %v3373, %v3374
    %v3376 = vand.u32 %v3375, 4294901760
    %3377 = vmatpush1.msra.mxu0 %v3376
    %3378 = vmatprep.subr.mxu0 0.0
    %3379 = vmatpush1.msra.mxu0 0.0
    %3380 = vmatprep.subr.mxu0 0.0
    %3381 = vmatpush1.msra.mxu0 0.0
    %3382 = vmatprep.subr.mxu0 0.0
    %3383 = vmatpush1.msra.mxu0 0.0
    %3384 = vmatprep.subr.mxu0 0.0
    %3385 = vmatpush1.msra.mxu0 0.0
    %3386 = vmatprep.subr.mxu0 0.0
    %3387 = vmatpush1.msra.mxu0 0.0
    %3388 = vmatprep.subr.mxu0 0.0
    %3389 = vmatpush1.msra.mxu0 0.0
    %3390 = vmatprep.subr.mxu0 0.0
    %3391 = vmatpush1.msra.mxu0 0.0
    %3392 = vmatprep.subr.mxu0 0.0
    %3393 = vmatpush1.msra.mxu0 0.0
    %3394 = vmatprep.subr.mxu0 0.0
    %3395 = vmatpush1.msra.mxu0 0.0
    %3396 = vmatprep.subr.mxu0 0.0
    %3397 = vmatpush1.msra.mxu0 0.0
    %3398 = vmatprep.subr.mxu0 0.0
    %3399 = vmatpush1.msra.mxu0 0.0
    %3400 = vmatprep.subr.mxu0 0.0
    %3401 = vmatpush1.msra.mxu0 0.0
    %3402 = vmatprep.subr.mxu0 0.0
    %3403 = vmatpush1.msra.mxu0 0.0
    %3404 = vmatprep.subr.mxu0 0.0
    %3405 = vmatpush1.msra.mxu0 0.0
    %3406 = vmatprep.subr.mxu0 0.0
    %3407 = vmatpush1.msra.mxu0 0.0
    %3408 = vmatprep.subr.mxu0 0.0
    %3409 = vmatpush1.msra.mxu0 0.0
    %3410 = vmatprep.subr.mxu0 0.0
    %3411 = vmatpush1.msra.mxu0 0.0
    %3412 = vmatprep.subr.mxu0 0.0
    %3413 = vmatpush1.msra.mxu0 0.0
    %3414 = vmatprep.subr.mxu0 0.0
    %3415 = vmatpush1.msra.mxu0 0.0
    %3416 = vmatprep.subr.mxu0 0.0
    %3417 = vmatpush1.msra.mxu0 0.0
    %3418 = vmatprep.subr.mxu0 0.0
    %3419 = vmatpush1.msra.mxu0 0.0
    %3420 = vmatprep.subr.mxu0 0.0
    %3421 = vmatpush1.msra.mxu0 0.0
    %3422 = vmatprep.subr.mxu0 0.0
    %3423 = vmatpush1.msra.mxu0 0.0
    %3424 = vmatprep.subr.mxu0 0.0
    %3425 = vmatpush1.msra.mxu0 0.0
    %3426 = vmatprep.subr.mxu0 0.0
    %3427 = vmatpush1.msra.mxu0 0.0
    %3428 = vmatprep.subr.mxu0 0.0
    %3429 = vmatpush1.msra.mxu0 0.0
    %3430 = vmatprep.subr.mxu0 0.0
    %3431 = vmatpush1.msra.mxu0 0.0
    %3432 = vmatprep.subr.mxu0 0.0
    %3433 = vmatpush1.msra.mxu0 0.0
    %3434 = vmatprep.subr.mxu0 0.0
    %3435 = vmatpush1.msra.mxu0 0.0
    %3436 = vmatprep.subr.mxu0 0.0
    %3437 = vmatpush1.msra.mxu0 0.0
    %3438 = vmatprep.subr.mxu0 0.0
    %3439 = vmatpush1.msra.mxu0 0.0
    %3440 = vmatprep.mubr.f32.mxu0 0.0
    %v3441 = vand.u32 %v3293, 4294901760
    %3442 = vmatmul.mubr.f32.gmra.mrb[0].mxu0 %v3441
    %v3443 = vpop.f32.mrb[0].mxu0
    %v3444 = vadd.f32 %v3368, %v3443
    %v3445 = vpop.f32.mrb[0].mxu0
    %3446 = vdwg.mxu0
    %3447 = vmatprep.subr.mxu0 0.0
    %v3448 = vand.u32 %v70, 4294901760
    %v3449 = vsub.f32 %v70, %v3448
    %3450 = vmatpush1.msra.mxu0 %v3449
    %3451 = vmatprep.subr.mxu0 0.0
    %3452 = vmatpush1.msra.mxu0 0.0
    %3453 = vmatprep.subr.mxu0 0.0
    %3454 = vmatpush1.msra.mxu0 0.0
    %3455 = vmatprep.subr.mxu0 0.0
    %3456 = vmatpush1.msra.mxu0 0.0
    %3457 = vmatprep.subr.mxu0 0.0
    %3458 = vmatpush1.msra.mxu0 0.0
    %3459 = vmatprep.subr.mxu0 0.0
    %3460 = vmatpush1.msra.mxu0 0.0
    %3461 = vmatprep.subr.mxu0 0.0
    %3462 = vmatpush1.msra.mxu0 0.0
    %3463 = vmatprep.subr.mxu0 0.0
    %3464 = vmatpush1.msra.mxu0 0.0
    %3465 = vmatprep.subr.mxu0 0.0
    %3466 = vmatpush1.msra.mxu0 0.0
    %3467 = vmatprep.subr.mxu0 0.0
    %3468 = vmatpush1.msra.mxu0 0.0
    %3469 = vmatprep.subr.mxu0 0.0
    %3470 = vmatpush1.msra.mxu0 0.0
    %3471 = vmatprep.subr.mxu0 0.0
    %3472 = vmatpush1.msra.mxu0 0.0
    %3473 = vmatprep.subr.mxu0 0.0
    %3474 = vmatpush1.msra.mxu0 0.0
    %3475 = vmatprep.subr.mxu0 0.0
    %3476 = vmatpush1.msra.mxu0 0.0
    %3477 = vmatprep.subr.mxu0 0.0
    %3478 = vmatpush1.msra.mxu0 0.0
    %3479 = vmatprep.subr.mxu0 0.0
    %3480 = vmatpush1.msra.mxu0 0.0
    %3481 = vmatprep.subr.mxu0 0.0
    %3482 = vmatpush1.msra.mxu0 0.0
    %3483 = vmatprep.subr.mxu0 0.0
    %3484 = vmatpush1.msra.mxu0 0.0
    %3485 = vmatprep.subr.mxu0 0.0
    %3486 = vmatpush1.msra.mxu0 0.0
    %3487 = vmatprep.subr.mxu0 0.0
    %3488 = vmatpush1.msra.mxu0 0.0
    %3489 = vmatprep.subr.mxu0 0.0
    %3490 = vmatpush1.msra.mxu0 0.0
    %3491 = vmatprep.subr.mxu0 0.0
    %3492 = vmatpush1.msra.mxu0 0.0
    %3493 = vmatprep.subr.mxu0 0.0
    %3494 = vmatpush1.msra.mxu0 0.0
    %3495 = vmatprep.subr.mxu0 0.0
    %3496 = vmatpush1.msra.mxu0 0.0
    %3497 = vmatprep.subr.mxu0 0.0
    %3498 = vmatpush1.msra.mxu0 0.0
    %3499 = vmatprep.subr.mxu0 0.0
    %3500 = vmatpush1.msra.mxu0 0.0
    %3501 = vmatprep.subr.mxu0 0.0
    %3502 = vmatpush1.msra.mxu0 0.0
    %3503 = vmatprep.subr.mxu0 0.0
    %3504 = vmatpush1.msra.mxu0 0.0
    %3505 = vmatprep.subr.mxu0 0.0
    %3506 = vmatpush1.msra.mxu0 0.0
    %3507 = vmatprep.subr.mxu0 0.0
    %3508 = vmatpush1.msra.mxu0 0.0
    %3509 = vmatprep.subr.mxu0 0.0
    %3510 = vmatpush1.msra.mxu0 0.0
    %3511 = vmatprep.subr.mxu0 0.0
    %3512 = vmatpush1.msra.mxu0 0.0
    %3513 = vmatprep.mubr.f32.mxu0 0.0
    %v3514 = vand.u32 %v3293, 4294901760
    %v3515 = vsub.f32 %v3293, %v3514
    %3516 = vmatmul.mubr.f32.gmra.mrb[0].mxu0 %v3515
    %v3517 = vpop.f32.mrb[0].mxu0
    %v3518 = vadd.f32 %v3444, %v3517
    %v3519 = vpop.f32.mrb[0].mxu0
    %3520 = vdwg.mxu0
    %3521 = vmatprep.subr.mxu0 0.0
    %v3522 = vand.u32 %v70, 4294901760
    %3523 = vmatpush1.msra.mxu0 %v3522
    %3524 = vmatprep.subr.mxu0 0.0
    %3525 = vmatpush1.msra.mxu0 0.0
    %3526 = vmatprep.subr.mxu0 0.0
    %3527 = vmatpush1.msra.mxu0 0.0
    %3528 = vmatprep.subr.mxu0 0.0
    %3529 = vmatpush1.msra.mxu0 0.0
    %3530 = vmatprep.subr.mxu0 0.0
    %3531 = vmatpush1.msra.mxu0 0.0
    %3532 = vmatprep.subr.mxu0 0.0
    %3533 = vmatpush1.msra.mxu0 0.0
    %3534 = vmatprep.subr.mxu0 0.0
    %3535 = vmatpush1.msra.mxu0 0.0
    %3536 = vmatprep.subr.mxu0 0.0
    %3537 = vmatpush1.msra.mxu0 0.0
    %3538 = vmatprep.subr.mxu0 0.0
    %3539 = vmatpush1.msra.mxu0 0.0
    %3540 = vmatprep.subr.mxu0 0.0
    %3541 = vmatpush1.msra.mxu0 0.0
    %3542 = vmatprep.subr.mxu0 0.0
    %3543 = vmatpush1.msra.mxu0 0.0
    %3544 = vmatprep.subr.mxu0 0.0
    %3545 = vmatpush1.msra.mxu0 0.0
    %3546 = vmatprep.subr.mxu0 0.0
    %3547 = vmatpush1.msra.mxu0 0.0
    %3548 = vmatprep.subr.mxu0 0.0
    %3549 = vmatpush1.msra.mxu0 0.0
    %3550 = vmatprep.subr.mxu0 0.0
    %3551 = vmatpush1.msra.mxu0 0.0
    %3552 = vmatprep.subr.mxu0 0.0
    %3553 = vmatpush1.msra.mxu0 0.0
    %3554 = vmatprep.subr.mxu0 0.0
    %3555 = vmatpush1.msra.mxu0 0.0
    %3556 = vmatprep.subr.mxu0 0.0
    %3557 = vmatpush1.msra.mxu0 0.0
    %3558 = vmatprep.subr.mxu0 0.0
    %3559 = vmatpush1.msra.mxu0 0.0
    %3560 = vmatprep.subr.mxu0 0.0
    %3561 = vmatpush1.msra.mxu0 0.0
    %3562 = vmatprep.subr.mxu0 0.0
    %3563 = vmatpush1.msra.mxu0 0.0
    %3564 = vmatprep.subr.mxu0 0.0
    %3565 = vmatpush1.msra.mxu0 0.0
    %3566 = vmatprep.subr.mxu0 0.0
    %3567 = vmatpush1.msra.mxu0 0.0
    %3568 = vmatprep.subr.mxu0 0.0
    %3569 = vmatpush1.msra.mxu0 0.0
    %3570 = vmatprep.subr.mxu0 0.0
    %3571 = vmatpush1.msra.mxu0 0.0
    %3572 = vmatprep.subr.mxu0 0.0
    %3573 = vmatpush1.msra.mxu0 0.0
    %3574 = vmatprep.subr.mxu0 0.0
    %3575 = vmatpush1.msra.mxu0 0.0
    %3576 = vmatprep.subr.mxu0 0.0
    %3577 = vmatpush1.msra.mxu0 0.0
    %3578 = vmatprep.subr.mxu0 0.0
    %3579 = vmatpush1.msra.mxu0 0.0
    %3580 = vmatprep.subr.mxu0 0.0
    %3581 = vmatpush1.msra.mxu0 0.0
    %3582 = vmatprep.subr.mxu0 0.0
    %3583 = vmatpush1.msra.mxu0 0.0
    %3584 = vmatprep.subr.mxu0 0.0
    %3585 = vmatpush1.msra.mxu0 0.0
    %3586 = vmatprep.mubr.f32.mxu0 0.0
    %v3587 = vand.u32 %v3293, 4294901760
    %v3588 = vsub.f32 %v3293, %v3587
    %v3589 = vand.u32 %v3588, 4294901760
    %3590 = vmatmul.mubr.f32.gmra.mrb[0].mxu0 %v3589
    %v3591 = vpop.f32.mrb[0].mxu0
    %v3592 = vadd.f32 %v3518, %v3591
    %v3593 = vpop.f32.mrb[0].mxu0
    %3594 = vdwg.mxu0
    %3595 = vmatprep.subr.mxu0 0.0
    %v3596 = vand.u32 %v70, 4294901760
    %v3597 = vsub.f32 %v70, %v3596
    %v3598 = vand.u32 %v3597, 4294901760
    %3599 = vmatpush1.msra.mxu0 %v3598
    %3600 = vmatprep.subr.mxu0 0.0
    %3601 = vmatpush1.msra.mxu0 0.0
    %3602 = vmatprep.subr.mxu0 0.0
    %3603 = vmatpush1.msra.mxu0 0.0
    %3604 = vmatprep.subr.mxu0 0.0
    %3605 = vmatpush1.msra.mxu0 0.0
    %3606 = vmatprep.subr.mxu0 0.0
    %3607 = vmatpush1.msra.mxu0 0.0
    %3608 = vmatprep.subr.mxu0 0.0
    %3609 = vmatpush1.msra.mxu0 0.0
    %3610 = vmatprep.subr.mxu0 0.0
    %3611 = vmatpush1.msra.mxu0 0.0
    %3612 = vmatprep.subr.mxu0 0.0
    %3613 = vmatpush1.msra.mxu0 0.0
    %3614 = vmatprep.subr.mxu0 0.0
    %3615 = vmatpush1.msra.mxu0 0.0
    %3616 = vmatprep.subr.mxu0 0.0
    %3617 = vmatpush1.msra.mxu0 0.0
    %3618 = vmatprep.subr.mxu0 0.0
    %3619 = vmatpush1.msra.mxu0 0.0
    %3620 = vmatprep.subr.mxu0 0.0
    %3621 = vmatpush1.msra.mxu0 0.0
    %3622 = vmatprep.subr.mxu0 0.0
    %3623 = vmatpush1.msra.mxu0 0.0
    %3624 = vmatprep.subr.mxu0 0.0
    %3625 = vmatpush1.msra.mxu0 0.0
    %3626 = vmatprep.subr.mxu0 0.0
    %3627 = vmatpush1.msra.mxu0 0.0
    %3628 = vmatprep.subr.mxu0 0.0
    %3629 = vmatpush1.msra.mxu0 0.0
    %3630 = vmatprep.subr.mxu0 0.0
    %3631 = vmatpush1.msra.mxu0 0.0
    %3632 = vmatprep.subr.mxu0 0.0
    %3633 = vmatpush1.msra.mxu0 0.0
    %3634 = vmatprep.subr.mxu0 0.0
    %3635 = vmatpush1.msra.mxu0 0.0
    %3636 = vmatprep.subr.mxu0 0.0
    %3637 = vmatpush1.msra.mxu0 0.0
    %3638 = vmatprep.subr.mxu0 0.0
    %3639 = vmatpush1.msra.mxu0 0.0
    %3640 = vmatprep.subr.mxu0 0.0
    %3641 = vmatpush1.msra.mxu0 0.0
    %3642 = vmatprep.subr.mxu0 0.0
    %3643 = vmatpush1.msra.mxu0 0.0
    %3644 = vmatprep.subr.mxu0 0.0
    %3645 = vmatpush1.msra.mxu0 0.0
    %3646 = vmatprep.subr.mxu0 0.0
    %3647 = vmatpush1.msra.mxu0 0.0
    %3648 = vmatprep.subr.mxu0 0.0
    %3649 = vmatpush1.msra.mxu0 0.0
    %3650 = vmatprep.subr.mxu0 0.0
    %3651 = vmatpush1.msra.mxu0 0.0
    %3652 = vmatprep.subr.mxu0 0.0
    %3653 = vmatpush1.msra.mxu0 0.0
    %3654 = vmatprep.subr.mxu0 0.0
    %3655 = vmatpush1.msra.mxu0 0.0
    %3656 = vmatprep.subr.mxu0 0.0
    %3657 = vmatpush1.msra.mxu0 0.0
    %3658 = vmatprep.subr.mxu0 0.0
    %3659 = vmatpush1.msra.mxu0 0.0
    %3660 = vmatprep.subr.mxu0 0.0
    %3661 = vmatpush1.msra.mxu0 0.0
    %3662 = vmatprep.mubr.f32.mxu0 0.0
    %v3663 = vand.u32 %v3293, 4294901760
    %3664 = vmatmul.mubr.f32.gmra.mrb[0].mxu0 %v3663
    %v3665 = vpop.f32.mrb[0].mxu0
    %v3666 = vadd.f32 %v3592, %v3665
    %v3667 = vpop.f32.mrb[0].mxu0
    %3668 = vdwg.mxu0
    %3669 = vmatprep.subr.mxu0 0.0
    %v3670 = vand.u32 %v70, 4294901760
    %3671 = vmatpush1.msra.mxu0 %v3670
    %3672 = vmatprep.subr.mxu0 0.0
    %3673 = vmatpush1.msra.mxu0 0.0
    %3674 = vmatprep.subr.mxu0 0.0
    %3675 = vmatpush1.msra.mxu0 0.0
    %3676 = vmatprep.subr.mxu0 0.0
    %3677 = vmatpush1.msra.mxu0 0.0
    %3678 = vmatprep.subr.mxu0 0.0
    %3679 = vmatpush1.msra.mxu0 0.0
    %3680 = vmatprep.subr.mxu0 0.0
    %3681 = vmatpush1.msra.mxu0 0.0
    %3682 = vmatprep.subr.mxu0 0.0
    %3683 = vmatpush1.msra.mxu0 0.0
    %3684 = vmatprep.subr.mxu0 0.0
    %3685 = vmatpush1.msra.mxu0 0.0
    %3686 = vmatprep.subr.mxu0 0.0
    %3687 = vmatpush1.msra.mxu0 0.0
    %3688 = vmatprep.subr.mxu0 0.0
    %3689 = vmatpush1.msra.mxu0 0.0
    %3690 = vmatprep.subr.mxu0 0.0
    %3691 = vmatpush1.msra.mxu0 0.0
    %3692 = vmatprep.subr.mxu0 0.0
    %3693 = vmatpush1.msra.mxu0 0.0
    %3694 = vmatprep.subr.mxu0 0.0
    %3695 = vmatpush1.msra.mxu0 0.0
    %3696 = vmatprep.subr.mxu0 0.0
    %3697 = vmatpush1.msra.mxu0 0.0
    %3698 = vmatprep.subr.mxu0 0.0
    %3699 = vmatpush1.msra.mxu0 0.0
    %3700 = vmatprep.subr.mxu0 0.0
    %3701 = vmatpush1.msra.mxu0 0.0
    %3702 = vmatprep.subr.mxu0 0.0
    %3703 = vmatpush1.msra.mxu0 0.0
    %3704 = vmatprep.subr.mxu0 0.0
    %3705 = vmatpush1.msra.mxu0 0.0
    %3706 = vmatprep.subr.mxu0 0.0
    %3707 = vmatpush1.msra.mxu0 0.0
    %3708 = vmatprep.subr.mxu0 0.0
    %3709 = vmatpush1.msra.mxu0 0.0
    %3710 = vmatprep.subr.mxu0 0.0
    %3711 = vmatpush1.msra.mxu0 0.0
    %3712 = vmatprep.subr.mxu0 0.0
    %3713 = vmatpush1.msra.mxu0 0.0
    %3714 = vmatprep.subr.mxu0 0.0
    %3715 = vmatpush1.msra.mxu0 0.0
    %3716 = vmatprep.subr.mxu0 0.0
    %3717 = vmatpush1.msra.mxu0 0.0
    %3718 = vmatprep.subr.mxu0 0.0
    %3719 = vmatpush1.msra.mxu0 0.0
    %3720 = vmatprep.subr.mxu0 0.0
    %3721 = vmatpush1.msra.mxu0 0.0
    %3722 = vmatprep.subr.mxu0 0.0
    %3723 = vmatpush1.msra.mxu0 0.0
    %3724 = vmatprep.subr.mxu0 0.0
    %3725 = vmatpush1.msra.mxu0 0.0
    %3726 = vmatprep.subr.mxu0 0.0
    %3727 = vmatpush1.msra.mxu0 0.0
    %3728 = vmatprep.subr.mxu0 0.0
    %3729 = vmatpush1.msra.mxu0 0.0
    %3730 = vmatprep.subr.mxu0 0.0
    %3731 = vmatpush1.msra.mxu0 0.0
    %3732 = vmatprep.subr.mxu0 0.0
    %3733 = vmatpush1.msra.mxu0 0.0
    %3734 = vmatprep.mubr.f32.mxu0 0.0
    %v3735 = vand.u32 %v3293, 4294901760
    %3736 = vmatmul.mubr.f32.gmra.mrb[0].mxu0 %v3735
    %v3737 = vpop.f32.mrb[0].mxu0
    %v3738 = vadd.f32 %v3666, %v3737
    %v3739 = vpop.f32.mrb[0].mxu0
    %3740 = vdwg.mxu0
    %3741 = vst.msk [vmem:[#allocation8] sm:$0xff] %vm71, %v2391
    %3742 = vst.msk [vmem:[#allocation8 + $0x8] sm:$0xff] %vm71, %v2840
    %3743 = vst.msk [vmem:[#allocation8 + $0x10] sm:$0xff] %vm71, %v3289
    %3744 = vst.msk [vmem:[#allocation8 + $0x18] sm:$0xff] %vm71, %v3738
    // Predicated region
    $region30: #{tpu_custom_call.1} parent=1 // pred_check
      _
    $region31: #{tpu_custom_call.1} parent=1 // pred_check_branch
      %3746 = sbr.rel (0) target = $region33
    $region32: #{tpu_custom_call.1} parent=1 // pred_region
      %s3748 = ssub.s32 512, 512
      %3749 = vsyncadd [#allocation4], %s3748
      %s3750 = sshll.u32 [#allocation8], 4
      %s3751 = int_to_ptr.vmem [resolvable:$true] %s3750
      %3756 = dma.vmem_to_hbm [thread:$0]  %s3751, 512, %s4, [#allocation4], 128, 128, 8
    $region33: #{tpu_custom_call.1} parent=1 // pred_fallthru
      _
    // Predicated region
    $region34: #{tpu_custom_call.1} parent=1 // pred_check
      _
    $region35: #{tpu_custom_call.1} parent=1 // pred_check_branch
      %3758 = sbr.rel (0) target = $region37
    $region36: #{tpu_custom_call.1} parent=1 // pred_region
      %3759 = dma.done [#allocation4], 512
    $region37: #{tpu_custom_call.1} parent=1 // pred_fallthru
      _
    %3760 = vsyncpa [#allocation3], 1
    %3761 = vsyncpa [#allocation6], 1
    %3762 = vsyncpa [#allocation4], 1

</llo_original>
